<compile_context>
chip_gen: v6e
topology: v6e:2x2x1
jax: 0.10.0
libtpu: 0.0.40
codegen_flags: <defaults>
</compile_context>

<pallas_src>
import functools

import jax
import jax.numpy as jnp
import numpy as np
from jax.experimental import pallas as pl
from jax.experimental.pallas import tpu as pltpu


# ---------------------------------------------------------------------------
# in-kernel helpers (pure jnp, traced into the Mosaic kernel)
# ---------------------------------------------------------------------------
def _layer_norm(x, w, b, eps=1e-5):
    mu = jnp.mean(x, axis=-1, keepdims=True)
    var = jnp.mean(jnp.square(x - mu), axis=-1, keepdims=True)
    return (x - mu) * jax.lax.rsqrt(var + eps) * w + b


def _erf(x):
    # Abramowitz & Stegun 7.1.26, |err| < 1.5e-7 — preserves torch.nn.GELU()
    # exact-erf semantics.  The single exp() goes to the EUP.
    a1, a2, a3, a4, a5 = 0.254829592, -0.284496736, 1.421413741, -1.453152027, 1.061405429
    p = 0.3275911
    s = jnp.where(x >= 0.0, 1.0, -1.0)
    ax = jnp.abs(x)
    t = 1.0 / (1.0 + p * ax)
    y = 1.0 - (((((a5 * t + a4) * t + a3) * t + a2) * t + a1) * t) * jnp.exp(-ax * ax)
    return s * y


def _gelu(x):
    # exact (erf-based) GELU, matching torch.nn.GELU() default
    return 0.5 * x * (1.0 + _erf(x * 0.7071067811865475))


def _mm(a, b, cd):
    # MXU matmul: low-precision operands (bf16 by default), f32 accumulation
    return jnp.dot(a.astype(cd), b.astype(cd), preferred_element_type=jnp.float32)


# ---------------------------------------------------------------------------
# the kernel: BB batch rows per grid step, one layer's weights VMEM-resident
# ---------------------------------------------------------------------------
def block_kernel(
    x_ref, mask_ref,
    ln1w_ref, ln1b_ref,
    wqkv_ref, projw_ref, projb_ref,
    gaw_ref, gab_ref,
    ln2w_ref, ln2b_ref,
    f1w_ref, f1b_ref, f2w_ref, f2b_ref, f3w_ref, f3b_ref,
    gfw_ref, gfb_ref,
    *out_and_scratch,
    n_head, head_size, compute_dtype, with_att,
):
    if with_att:
        y_ref, att_ref, heads_ref = out_and_scratch
    else:
        y_ref, heads_ref = out_and_scratch
        att_ref = None

    BB, T, E = x_ref.shape
    M = BB * T                                  # fold batch rows into matmul M
    cd = compute_dtype

    x2 = x_ref[...].reshape(M, E)               # (BB*T, E) residual input, f32

    # ---- attention branch: ln1 -> single fused QKV matmul ----
    xn = _layer_norm(x2, ln1w_ref[...], ln1b_ref[...])
    qkv = _mm(xn, wqkv_ref[...], cd).reshape(BB, T, 3 * E)

    # additive mask bias, computed ONCE per grid step (hoisted out of the
    # head loop).  -1e9 matches PyTorch (-inf rewritten to -1e9 pre-softmax).
    row = jax.lax.broadcasted_iota(jnp.int32, (T, T), 0)
    col = jax.lax.broadcasted_iota(jnp.int32, (T, T), 1)
    keymask = mask_ref[...][:, 0, :] != 0.0                      # (BB, T)
    keep = jnp.logical_and((row >= col)[None], keymask[:, None, :])
    bias = jnp.where(keep, 0.0, -1e9)                            # (BB, T, T) f32

    scale = float(head_size) ** -0.5
    for hh in range(n_head):                    # tiny static unroll over heads
        lo = hh * head_size
        q = qkv[:, :, lo:lo + head_size]
        k = qkv[:, :, E + lo:E + lo + head_size]
        v = qkv[:, :, 2 * E + lo:2 * E + lo + head_size]
        s = jnp.einsum("btd,bsd->bts", q.astype(cd), k.astype(cd),
                       preferred_element_type=jnp.float32) * scale + bias
        m = jnp.max(s, axis=-1, keepdims=True)
        e = jnp.exp(s - m)
        # exact reciprocal: att weights are a kernel output, rows must sum to 1
        w_att = e * (1.0 / jnp.sum(e, axis=-1, keepdims=True))
        if att_ref is not None:
            att_ref[:, hh] = w_att
        ho = jnp.einsum("bts,bsd->btd", w_att.astype(cd), v.astype(cd),
                        preferred_element_type=jnp.float32)
        # write into the preallocated scratch (no concat copy before proj)
        heads_ref[:, lo:lo + head_size] = ho.reshape(M, head_size)

    # single output projection with K = E (keeps the MXU full)
    sa = _mm(heads_ref[...], projw_ref[...], cd) + projb_ref[...]

    # gated residual (attention branch): y = sa + sigmoid(ga(sa)) * x
    gate = jax.nn.sigmoid(_mm(sa, gaw_ref[...], cd) + gab_ref[...])
    y = sa + gate * x2

    # ---- feed-forward branch on ln2(y) ----
    xn2 = _layer_norm(y, ln2w_ref[...], ln2b_ref[...])
    f = _gelu(_mm(xn2, f1w_ref[...], cd) + f1b_ref[...])
    f = _gelu(_mm(f, f2w_ref[...], cd) + f2b_ref[...])
    f = _mm(f, f3w_ref[...], cd) + f3b_ref[...]

    # gated residual (ffwd branch): out = f + sigmoid(gf(f)) * y
    gate2 = jax.nn.sigmoid(_mm(f, gfw_ref[...], cd) + gfb_ref[...])
    y_ref[...] = (f + gate2 * y).reshape(BB, T, E)


# ---------------------------------------------------------------------------
# wrapper: parameter init + pallas_call plumbing
# ---------------------------------------------------------------------------
def init_params(key, n_embd, n_head):
    hs = n_embd // n_head
    std = 0.02
    keys = iter(jax.random.split(key, 16))

    def nrm(shape):
        return (std * jax.random.normal(next(keys), shape)).astype(jnp.float32)

    def zeros(shape):
        return jnp.zeros(shape, jnp.float32)

    def ones(shape):
        return jnp.ones(shape, jnp.float32)

    return dict(
        ln1_w=ones((1, n_embd)), ln1_b=zeros((1, n_embd)),
        # per-head Linear weights, pre-transposed: y = x @ W
        q_w=nrm((n_head, n_embd, hs)),
        k_w=nrm((n_head, n_embd, hs)),
        v_w=nrm((n_head, n_embd, hs)),
        proj_w=nrm((n_embd, n_embd)), proj_b=zeros((1, n_embd)),
        ga_w=nrm((n_embd, n_embd)), ga_b=zeros((1, n_embd)),
        ln2_w=ones((1, n_embd)), ln2_b=zeros((1, n_embd)),
        f1_w=nrm((n_embd, 4 * n_embd)), f1_b=zeros((1, 4 * n_embd)),
        f2_w=nrm((4 * n_embd, 2 * n_embd)), f2_b=zeros((1, 2 * n_embd)),
        f3_w=nrm((2 * n_embd, n_embd)), f3_b=zeros((1, n_embd)),
        gf_w=nrm((n_embd, n_embd)), gf_b=zeros((1, n_embd)),
    )


def block_forward(params, x, attention_mask=None, *, n_head,
                  compute_dtype=jnp.bfloat16, batch_block=None,
                  return_attention=True):
    B, T, E = x.shape
    hs = E // n_head

    if attention_mask is None:
        attention_mask = jnp.ones((B, T), jnp.float32)
    mask3 = attention_mask.astype(jnp.float32).reshape(B, 1, T)

    # fold several batch rows into one grid step so the matmul M dim is BB*T
    if batch_block is None:
        batch_block = min(B, max(1, 128 // T)) if T < 128 else 1
        while B % batch_block:
            batch_block -= 1
    BB = batch_block
    assert B % BB == 0

    # Fuse per-head Q/K/V weights into one lane-dense (E, 3E) matrix so the
    # kernel does a single MXU pass for all projections of all heads.
    def fuse(w):  # (n_head, E, hs) -> (E, n_head*hs), head blocks along lanes
        return jnp.transpose(w, (1, 0, 2)).reshape(E, n_head * hs)

    wd = compute_dtype   # matmul weights shipped narrow; f32 accumulation in-kernel
    wqkv = jnp.concatenate(
        [fuse(params["q_w"]), fuse(params["k_w"]), fuse(params["v_w"])],
        axis=1).astype(wd)

    weights = [
        params["ln1_w"], params["ln1_b"],
        wqkv, params["proj_w"].astype(wd), params["proj_b"],
        params["ga_w"].astype(wd), params["ga_b"],
        params["ln2_w"], params["ln2_b"],
        params["f1_w"].astype(wd), params["f1_b"],
        params["f2_w"].astype(wd), params["f2_b"],
        params["f3_w"].astype(wd), params["f3_b"],
        params["gf_w"].astype(wd), params["gf_b"],
    ]

    # grid-invariant weights: same block every step -> single-buffered
    def bcast(a):
        nd = a.ndim
        return pl.BlockSpec(a.shape, lambda b, _nd=nd: (0,) * _nd,
                            pipeline_mode=pl.Buffered(1))

    in_specs = (
        [pl.BlockSpec((BB, T, E), lambda b: (b, 0, 0)),
         pl.BlockSpec((BB, 1, T), lambda b: (b, 0, 0))]
        + [bcast(w) for w in weights]
    )

    out_specs = [pl.BlockSpec((BB, T, E), lambda b: (b, 0, 0))]
    out_shapes = [jax.ShapeDtypeStruct((B, T, E), jnp.float32)]
    if return_attention:
        out_specs.append(pl.BlockSpec((BB, n_head, T, T), lambda b: (b, 0, 0, 0)))
        out_shapes.append(jax.ShapeDtypeStruct((B, n_head, T, T), jnp.float32))

    # explicit VMEM budget: single-buffered weights + double-buffered
    # activation/output blocks + scratch + headroom (floored at the default)
    wbytes = sum(int(w.size) * w.dtype.itemsize for w in weights)
    act_elems = 2 * BB * T * E + BB * T
    if return_attention:
        act_elems += BB * n_head * T * T
    vmem_limit = int(min(100 << 20,
                         max(32 << 20,
                             wbytes + 2 * 4 * act_elems + 4 * BB * T * E + (8 << 20))))

    # advisory cost hint for XLA's scheduler around this fused custom call
    flops = int(B * (2 * T * E * E * 20 + 4 * T * T * E))
    transcendentals = int(B * (n_head * T * T + 8 * T * E))
    bytes_accessed = int(wbytes + 4 * (2 * B * T * E + B * T)
                         + (4 * B * n_head * T * T if return_attention else 0))

    kernel = functools.partial(
        block_kernel, n_head=n_head, head_size=hs,
        compute_dtype=compute_dtype, with_att=return_attention)

    outs = pl.pallas_call(
        kernel,
        out_shape=out_shapes,
        grid=(B // BB,),
        in_specs=in_specs,
        out_specs=out_specs,
        scratch_shapes=[pltpu.VMEM((BB * T, E), jnp.float32)],
        compiler_params=pltpu.CompilerParams(
            dimension_semantics=("parallel",),   # batch axis; megacore on v7x
            vmem_limit_bytes=vmem_limit),
        cost_estimate=pl.CostEstimate(
            flops=flops, transcendentals=transcendentals,
            bytes_accessed=bytes_accessed),
    )(x.astype(jnp.float32), mask3, *weights)

    if return_attention:
        y, att = outs
        return y, att          # att: (B, n_head, T, T); torch returns list[head]
    return outs[0], None


# ---------------------------------------------------------------------------
# pure-JAX reference (mirrors the PyTorch Block forward) for verification
# ---------------------------------------------------------------------------
def block_reference(params, x, attention_mask=None, *, n_head):
    B, T, E = x.shape
    hs = E // n_head
    if attention_mask is None:
        attention_mask = jnp.ones((B, T), jnp.float32)

    def ln(v, w, b):
        mu = v.mean(-1, keepdims=True)
        var = ((v - mu) ** 2).mean(-1, keepdims=True)
        return (v - mu) / jnp.sqrt(var + 1e-5) * w[0] + b[0]

    xf = x.astype(jnp.float32)
    xn = ln(xf, params["ln1_w"], params["ln1_b"])
    causal = jnp.tril(jnp.ones((T, T), bool))
    keep = causal[None] & (attention_mask[:, None, :] != 0)

    heads, wlist = [], []
    for hh in range(n_head):
        q = xn @ params["q_w"][hh]
        k = xn @ params["k_w"][hh]
        v = xn @ params["v_w"][hh]
        s = jnp.einsum("btd,bsd->bts", q, k) * hs ** -0.5
        s = jnp.where(keep, s, -1e9)   # torch replaces -inf with -1e9 pre-softmax
        w = jax.nn.softmax(s, axis=-1)
        wlist.append(w)
        heads.append(jnp.einsum("bts,bsd->btd", w, v))
    att = jnp.stack(wlist, axis=1)

    sa = jnp.concatenate(heads, -1) @ params["proj_w"] + params["proj_b"][0]
    gate = jax.nn.sigmoid(sa @ params["ga_w"] + params["ga_b"][0])
    y = sa + gate * xf

    xn2 = ln(y, params["ln2_w"], params["ln2_b"])
    f = jax.nn.gelu(xn2 @ params["f1_w"] + params["f1_b"][0], approximate=False)
    f = jax.nn.gelu(f @ params["f2_w"] + params["f2_b"][0], approximate=False)
    f = f @ params["f3_w"] + params["f3_b"][0]
    gate2 = jax.nn.sigmoid(f @ params["gf_w"] + params["gf_b"][0])
    y = f + gate2 * y
    return y, att


# ---------------------------------------------------------------------------
if __name__ == "__main__":
    # small but lane-dense config: n_embd is a multiple of 128, B is even
    B, T = 2, 8
    n_embd, n_head = 128, 4        # head_size = 32
    dropout = 0.1                  # inference: identity

    key = jax.random.PRNGKey(0)
    pkey, xkey = jax.random.split(key)
    params = init_params(pkey, n_embd, n_head)
    x = jax.random.normal(xkey, (B, T, n_embd), jnp.float32)
    attention_mask = jnp.ones((B, T), jnp.float32).at[1, 0].set(0.0)

    ref_y, ref_att = block_reference(params, x, attention_mask, n_head=n_head)

    # 1) f32 compute path: tight check against the PyTorch-semantics reference
    y32, att32 = block_forward(params, x, attention_mask, n_head=n_head,
                               compute_dtype=jnp.float32)
    y32 = jax.block_until_ready(y32)
    err_y32 = np.max(np.abs(np.asarray(y32) - np.asarray(ref_y)))
    err_a32 = np.max(np.abs(np.asarray(att32) - np.asarray(ref_att)))
    assert np.allclose(np.asarray(y32), np.asarray(ref_y), atol=5e-3, rtol=5e-3), \
        f"f32 output mismatch: {err_y32}"
    assert np.allclose(np.asarray(att32), np.asarray(ref_att), atol=5e-3, rtol=5e-3), \
        f"f32 attention mismatch: {err_a32}"

    # 2) default bf16-operand / f32-accumulation path (production setting);
    #    looser tolerance accounts for bf16 operand quantization, not a bug.
    y, att = block_forward(params, x, attention_mask, n_head=n_head)
    y = jax.block_until_ready(y)
    att = jax.block_until_ready(att)
    err_y = np.max(np.abs(np.asarray(y) - np.asarray(ref_y)))
    err_a = np.max(np.abs(np.asarray(att) - np.asarray(ref_att)))
    assert np.allclose(np.asarray(y), np.asarray(ref_y), atol=2.5e-2, rtol=2.5e-2), \
        f"bf16 output mismatch: {err_y}"
    assert np.allclose(np.asarray(att), np.asarray(ref_att), atol=1.5e-2, rtol=1.5e-2), \
        f"bf16 attention mismatch: {err_a}"

    print("KERNEL_OK")
</pallas_src>

<mosaic_0001>
module attributes {stable_mosaic.version = 11 : i64} {
  func.func @block_kernel(%arg0: i32, %arg1: memref<2x8x128xf32, #tpu.memory_space<vmem>>, %arg2: memref<2x1x8xf32, #tpu.memory_space<vmem>>, %arg3: memref<1x128xf32, #tpu.memory_space<vmem>>, %arg4: memref<1x128xf32, #tpu.memory_space<vmem>>, %arg5: memref<128x384xf32, #tpu.memory_space<vmem>>, %arg6: memref<128x128xf32, #tpu.memory_space<vmem>>, %arg7: memref<1x128xf32, #tpu.memory_space<vmem>>, %arg8: memref<128x128xf32, #tpu.memory_space<vmem>>, %arg9: memref<1x128xf32, #tpu.memory_space<vmem>>, %arg10: memref<1x128xf32, #tpu.memory_space<vmem>>, %arg11: memref<1x128xf32, #tpu.memory_space<vmem>>, %arg12: memref<128x512xf32, #tpu.memory_space<vmem>>, %arg13: memref<1x512xf32, #tpu.memory_space<vmem>>, %arg14: memref<512x256xf32, #tpu.memory_space<vmem>>, %arg15: memref<1x256xf32, #tpu.memory_space<vmem>>, %arg16: memref<256x128xf32, #tpu.memory_space<vmem>>, %arg17: memref<1x128xf32, #tpu.memory_space<vmem>>, %arg18: memref<128x128xf32, #tpu.memory_space<vmem>>, %arg19: memref<1x128xf32, #tpu.memory_space<vmem>>, %arg20: memref<2x8x128xf32, #tpu.memory_space<vmem>>, %arg21: memref<2x4x8x8xf32, #tpu.memory_space<vmem>>, %arg22: memref<16x128xf32, #tpu.memory_space<vmem>>) attributes {dimension_semantics = [#tpu.dimension_semantics<parallel>], iteration_bounds = array<i64: 1>, scalar_prefetch = 0 : i64, scratch_operands = 1 : i64, tpu.core_type = #tpu.core_type<tc>, window_params = [{transform_indices = @transform_0, window_bounds = array<i64: 2, 8, 128>}, {transform_indices = @transform_1, window_bounds = array<i64: 2, 1, 8>}, {pipeline_mode = #tpu.pipeline_mode<synchronous>, transform_indices = @transform_2, window_bounds = array<i64: 1, 128>}, {pipeline_mode = #tpu.pipeline_mode<synchronous>, transform_indices = @transform_3, window_bounds = array<i64: 1, 128>}, {pipeline_mode = #tpu.pipeline_mode<synchronous>, transform_indices = @transform_4, window_bounds = array<i64: 128, 384>}, {pipeline_mode = #tpu.pipeline_mode<synchronous>, transform_indices = @transform_5, window_bounds = array<i64: 128, 128>}, {pipeline_mode = #tpu.pipeline_mode<synchronous>, transform_indices = @transform_6, window_bounds = array<i64: 1, 128>}, {pipeline_mode = #tpu.pipeline_mode<synchronous>, transform_indices = @transform_7, window_bounds = array<i64: 128, 128>}, {pipeline_mode = #tpu.pipeline_mode<synchronous>, transform_indices = @transform_8, window_bounds = array<i64: 1, 128>}, {pipeline_mode = #tpu.pipeline_mode<synchronous>, transform_indices = @transform_9, window_bounds = array<i64: 1, 128>}, {pipeline_mode = #tpu.pipeline_mode<synchronous>, transform_indices = @transform_10, window_bounds = array<i64: 1, 128>}, {pipeline_mode = #tpu.pipeline_mode<synchronous>, transform_indices = @transform_11, window_bounds = array<i64: 128, 512>}, {pipeline_mode = #tpu.pipeline_mode<synchronous>, transform_indices = @transform_12, window_bounds = array<i64: 1, 512>}, {pipeline_mode = #tpu.pipeline_mode<synchronous>, transform_indices = @transform_13, window_bounds = array<i64: 512, 256>}, {pipeline_mode = #tpu.pipeline_mode<synchronous>, transform_indices = @transform_14, window_bounds = array<i64: 1, 256>}, {pipeline_mode = #tpu.pipeline_mode<synchronous>, transform_indices = @transform_15, window_bounds = array<i64: 256, 128>}, {pipeline_mode = #tpu.pipeline_mode<synchronous>, transform_indices = @transform_16, window_bounds = array<i64: 1, 128>}, {pipeline_mode = #tpu.pipeline_mode<synchronous>, transform_indices = @transform_17, window_bounds = array<i64: 128, 128>}, {pipeline_mode = #tpu.pipeline_mode<synchronous>, transform_indices = @transform_18, window_bounds = array<i64: 1, 128>}, {transform_indices = @transform_19, window_bounds = array<i64: 2, 8, 128>}, {transform_indices = @transform_20, window_bounds = array<i64: 2, 4, 8, 8>}]} {
    %c0 = arith.constant 0 : index
    %c0_0 = arith.constant 0 : index
    %c0_1 = arith.constant 0 : index
    %0 = vector.load %arg1[%c0, %c0_0, %c0_1] : memref<2x8x128xf32, #tpu.memory_space<vmem>>, vector<2x8x128xf32>
    %1 = vector.shape_cast %0 : vector<2x8x128xf32> to vector<16x128xf32>
    %c0_2 = arith.constant 0 : index
    %c0_3 = arith.constant 0 : index
    %2 = vector.load %arg3[%c0_2, %c0_3] : memref<1x128xf32, #tpu.memory_space<vmem>>, vector<1x128xf32>
    %c0_4 = arith.constant 0 : index
    %c0_5 = arith.constant 0 : index
    %3 = vector.load %arg4[%c0_4, %c0_5] : memref<1x128xf32, #tpu.memory_space<vmem>>, vector<1x128xf32>
    %cst = arith.constant dense<0.000000e+00> : vector<16xf32>
    %4 = vector.multi_reduction <add>, %1, %cst [1] : vector<16x128xf32> to vector<16xf32>
    %5 = vector.shape_cast %4 : vector<16xf32> to vector<16x1xf32>
    %cst_6 = arith.constant 1.280000e+02 : f32
    %6 = vector.broadcast %cst_6 : f32 to vector<16x1xf32>
    %7 = arith.divf %5, %6 : vector<16x1xf32>
    %8 = vector.broadcast %7 : vector<16x1xf32> to vector<16x128xf32>
    %9 = arith.subf %1, %8 : vector<16x128xf32>
    %10 = arith.mulf %9, %9 : vector<16x128xf32>
    %cst_7 = arith.constant dense<0.000000e+00> : vector<16xf32>
    %11 = vector.multi_reduction <add>, %10, %cst_7 [1] : vector<16x128xf32> to vector<16xf32>
    %12 = vector.shape_cast %11 : vector<16xf32> to vector<16x1xf32>
    %cst_8 = arith.constant 1.280000e+02 : f32
    %13 = vector.broadcast %cst_8 : f32 to vector<16x1xf32>
    %14 = arith.divf %12, %13 : vector<16x1xf32>
    %15 = vector.broadcast %7 : vector<16x1xf32> to vector<16x128xf32>
    %16 = arith.subf %1, %15 : vector<16x128xf32>
    %cst_9 = arith.constant 9.99999974E-6 : f32
    %17 = vector.broadcast %cst_9 : f32 to vector<16x1xf32>
    %18 = arith.addf %14, %17 : vector<16x1xf32>
    %19 = math.rsqrt %18 : vector<16x1xf32>
    %20 = vector.broadcast %19 : vector<16x1xf32> to vector<16x128xf32>
    %21 = arith.mulf %16, %20 : vector<16x128xf32>
    %22 = vector.broadcast %2 : vector<1x128xf32> to vector<16x128xf32>
    %23 = arith.mulf %21, %22 : vector<16x128xf32>
    %24 = vector.broadcast %3 : vector<1x128xf32> to vector<16x128xf32>
    %25 = arith.addf %23, %24 : vector<16x128xf32>
    %c0_10 = arith.constant 0 : index
    %c0_11 = arith.constant 0 : index
    %26 = vector.load %arg5[%c0_10, %c0_11] : memref<128x384xf32, #tpu.memory_space<vmem>>, vector<128x384xf32>
    %cst_12 = arith.constant dense<0.000000e+00> : vector<16x384xf32>
    %27 = tpu.matmul %25, %26, %cst_12 {dimension_numbers = #tpu.dot_dimension_numbers<[1], [0], [0], [1], [0, 0, 1, 1], [], []>} : vector<16x128xf32>, vector<128x384xf32>, vector<16x384xf32> -> vector<16x384xf32>
    %28 = vector.shape_cast %27 : vector<16x384xf32> to vector<2x8x384xf32>
    %29 = tpu.iota {dimensions = array<i32: 0>} : vector<8x8xi32>
    %30 = tpu.iota {dimensions = array<i32: 1>} : vector<8x8xi32>
    %c0_13 = arith.constant 0 : index
    %c0_14 = arith.constant 0 : index
    %c0_15 = arith.constant 0 : index
    %31 = vector.load %arg2[%c0_13, %c0_14, %c0_15] : memref<2x1x8xf32, #tpu.memory_space<vmem>>, vector<2x1x8xf32>
    %32 = vector.shape_cast %31 : vector<2x1x8xf32> to vector<2x8xf32>
    %cst_16 = arith.constant 0.000000e+00 : f32
    %33 = vector.broadcast %cst_16 : f32 to vector<2x8xf32>
    %34 = arith.cmpf one, %32, %33 : vector<2x8xf32>
    %35 = arith.cmpi sge, %29, %30 : vector<8x8xi32>
    %36 = vector.shape_cast %35 : vector<8x8xi1> to vector<1x8x8xi1>
    %37 = vector.shape_cast %34 : vector<2x8xi1> to vector<2x1x8xi1>
    %38 = vector.broadcast %36 : vector<1x8x8xi1> to vector<2x8x8xi1>
    %39 = vector.broadcast %37 : vector<2x1x8xi1> to vector<2x8x8xi1>
    %40 = arith.andi %38, %39 : vector<2x8x8xi1>
    %cst_17 = arith.constant 0.000000e+00 : f32
    %cst_18 = arith.constant -1.000000e+09 : f32
    %41 = vector.broadcast %cst_17 : f32 to vector<2x8x8xf32>
    %42 = vector.broadcast %cst_18 : f32 to vector<2x8x8xf32>
    %43 = arith.select %40, %41, %42 : vector<2x8x8xi1>, vector<2x8x8xf32>
    %44 = vector.extract_strided_slice %28 {offsets = [0, 0, 0], sizes = [2, 8, 32], strides = [1, 1, 1]} : vector<2x8x384xf32> to vector<2x8x32xf32>
    %45 = vector.extract_strided_slice %28 {offsets = [0, 0, 128], sizes = [2, 8, 32], strides = [1, 1, 1]} : vector<2x8x384xf32> to vector<2x8x32xf32>
    %46 = vector.extract_strided_slice %28 {offsets = [0, 0, 256], sizes = [2, 8, 32], strides = [1, 1, 1]} : vector<2x8x384xf32> to vector<2x8x32xf32>
    "tpu.trace_start"() <{level = 10 : i32, message = "btd,bsd->bts"}> : () -> ()
    %cst_19 = arith.constant dense<0.000000e+00> : vector<2x8x8xf32>
    %47 = tpu.matmul %44, %45, %cst_19 {dimension_numbers = #tpu.dot_dimension_numbers<[2], [2], [1], [1], [0, 0, 0, 1, 1, 1], [0], [0]>} : vector<2x8x32xf32>, vector<2x8x32xf32>, vector<2x8x8xf32> -> vector<2x8x8xf32>
    "tpu.trace_stop"() : () -> ()
    %cst_20 = arith.constant 0.176776692 : f32
    %48 = vector.broadcast %cst_20 : f32 to vector<2x8x8xf32>
    %49 = arith.mulf %47, %48 : vector<2x8x8xf32>
    %50 = arith.addf %49, %43 : vector<2x8x8xf32>
    %cst_21 = arith.constant dense<0xFF800000> : vector<2x8xf32>
    %51 = vector.multi_reduction <maximumf>, %50, %cst_21 [2] : vector<2x8x8xf32> to vector<2x8xf32>
    %52 = vector.shape_cast %51 : vector<2x8xf32> to vector<2x8x1xf32>
    %53 = vector.broadcast %52 : vector<2x8x1xf32> to vector<2x8x8xf32>
    %54 = arith.subf %50, %53 : vector<2x8x8xf32>
    %55 = math.exp %54 : vector<2x8x8xf32>
    %cst_22 = arith.constant dense<0.000000e+00> : vector<2x8xf32>
    %56 = vector.multi_reduction <add>, %55, %cst_22 [2] : vector<2x8x8xf32> to vector<2x8xf32>
    %57 = vector.shape_cast %56 : vector<2x8xf32> to vector<2x8x1xf32>
    %cst_23 = arith.constant 1.000000e+00 : f32
    %58 = vector.broadcast %cst_23 : f32 to vector<2x8x1xf32>
    %59 = arith.divf %58, %57 : vector<2x8x1xf32>
    %60 = vector.broadcast %59 : vector<2x8x1xf32> to vector<2x8x8xf32>
    %61 = arith.mulf %55, %60 : vector<2x8x8xf32>
    %c0_24 = arith.constant 0 : index
    %c0_25 = arith.constant 0 : index
    %c0_26 = arith.constant 0 : index
    %c0_27 = arith.constant 0 : index
    %62 = vector.load %arg21[%c0_24, %c0_25, %c0_26, %c0_27] : memref<2x4x8x8xf32, #tpu.memory_space<vmem>>, vector<2x1x8x8xf32>
    %63 = vector.shape_cast %62 : vector<2x1x8x8xf32> to vector<2x8x8xf32>
    %64 = vector.shape_cast %61 : vector<2x8x8xf32> to vector<2x1x8x8xf32>
    tpu.vector_store %arg21[%c0_24, %c0_25, %c0_26, %c0_27], %64 {strides = array<i32>} : memref<2x4x8x8xf32, #tpu.memory_space<vmem>>, vector<2x1x8x8xf32>,
    "tpu.trace_start"() <{level = 10 : i32, message = "bts,bsd->btd"}> : () -> ()
    %cst_28 = arith.constant dense<0.000000e+00> : vector<2x8x32xf32>
    %65 = tpu.matmul %61, %46, %cst_28 {dimension_numbers = #tpu.dot_dimension_numbers<[2], [1], [1], [2], [0, 0, 0, 1, 1, 2], [0], [0]>} : vector<2x8x8xf32>, vector<2x8x32xf32>, vector<2x8x32xf32> -> vector<2x8x32xf32>
    "tpu.trace_stop"() : () -> ()
    %66 = vector.shape_cast %65 : vector<2x8x32xf32> to vector<16x32xf32>
    %c0_29 = arith.constant 0 : index
    %c0_30 = arith.constant 0 : index
    %67 = vector.load %arg22[%c0_29, %c0_30] : memref<16x128xf32, #tpu.memory_space<vmem>>, vector<16x32xf32>
    tpu.vector_store %arg22[%c0_29, %c0_30], %66 {strides = array<i32>} : memref<16x128xf32, #tpu.memory_space<vmem>>, vector<16x32xf32>,
    %68 = vector.extract_strided_slice %28 {offsets = [0, 0, 32], sizes = [2, 8, 32], strides = [1, 1, 1]} : vector<2x8x384xf32> to vector<2x8x32xf32>
    %69 = vector.extract_strided_slice %28 {offsets = [0, 0, 160], sizes = [2, 8, 32], strides = [1, 1, 1]} : vector<2x8x384xf32> to vector<2x8x32xf32>
    %70 = vector.extract_strided_slice %28 {offsets = [0, 0, 288], sizes = [2, 8, 32], strides = [1, 1, 1]} : vector<2x8x384xf32> to vector<2x8x32xf32>
    "tpu.trace_start"() <{level = 10 : i32, message = "btd,bsd->bts"}> : () -> ()
    %cst_31 = arith.constant dense<0.000000e+00> : vector<2x8x8xf32>
    %71 = tpu.matmul %68, %69, %cst_31 {dimension_numbers = #tpu.dot_dimension_numbers<[2], [2], [1], [1], [0, 0, 0, 1, 1, 1], [0], [0]>} : vector<2x8x32xf32>, vector<2x8x32xf32>, vector<2x8x8xf32> -> vector<2x8x8xf32>
    "tpu.trace_stop"() : () -> ()
    %cst_32 = arith.constant 0.176776692 : f32
    %72 = vector.broadcast %cst_32 : f32 to vector<2x8x8xf32>
    %73 = arith.mulf %71, %72 : vector<2x8x8xf32>
    %74 = arith.addf %73, %43 : vector<2x8x8xf32>
    %cst_33 = arith.constant dense<0xFF800000> : vector<2x8xf32>
    %75 = vector.multi_reduction <maximumf>, %74, %cst_33 [2] : vector<2x8x8xf32> to vector<2x8xf32>
    %76 = vector.shape_cast %75 : vector<2x8xf32> to vector<2x8x1xf32>
    %77 = vector.broadcast %76 : vector<2x8x1xf32> to vector<2x8x8xf32>
    %78 = arith.subf %74, %77 : vector<2x8x8xf32>
    %79 = math.exp %78 : vector<2x8x8xf32>
    %cst_34 = arith.constant dense<0.000000e+00> : vector<2x8xf32>
    %80 = vector.multi_reduction <add>, %79, %cst_34 [2] : vector<2x8x8xf32> to vector<2x8xf32>
    %81 = vector.shape_cast %80 : vector<2x8xf32> to vector<2x8x1xf32>
    %cst_35 = arith.constant 1.000000e+00 : f32
    %82 = vector.broadcast %cst_35 : f32 to vector<2x8x1xf32>
    %83 = arith.divf %82, %81 : vector<2x8x1xf32>
    %84 = vector.broadcast %83 : vector<2x8x1xf32> to vector<2x8x8xf32>
    %85 = arith.mulf %79, %84 : vector<2x8x8xf32>
    %c0_36 = arith.constant 0 : index
    %c1 = arith.constant 1 : index
    %c0_37 = arith.constant 0 : index
    %c0_38 = arith.constant 0 : index
    %86 = vector.load %arg21[%c0_36, %c1, %c0_37, %c0_38] : memref<2x4x8x8xf32, #tpu.memory_space<vmem>>, vector<2x1x8x8xf32>
    %87 = vector.shape_cast %86 : vector<2x1x8x8xf32> to vector<2x8x8xf32>
    %88 = vector.shape_cast %85 : vector<2x8x8xf32> to vector<2x1x8x8xf32>
    tpu.vector_store %arg21[%c0_36, %c1, %c0_37, %c0_38], %88 {strides = array<i32>} : memref<2x4x8x8xf32, #tpu.memory_space<vmem>>, vector<2x1x8x8xf32>,
    "tpu.trace_start"() <{level = 10 : i32, message = "bts,bsd->btd"}> : () -> ()
    %cst_39 = arith.constant dense<0.000000e+00> : vector<2x8x32xf32>
    %89 = tpu.matmul %85, %70, %cst_39 {dimension_numbers = #tpu.dot_dimension_numbers<[2], [1], [1], [2], [0, 0, 0, 1, 1, 2], [0], [0]>} : vector<2x8x8xf32>, vector<2x8x32xf32>, vector<2x8x32xf32> -> vector<2x8x32xf32>
    "tpu.trace_stop"() : () -> ()
    %90 = vector.shape_cast %89 : vector<2x8x32xf32> to vector<16x32xf32>
    %c0_40 = arith.constant 0 : index
    %c32 = arith.constant 32 : index
    %91 = vector.load %arg22[%c0_40, %c32] : memref<16x128xf32, #tpu.memory_space<vmem>>, vector<16x32xf32>
    tpu.vector_store %arg22[%c0_40, %c32], %90 {strides = array<i32>} : memref<16x128xf32, #tpu.memory_space<vmem>>, vector<16x32xf32>,
    %92 = vector.extract_strided_slice %28 {offsets = [0, 0, 64], sizes = [2, 8, 32], strides = [1, 1, 1]} : vector<2x8x384xf32> to vector<2x8x32xf32>
    %93 = vector.extract_strided_slice %28 {offsets = [0, 0, 192], sizes = [2, 8, 32], strides = [1, 1, 1]} : vector<2x8x384xf32> to vector<2x8x32xf32>
    %94 = vector.extract_strided_slice %28 {offsets = [0, 0, 320], sizes = [2, 8, 32], strides = [1, 1, 1]} : vector<2x8x384xf32> to vector<2x8x32xf32>
    "tpu.trace_start"() <{level = 10 : i32, message = "btd,bsd->bts"}> : () -> ()
    %cst_41 = arith.constant dense<0.000000e+00> : vector<2x8x8xf32>
    %95 = tpu.matmul %92, %93, %cst_41 {dimension_numbers = #tpu.dot_dimension_numbers<[2], [2], [1], [1], [0, 0, 0, 1, 1, 1], [0], [0]>} : vector<2x8x32xf32>, vector<2x8x32xf32>, vector<2x8x8xf32> -> vector<2x8x8xf32>
    "tpu.trace_stop"() : () -> ()
    %cst_42 = arith.constant 0.176776692 : f32
    %96 = vector.broadcast %cst_42 : f32 to vector<2x8x8xf32>
    %97 = arith.mulf %95, %96 : vector<2x8x8xf32>
    %98 = arith.addf %97, %43 : vector<2x8x8xf32>
    %cst_43 = arith.constant dense<0xFF800000> : vector<2x8xf32>
    %99 = vector.multi_reduction <maximumf>, %98, %cst_43 [2] : vector<2x8x8xf32> to vector<2x8xf32>
    %100 = vector.shape_cast %99 : vector<2x8xf32> to vector<2x8x1xf32>
    %101 = vector.broadcast %100 : vector<2x8x1xf32> to vector<2x8x8xf32>
    %102 = arith.subf %98, %101 : vector<2x8x8xf32>
    %103 = math.exp %102 : vector<2x8x8xf32>
    %cst_44 = arith.constant dense<0.000000e+00> : vector<2x8xf32>
    %104 = vector.multi_reduction <add>, %103, %cst_44 [2] : vector<2x8x8xf32> to vector<2x8xf32>
    %105 = vector.shape_cast %104 : vector<2x8xf32> to vector<2x8x1xf32>
    %cst_45 = arith.constant 1.000000e+00 : f32
    %106 = vector.broadcast %cst_45 : f32 to vector<2x8x1xf32>
    %107 = arith.divf %106, %105 : vector<2x8x1xf32>
    %108 = vector.broadcast %107 : vector<2x8x1xf32> to vector<2x8x8xf32>
    %109 = arith.mulf %103, %108 : vector<2x8x8xf32>
    %c0_46 = arith.constant 0 : index
    %c2 = arith.constant 2 : index
    %c0_47 = arith.constant 0 : index
    %c0_48 = arith.constant 0 : index
    %110 = vector.load %arg21[%c0_46, %c2, %c0_47, %c0_48] : memref<2x4x8x8xf32, #tpu.memory_space<vmem>>, vector<2x1x8x8xf32>
    %111 = vector.shape_cast %110 : vector<2x1x8x8xf32> to vector<2x8x8xf32>
    %112 = vector.shape_cast %109 : vector<2x8x8xf32> to vector<2x1x8x8xf32>
    tpu.vector_store %arg21[%c0_46, %c2, %c0_47, %c0_48], %112 {strides = array<i32>} : memref<2x4x8x8xf32, #tpu.memory_space<vmem>>, vector<2x1x8x8xf32>,
    "tpu.trace_start"() <{level = 10 : i32, message = "bts,bsd->btd"}> : () -> ()
    %cst_49 = arith.constant dense<0.000000e+00> : vector<2x8x32xf32>
    %113 = tpu.matmul %109, %94, %cst_49 {dimension_numbers = #tpu.dot_dimension_numbers<[2], [1], [1], [2], [0, 0, 0, 1, 1, 2], [0], [0]>} : vector<2x8x8xf32>, vector<2x8x32xf32>, vector<2x8x32xf32> -> vector<2x8x32xf32>
    "tpu.trace_stop"() : () -> ()
    %114 = vector.shape_cast %113 : vector<2x8x32xf32> to vector<16x32xf32>
    %c0_50 = arith.constant 0 : index
    %c64 = arith.constant 64 : index
    %115 = vector.load %arg22[%c0_50, %c64] : memref<16x128xf32, #tpu.memory_space<vmem>>, vector<16x32xf32>
    tpu.vector_store %arg22[%c0_50, %c64], %114 {strides = array<i32>} : memref<16x128xf32, #tpu.memory_space<vmem>>, vector<16x32xf32>,
    %116 = vector.extract_strided_slice %28 {offsets = [0, 0, 96], sizes = [2, 8, 32], strides = [1, 1, 1]} : vector<2x8x384xf32> to vector<2x8x32xf32>
    %117 = vector.extract_strided_slice %28 {offsets = [0, 0, 224], sizes = [2, 8, 32], strides = [1, 1, 1]} : vector<2x8x384xf32> to vector<2x8x32xf32>
    %118 = vector.extract_strided_slice %28 {offsets = [0, 0, 352], sizes = [2, 8, 32], strides = [1, 1, 1]} : vector<2x8x384xf32> to vector<2x8x32xf32>
    "tpu.trace_start"() <{level = 10 : i32, message = "btd,bsd->bts"}> : () -> ()
    %cst_51 = arith.constant dense<0.000000e+00> : vector<2x8x8xf32>
    %119 = tpu.matmul %116, %117, %cst_51 {dimension_numbers = #tpu.dot_dimension_numbers<[2], [2], [1], [1], [0, 0, 0, 1, 1, 1], [0], [0]>} : vector<2x8x32xf32>, vector<2x8x32xf32>, vector<2x8x8xf32> -> vector<2x8x8xf32>
    "tpu.trace_stop"() : () -> ()
    %cst_52 = arith.constant 0.176776692 : f32
    %120 = vector.broadcast %cst_52 : f32 to vector<2x8x8xf32>
    %121 = arith.mulf %119, %120 : vector<2x8x8xf32>
    %122 = arith.addf %121, %43 : vector<2x8x8xf32>
    %cst_53 = arith.constant dense<0xFF800000> : vector<2x8xf32>
    %123 = vector.multi_reduction <maximumf>, %122, %cst_53 [2] : vector<2x8x8xf32> to vector<2x8xf32>
    %124 = vector.shape_cast %123 : vector<2x8xf32> to vector<2x8x1xf32>
    %125 = vector.broadcast %124 : vector<2x8x1xf32> to vector<2x8x8xf32>
    %126 = arith.subf %122, %125 : vector<2x8x8xf32>
    %127 = math.exp %126 : vector<2x8x8xf32>
    %cst_54 = arith.constant dense<0.000000e+00> : vector<2x8xf32>
    %128 = vector.multi_reduction <add>, %127, %cst_54 [2] : vector<2x8x8xf32> to vector<2x8xf32>
    %129 = vector.shape_cast %128 : vector<2x8xf32> to vector<2x8x1xf32>
    %cst_55 = arith.constant 1.000000e+00 : f32
    %130 = vector.broadcast %cst_55 : f32 to vector<2x8x1xf32>
    %131 = arith.divf %130, %129 : vector<2x8x1xf32>
    %132 = vector.broadcast %131 : vector<2x8x1xf32> to vector<2x8x8xf32>
    %133 = arith.mulf %127, %132 : vector<2x8x8xf32>
    %c0_56 = arith.constant 0 : index
    %c3 = arith.constant 3 : index
    %c0_57 = arith.constant 0 : index
    %c0_58 = arith.constant 0 : index
    %134 = vector.load %arg21[%c0_56, %c3, %c0_57, %c0_58] : memref<2x4x8x8xf32, #tpu.memory_space<vmem>>, vector<2x1x8x8xf32>
    %135 = vector.shape_cast %134 : vector<2x1x8x8xf32> to vector<2x8x8xf32>
    %136 = vector.shape_cast %133 : vector<2x8x8xf32> to vector<2x1x8x8xf32>
    tpu.vector_store %arg21[%c0_56, %c3, %c0_57, %c0_58], %136 {strides = array<i32>} : memref<2x4x8x8xf32, #tpu.memory_space<vmem>>, vector<2x1x8x8xf32>,
    "tpu.trace_start"() <{level = 10 : i32, message = "bts,bsd->btd"}> : () -> ()
    %cst_59 = arith.constant dense<0.000000e+00> : vector<2x8x32xf32>
    %137 = tpu.matmul %133, %118, %cst_59 {dimension_numbers = #tpu.dot_dimension_numbers<[2], [1], [1], [2], [0, 0, 0, 1, 1, 2], [0], [0]>} : vector<2x8x8xf32>, vector<2x8x32xf32>, vector<2x8x32xf32> -> vector<2x8x32xf32>
    "tpu.trace_stop"() : () -> ()
    %138 = vector.shape_cast %137 : vector<2x8x32xf32> to vector<16x32xf32>
    %c0_60 = arith.constant 0 : index
    %c96 = arith.constant 96 : index
    %139 = vector.load %arg22[%c0_60, %c96] : memref<16x128xf32, #tpu.memory_space<vmem>>, vector<16x32xf32>
    tpu.vector_store %arg22[%c0_60, %c96], %138 {strides = array<i32>} : memref<16x128xf32, #tpu.memory_space<vmem>>, vector<16x32xf32>,
    %c0_61 = arith.constant 0 : index
    %c0_62 = arith.constant 0 : index
    %140 = vector.load %arg22[%c0_61, %c0_62] : memref<16x128xf32, #tpu.memory_space<vmem>>, vector<16x128xf32>
    %c0_63 = arith.constant 0 : index
    %c0_64 = arith.constant 0 : index
    %141 = vector.load %arg6[%c0_63, %c0_64] : memref<128x128xf32, #tpu.memory_space<vmem>>, vector<128x128xf32>
    %cst_65 = arith.constant dense<0.000000e+00> : vector<16x128xf32>
    %142 = tpu.matmul %140, %141, %cst_65 {dimension_numbers = #tpu.dot_dimension_numbers<[1], [0], [0], [1], [0, 0, 1, 1], [], []>} : vector<16x128xf32>, vector<128x128xf32>, vector<16x128xf32> -> vector<16x128xf32>
    %c0_66 = arith.constant 0 : index
    %c0_67 = arith.constant 0 : index
    %143 = vector.load %arg7[%c0_66, %c0_67] : memref<1x128xf32, #tpu.memory_space<vmem>>, vector<1x128xf32>
    %144 = vector.broadcast %143 : vector<1x128xf32> to vector<16x128xf32>
    %145 = arith.addf %142, %144 : vector<16x128xf32>
    %c0_68 = arith.constant 0 : index
    %c0_69 = arith.constant 0 : index
    %146 = vector.load %arg8[%c0_68, %c0_69] : memref<128x128xf32, #tpu.memory_space<vmem>>, vector<128x128xf32>
    %cst_70 = arith.constant dense<0.000000e+00> : vector<16x128xf32>
    %147 = tpu.matmul %145, %146, %cst_70 {dimension_numbers = #tpu.dot_dimension_numbers<[1], [0], [0], [1], [0, 0, 1, 1], [], []>} : vector<16x128xf32>, vector<128x128xf32>, vector<16x128xf32> -> vector<16x128xf32>
    %c0_71 = arith.constant 0 : index
    %c0_72 = arith.constant 0 : index
    %148 = vector.load %arg9[%c0_71, %c0_72] : memref<1x128xf32, #tpu.memory_space<vmem>>, vector<1x128xf32>
    %149 = vector.broadcast %148 : vector<1x128xf32> to vector<16x128xf32>
    %150 = arith.addf %147, %149 : vector<16x128xf32>
    %151 = arith.negf %150 : vector<16x128xf32>
    %152 = math.exp %151 : vector<16x128xf32>
    %cst_73 = arith.constant 1.000000e+00 : f32
    %153 = vector.broadcast %cst_73 : f32 to vector<16x128xf32>
    %154 = arith.addf %153, %152 : vector<16x128xf32>
    %155 = arith.divf %153, %154 : vector<16x128xf32>
    %156 = arith.mulf %155, %1 : vector<16x128xf32>
    %157 = arith.addf %145, %156 : vector<16x128xf32>
    %c0_74 = arith.constant 0 : index
    %c0_75 = arith.constant 0 : index
    %158 = vector.load %arg10[%c0_74, %c0_75] : memref<1x128xf32, #tpu.memory_space<vmem>>, vector<1x128xf32>
    %c0_76 = arith.constant 0 : index
    %c0_77 = arith.constant 0 : index
    %159 = vector.load %arg11[%c0_76, %c0_77] : memref<1x128xf32, #tpu.memory_space<vmem>>, vector<1x128xf32>
    %cst_78 = arith.constant dense<0.000000e+00> : vector<16xf32>
    %160 = vector.multi_reduction <add>, %157, %cst_78 [1] : vector<16x128xf32> to vector<16xf32>
    %161 = vector.shape_cast %160 : vector<16xf32> to vector<16x1xf32>
    %cst_79 = arith.constant 1.280000e+02 : f32
    %162 = vector.broadcast %cst_79 : f32 to vector<16x1xf32>
    %163 = arith.divf %161, %162 : vector<16x1xf32>
    %164 = vector.broadcast %163 : vector<16x1xf32> to vector<16x128xf32>
    %165 = arith.subf %157, %164 : vector<16x128xf32>
    %166 = arith.mulf %165, %165 : vector<16x128xf32>
    %cst_80 = arith.constant dense<0.000000e+00> : vector<16xf32>
    %167 = vector.multi_reduction <add>, %166, %cst_80 [1] : vector<16x128xf32> to vector<16xf32>
    %168 = vector.shape_cast %167 : vector<16xf32> to vector<16x1xf32>
    %cst_81 = arith.constant 1.280000e+02 : f32
    %169 = vector.broadcast %cst_81 : f32 to vector<16x1xf32>
    %170 = arith.divf %168, %169 : vector<16x1xf32>
    %171 = vector.broadcast %163 : vector<16x1xf32> to vector<16x128xf32>
    %172 = arith.subf %157, %171 : vector<16x128xf32>
    %cst_82 = arith.constant 9.99999974E-6 : f32
    %173 = vector.broadcast %cst_82 : f32 to vector<16x1xf32>
    %174 = arith.addf %170, %173 : vector<16x1xf32>
    %175 = math.rsqrt %174 : vector<16x1xf32>
    %176 = vector.broadcast %175 : vector<16x1xf32> to vector<16x128xf32>
    %177 = arith.mulf %172, %176 : vector<16x128xf32>
    %178 = vector.broadcast %158 : vector<1x128xf32> to vector<16x128xf32>
    %179 = arith.mulf %177, %178 : vector<16x128xf32>
    %180 = vector.broadcast %159 : vector<1x128xf32> to vector<16x128xf32>
    %181 = arith.addf %179, %180 : vector<16x128xf32>
    %c0_83 = arith.constant 0 : index
    %c0_84 = arith.constant 0 : index
    %182 = vector.load %arg12[%c0_83, %c0_84] : memref<128x512xf32, #tpu.memory_space<vmem>>, vector<128x512xf32>
    %cst_85 = arith.constant dense<0.000000e+00> : vector<16x512xf32>
    %183 = tpu.matmul %181, %182, %cst_85 {dimension_numbers = #tpu.dot_dimension_numbers<[1], [0], [0], [1], [0, 0, 1, 1], [], []>} : vector<16x128xf32>, vector<128x512xf32>, vector<16x512xf32> -> vector<16x512xf32>
    %c0_86 = arith.constant 0 : index
    %c0_87 = arith.constant 0 : index
    %184 = vector.load %arg13[%c0_86, %c0_87] : memref<1x512xf32, #tpu.memory_space<vmem>>, vector<1x512xf32>
    %185 = vector.broadcast %184 : vector<1x512xf32> to vector<16x512xf32>
    %186 = arith.addf %183, %185 : vector<16x512xf32>
    %cst_88 = arith.constant 5.000000e-01 : f32
    %187 = vector.broadcast %cst_88 : f32 to vector<16x512xf32>
    %188 = arith.mulf %187, %186 : vector<16x512xf32>
    %cst_89 = arith.constant 0.707106769 : f32
    %189 = vector.broadcast %cst_89 : f32 to vector<16x512xf32>
    %190 = arith.mulf %186, %189 : vector<16x512xf32>
    %cst_90 = arith.constant 0.000000e+00 : f32
    %191 = vector.broadcast %cst_90 : f32 to vector<16x512xf32>
    %192 = arith.cmpf oge, %190, %191 : vector<16x512xf32>
    %cst_91 = arith.constant 1.000000e+00 : f32
    %cst_92 = arith.constant -1.000000e+00 : f32
    %193 = vector.broadcast %cst_91 : f32 to vector<16x512xf32>
    %194 = vector.broadcast %cst_92 : f32 to vector<16x512xf32>
    %195 = arith.select %192, %193, %194 : vector<16x512xi1>, vector<16x512xf32>
    %196 = math.absf %190 : vector<16x512xf32>
    %cst_93 = arith.constant 0.327591091 : f32
    %197 = vector.broadcast %cst_93 : f32 to vector<16x512xf32>
    %198 = arith.mulf %197, %196 : vector<16x512xf32>
    %cst_94 = arith.constant 1.000000e+00 : f32
    %199 = vector.broadcast %cst_94 : f32 to vector<16x512xf32>
    %200 = arith.addf %199, %198 : vector<16x512xf32>
    %cst_95 = arith.constant 1.000000e+00 : f32
    %201 = vector.broadcast %cst_95 : f32 to vector<16x512xf32>
    %202 = arith.divf %201, %200 : vector<16x512xf32>
    %cst_96 = arith.constant 1.06140542 : f32
    %203 = vector.broadcast %cst_96 : f32 to vector<16x512xf32>
    %204 = arith.mulf %203, %202 : vector<16x512xf32>
    %cst_97 = arith.constant -1.45315206 : f32
    %205 = vector.broadcast %cst_97 : f32 to vector<16x512xf32>
    %206 = arith.addf %204, %205 : vector<16x512xf32>
    %207 = arith.mulf %206, %202 : vector<16x512xf32>
    %cst_98 = arith.constant 1.42141378 : f32
    %208 = vector.broadcast %cst_98 : f32 to vector<16x512xf32>
    %209 = arith.addf %207, %208 : vector<16x512xf32>
    %210 = arith.mulf %209, %202 : vector<16x512xf32>
    %cst_99 = arith.constant -0.284496725 : f32
    %211 = vector.broadcast %cst_99 : f32 to vector<16x512xf32>
    %212 = arith.addf %210, %211 : vector<16x512xf32>
    %213 = arith.mulf %212, %202 : vector<16x512xf32>
    %cst_100 = arith.constant 0.254829586 : f32
    %214 = vector.broadcast %cst_100 : f32 to vector<16x512xf32>
    %215 = arith.addf %213, %214 : vector<16x512xf32>
    %216 = arith.mulf %215, %202 : vector<16x512xf32>
    %cst_101 = arith.constant 0.000000e+00 : f32
    %217 = vector.broadcast %cst_101 : f32 to vector<16x512xf32>
    %218 = arith.subf %217, %196 : vector<16x512xf32>
    %219 = arith.mulf %218, %196 : vector<16x512xf32>
    %220 = math.exp %219 : vector<16x512xf32>
    %221 = arith.mulf %216, %220 : vector<16x512xf32>
    %cst_102 = arith.constant 1.000000e+00 : f32
    %222 = vector.broadcast %cst_102 : f32 to vector<16x512xf32>
    %223 = arith.subf %222, %221 : vector<16x512xf32>
    %224 = arith.mulf %195, %223 : vector<16x512xf32>
    %cst_103 = arith.constant 1.000000e+00 : f32
    %225 = vector.broadcast %cst_103 : f32 to vector<16x512xf32>
    %226 = arith.addf %225, %224 : vector<16x512xf32>
    %227 = arith.mulf %188, %226 : vector<16x512xf32>
    %c0_104 = arith.constant 0 : index
    %c0_105 = arith.constant 0 : index
    %228 = vector.load %arg14[%c0_104, %c0_105] : memref<512x256xf32, #tpu.memory_space<vmem>>, vector<512x256xf32>
    %cst_106 = arith.constant dense<0.000000e+00> : vector<16x256xf32>
    %229 = tpu.matmul %227, %228, %cst_106 {dimension_numbers = #tpu.dot_dimension_numbers<[1], [0], [0], [1], [0, 0, 1, 1], [], []>} : vector<16x512xf32>, vector<512x256xf32>, vector<16x256xf32> -> vector<16x256xf32>
    %c0_107 = arith.constant 0 : index
    %c0_108 = arith.constant 0 : index
    %230 = vector.load %arg15[%c0_107, %c0_108] : memref<1x256xf32, #tpu.memory_space<vmem>>, vector<1x256xf32>
    %231 = vector.broadcast %230 : vector<1x256xf32> to vector<16x256xf32>
    %232 = arith.addf %229, %231 : vector<16x256xf32>
    %cst_109 = arith.constant 5.000000e-01 : f32
    %233 = vector.broadcast %cst_109 : f32 to vector<16x256xf32>
    %234 = arith.mulf %233, %232 : vector<16x256xf32>
    %cst_110 = arith.constant 0.707106769 : f32
    %235 = vector.broadcast %cst_110 : f32 to vector<16x256xf32>
    %236 = arith.mulf %232, %235 : vector<16x256xf32>
    %cst_111 = arith.constant 0.000000e+00 : f32
    %237 = vector.broadcast %cst_111 : f32 to vector<16x256xf32>
    %238 = arith.cmpf oge, %236, %237 : vector<16x256xf32>
    %cst_112 = arith.constant 1.000000e+00 : f32
    %cst_113 = arith.constant -1.000000e+00 : f32
    %239 = vector.broadcast %cst_112 : f32 to vector<16x256xf32>
    %240 = vector.broadcast %cst_113 : f32 to vector<16x256xf32>
    %241 = arith.select %238, %239, %240 : vector<16x256xi1>, vector<16x256xf32>
    %242 = math.absf %236 : vector<16x256xf32>
    %cst_114 = arith.constant 0.327591091 : f32
    %243 = vector.broadcast %cst_114 : f32 to vector<16x256xf32>
    %244 = arith.mulf %243, %242 : vector<16x256xf32>
    %cst_115 = arith.constant 1.000000e+00 : f32
    %245 = vector.broadcast %cst_115 : f32 to vector<16x256xf32>
    %246 = arith.addf %245, %244 : vector<16x256xf32>
    %cst_116 = arith.constant 1.000000e+00 : f32
    %247 = vector.broadcast %cst_116 : f32 to vector<16x256xf32>
    %248 = arith.divf %247, %246 : vector<16x256xf32>
    %cst_117 = arith.constant 1.06140542 : f32
    %249 = vector.broadcast %cst_117 : f32 to vector<16x256xf32>
    %250 = arith.mulf %249, %248 : vector<16x256xf32>
    %cst_118 = arith.constant -1.45315206 : f32
    %251 = vector.broadcast %cst_118 : f32 to vector<16x256xf32>
    %252 = arith.addf %250, %251 : vector<16x256xf32>
    %253 = arith.mulf %252, %248 : vector<16x256xf32>
    %cst_119 = arith.constant 1.42141378 : f32
    %254 = vector.broadcast %cst_119 : f32 to vector<16x256xf32>
    %255 = arith.addf %253, %254 : vector<16x256xf32>
    %256 = arith.mulf %255, %248 : vector<16x256xf32>
    %cst_120 = arith.constant -0.284496725 : f32
    %257 = vector.broadcast %cst_120 : f32 to vector<16x256xf32>
    %258 = arith.addf %256, %257 : vector<16x256xf32>
    %259 = arith.mulf %258, %248 : vector<16x256xf32>
    %cst_121 = arith.constant 0.254829586 : f32
    %260 = vector.broadcast %cst_121 : f32 to vector<16x256xf32>
    %261 = arith.addf %259, %260 : vector<16x256xf32>
    %262 = arith.mulf %261, %248 : vector<16x256xf32>
    %cst_122 = arith.constant 0.000000e+00 : f32
    %263 = vector.broadcast %cst_122 : f32 to vector<16x256xf32>
    %264 = arith.subf %263, %242 : vector<16x256xf32>
    %265 = arith.mulf %264, %242 : vector<16x256xf32>
    %266 = math.exp %265 : vector<16x256xf32>
    %267 = arith.mulf %262, %266 : vector<16x256xf32>
    %cst_123 = arith.constant 1.000000e+00 : f32
    %268 = vector.broadcast %cst_123 : f32 to vector<16x256xf32>
    %269 = arith.subf %268, %267 : vector<16x256xf32>
    %270 = arith.mulf %241, %269 : vector<16x256xf32>
    %cst_124 = arith.constant 1.000000e+00 : f32
    %271 = vector.broadcast %cst_124 : f32 to vector<16x256xf32>
    %272 = arith.addf %271, %270 : vector<16x256xf32>
    %273 = arith.mulf %234, %272 : vector<16x256xf32>
    %c0_125 = arith.constant 0 : index
    %c0_126 = arith.constant 0 : index
    %274 = vector.load %arg16[%c0_125, %c0_126] : memref<256x128xf32, #tpu.memory_space<vmem>>, vector<256x128xf32>
    %cst_127 = arith.constant dense<0.000000e+00> : vector<16x128xf32>
    %275 = tpu.matmul %273, %274, %cst_127 {dimension_numbers = #tpu.dot_dimension_numbers<[1], [0], [0], [1], [0, 0, 1, 1], [], []>} : vector<16x256xf32>, vector<256x128xf32>, vector<16x128xf32> -> vector<16x128xf32>
    %c0_128 = arith.constant 0 : index
    %c0_129 = arith.constant 0 : index
    %276 = vector.load %arg17[%c0_128, %c0_129] : memref<1x128xf32, #tpu.memory_space<vmem>>, vector<1x128xf32>
    %277 = vector.broadcast %276 : vector<1x128xf32> to vector<16x128xf32>
    %278 = arith.addf %275, %277 : vector<16x128xf32>
    %c0_130 = arith.constant 0 : index
    %c0_131 = arith.constant 0 : index
    %279 = vector.load %arg18[%c0_130, %c0_131] : memref<128x128xf32, #tpu.memory_space<vmem>>, vector<128x128xf32>
    %cst_132 = arith.constant dense<0.000000e+00> : vector<16x128xf32>
    %280 = tpu.matmul %278, %279, %cst_132 {dimension_numbers = #tpu.dot_dimension_numbers<[1], [0], [0], [1], [0, 0, 1, 1], [], []>} : vector<16x128xf32>, vector<128x128xf32>, vector<16x128xf32> -> vector<16x128xf32>
    %c0_133 = arith.constant 0 : index
    %c0_134 = arith.constant 0 : index
    %281 = vector.load %arg19[%c0_133, %c0_134] : memref<1x128xf32, #tpu.memory_space<vmem>>, vector<1x128xf32>
    %282 = vector.broadcast %281 : vector<1x128xf32> to vector<16x128xf32>
    %283 = arith.addf %280, %282 : vector<16x128xf32>
    %284 = arith.negf %283 : vector<16x128xf32>
    %285 = math.exp %284 : vector<16x128xf32>
    %cst_135 = arith.constant 1.000000e+00 : f32
    %286 = vector.broadcast %cst_135 : f32 to vector<16x128xf32>
    %287 = arith.addf %286, %285 : vector<16x128xf32>
    %288 = arith.divf %286, %287 : vector<16x128xf32>
    %289 = arith.mulf %288, %157 : vector<16x128xf32>
    %290 = arith.addf %278, %289 : vector<16x128xf32>
    %291 = vector.shape_cast %290 : vector<16x128xf32> to vector<2x8x128xf32>
    %c0_136 = arith.constant 0 : index
    %c0_137 = arith.constant 0 : index
    %c0_138 = arith.constant 0 : index
    %292 = vector.load %arg20[%c0_136, %c0_137, %c0_138] : memref<2x8x128xf32, #tpu.memory_space<vmem>>, vector<2x8x128xf32>
    tpu.vector_store %arg20[%c0_136, %c0_137, %c0_138], %291 {strides = array<i32>} : memref<2x8x128xf32, #tpu.memory_space<vmem>>, vector<2x8x128xf32>,
    return
  }
  func.func @transform_0(%arg0: i32) -> (i32, i32, i32) {
    %c0_i32 = arith.constant 0 : i32
    %c0_i32_0 = arith.constant 0 : i32
    %c0_i32_1 = arith.constant 0 : i32
    return %arg0, %c0_i32, %c0_i32_0 : i32, i32, i32
  }
  func.func @transform_1(%arg0: i32) -> (i32, i32, i32) {
    %c0_i32 = arith.constant 0 : i32
    %c0_i32_0 = arith.constant 0 : i32
    %c0_i32_1 = arith.constant 0 : i32
    return %arg0, %c0_i32, %c0_i32_0 : i32, i32, i32
  }
  func.func @transform_2(%arg0: i32) -> (i32, i32) {
    %c0_i32 = arith.constant 0 : i32
    %c0_i32_0 = arith.constant 0 : i32
    %c0_i32_1 = arith.constant 0 : i32
    return %c0_i32, %c0_i32_0 : i32, i32
  }
  func.func @transform_3(%arg0: i32) -> (i32, i32) {
    %c0_i32 = arith.constant 0 : i32
    %c0_i32_0 = arith.constant 0 : i32
    %c0_i32_1 = arith.constant 0 : i32
    return %c0_i32, %c0_i32_0 : i32, i32
  }
  func.func @transform_4(%arg0: i32) -> (i32, i32) {
    %c0_i32 = arith.constant 0 : i32
    %c0_i32_0 = arith.constant 0 : i32
    %c0_i32_1 = arith.constant 0 : i32
    return %c0_i32, %c0_i32_0 : i32, i32
  }
  func.func @transform_5(%arg0: i32) -> (i32, i32) {
    %c0_i32 = arith.constant 0 : i32
    %c0_i32_0 = arith.constant 0 : i32
    %c0_i32_1 = arith.constant 0 : i32
    return %c0_i32, %c0_i32_0 : i32, i32
  }
  func.func @transform_6(%arg0: i32) -> (i32, i32) {
    %c0_i32 = arith.constant 0 : i32
    %c0_i32_0 = arith.constant 0 : i32
    %c0_i32_1 = arith.constant 0 : i32
    return %c0_i32, %c0_i32_0 : i32, i32
  }
  func.func @transform_7(%arg0: i32) -> (i32, i32) {
    %c0_i32 = arith.constant 0 : i32
    %c0_i32_0 = arith.constant 0 : i32
    %c0_i32_1 = arith.constant 0 : i32
    return %c0_i32, %c0_i32_0 : i32, i32
  }
  func.func @transform_8(%arg0: i32) -> (i32, i32) {
    %c0_i32 = arith.constant 0 : i32
    %c0_i32_0 = arith.constant 0 : i32
    %c0_i32_1 = arith.constant 0 : i32
    return %c0_i32, %c0_i32_0 : i32, i32
  }
  func.func @transform_9(%arg0: i32) -> (i32, i32) {
    %c0_i32 = arith.constant 0 : i32
    %c0_i32_0 = arith.constant 0 : i32
    %c0_i32_1 = arith.constant 0 : i32
    return %c0_i32, %c0_i32_0 : i32, i32
  }
  func.func @transform_10(%arg0: i32) -> (i32, i32) {
    %c0_i32 = arith.constant 0 : i32
    %c0_i32_0 = arith.constant 0 : i32
    %c0_i32_1 = arith.constant 0 : i32
    return %c0_i32, %c0_i32_0 : i32, i32
  }
  func.func @transform_11(%arg0: i32) -> (i32, i32) {
    %c0_i32 = arith.constant 0 : i32
    %c0_i32_0 = arith.constant 0 : i32
    %c0_i32_1 = arith.constant 0 : i32
    return %c0_i32, %c0_i32_0 : i32, i32
  }
  func.func @transform_12(%arg0: i32) -> (i32, i32) {
    %c0_i32 = arith.constant 0 : i32
    %c0_i32_0 = arith.constant 0 : i32
    %c0_i32_1 = arith.constant 0 : i32
    return %c0_i32, %c0_i32_0 : i32, i32
  }
  func.func @transform_13(%arg0: i32) -> (i32, i32) {
    %c0_i32 = arith.constant 0 : i32
    %c0_i32_0 = arith.constant 0 : i32
    %c0_i32_1 = arith.constant 0 : i32
    return %c0_i32, %c0_i32_0 : i32, i32
  }
  func.func @transform_14(%arg0: i32) -> (i32, i32) {
    %c0_i32 = arith.constant 0 : i32
    %c0_i32_0 = arith.constant 0 : i32
    %c0_i32_1 = arith.constant 0 : i32
    return %c0_i32, %c0_i32_0 : i32, i32
  }
  func.func @transform_15(%arg0: i32) -> (i32, i32) {
    %c0_i32 = arith.constant 0 : i32
    %c0_i32_0 = arith.constant 0 : i32
    %c0_i32_1 = arith.constant 0 : i32
    return %c0_i32, %c0_i32_0 : i32, i32
  }
  func.func @transform_16(%arg0: i32) -> (i32, i32) {
    %c0_i32 = arith.constant 0 : i32
    %c0_i32_0 = arith.constant 0 : i32
    %c0_i32_1 = arith.constant 0 : i32
    return %c0_i32, %c0_i32_0 : i32, i32
  }
  func.func @transform_17(%arg0: i32) -> (i32, i32) {
    %c0_i32 = arith.constant 0 : i32
    %c0_i32_0 = arith.constant 0 : i32
    %c0_i32_1 = arith.constant 0 : i32
    return %c0_i32, %c0_i32_0 : i32, i32
  }
  func.func @transform_18(%arg0: i32) -> (i32, i32) {
    %c0_i32 = arith.constant 0 : i32
    %c0_i32_0 = arith.constant 0 : i32
    %c0_i32_1 = arith.constant 0 : i32
    return %c0_i32, %c0_i32_0 : i32, i32
  }
  func.func @transform_19(%arg0: i32) -> (i32, i32, i32) {
    %c0_i32 = arith.constant 0 : i32
    %c0_i32_0 = arith.constant 0 : i32
    %c0_i32_1 = arith.constant 0 : i32
    return %arg0, %c0_i32, %c0_i32_0 : i32, i32, i32
  }
  func.func @transform_20(%arg0: i32) -> (i32, i32, i32, i32) {
    %c0_i32 = arith.constant 0 : i32
    %c0_i32_0 = arith.constant 0 : i32
    %c0_i32_1 = arith.constant 0 : i32
    %c0_i32_2 = arith.constant 0 : i32
    return %arg0, %c0_i32, %c0_i32_0, %c0_i32_1 : i32, i32, i32, i32
  }
}

</mosaic_0001>

<llo_original>
// kernel: tpu_custom_call.1
$region0: #{tpu_custom_call.1}
  #allocation0 [shape = 'u32[]', space=smem, size = 0x4, offset = 0x4, fixed_abs, tag = 'smem constant byte address 0x4 - core index']
  #allocation1 [shape = 'u32[144,128]{1,0:T(1,128)}', space=vmem, size = 0x12000, scoped, tag = 'internal scratch']
  #allocation2 [shape = 'f32[16,128]{1,0:T(8,128)}', space=vmem, size = 0x2000, scoped, tag = 'scratch operand']
  %s0 = inlined_call_operand.hbm [shape: f32[2,8,128], index: 0, kind: input, shape index: {}]
  %s1 = inlined_call_operand.hbm [shape: f32[2,1,8], index: 1, kind: input, shape index: {}]
  %s2 = inlined_call_operand.vmem [shape: f32[1,128], index: 2, kind: input, shape index: {}]
  %s3 = inlined_call_operand.hbm [shape: f32[1,128], index: 3, kind: input, shape index: {}]
  %s4 = inlined_call_operand.hbm [shape: f32[128,384], index: 4, kind: input, shape index: {}]
  %s5 = inlined_call_operand.hbm [shape: f32[128,128], index: 5, kind: input, shape index: {}]
  %s6 = inlined_call_operand.vmem [shape: f32[1,128], index: 6, kind: input, shape index: {}]
  %s7 = inlined_call_operand.hbm [shape: f32[128,128], index: 7, kind: input, shape index: {}]
  %s8 = inlined_call_operand.vmem [shape: f32[1,128], index: 8, kind: input, shape index: {}]
  %s9 = inlined_call_operand.vmem [shape: f32[1,128], index: 9, kind: input, shape index: {}]
  %s10 = inlined_call_operand.vmem [shape: f32[1,128], index: 10, kind: input, shape index: {}]
  %s11 = inlined_call_operand.hbm [shape: f32[128,512], index: 11, kind: input, shape index: {}]
  %s12 = inlined_call_operand.vmem [shape: f32[1,512], index: 12, kind: input, shape index: {}]
  %s13 = inlined_call_operand.hbm [shape: f32[512,256], index: 13, kind: input, shape index: {}]
  %s14 = inlined_call_operand.vmem [shape: f32[1,256], index: 14, kind: input, shape index: {}]
  %s15 = inlined_call_operand.hbm [shape: f32[256,128], index: 15, kind: input, shape index: {}]
  %s16 = inlined_call_operand.vmem [shape: f32[1,128], index: 16, kind: input, shape index: {}]
  %s17 = inlined_call_operand.hbm [shape: f32[128,128], index: 17, kind: input, shape index: {}]
  %s18 = inlined_call_operand.vmem [shape: f32[1,128], index: 18, kind: input, shape index: {}]
  %s19 = inlined_call_operand.hbm [shape: f32[2,8,128], index: 19, kind: output, shape index: {0}]
  %s20 = inlined_call_operand.hbm [shape: f32[2,4,8,8], index: 20, kind: output, shape index: {1}]
  %21 = xla_tuple %s19, %s20
  %s22 = sld [smem:[#allocation0]]
  $region134: #{tpu_custom_call.1} parent=0
    _
  %s24 = ssub.s32 1, %s22
  %s25 = scalar_select 0, %s24, %s22
  $region1: #{tpu_custom_call.1} parent=0
    #allocation3 [shape = 'u8[8192]{0}', space=vmem, size = 0x2000, scoped, tag = 'input window, operand 0, single buffered']
    #allocation4 [shape = 's32[1]{0}', space=sflag, size = 0x4, scoped, tag = 'scoped memory for tpu_custom_call.1']
    #allocation5 [shape = 's32[1]{0}', space=sflag, size = 0x4, scoped, tag = 'scoped memory for tpu_custom_call.1']
    #allocation6 [shape = 'u8[1024]{0}', space=vmem, size = 0x400, scoped, tag = 'input window, operand 1, single buffered']
    #allocation7 [shape = 's32[1]{0}', space=sflag, size = 0x4, scoped, tag = 'scoped memory for tpu_custom_call.1']
    #allocation8 [shape = 'u8[512]{0}', space=vmem, size = 0x400, scoped, tag = 'input window, operand 3, single buffered']
    #allocation9 [shape = 'u8[196608]{0}', space=vmem, size = 0x30000, scoped, tag = 'input window, operand 4, single buffered']
    #allocation10 [shape = 's32[1]{0}', space=sflag, size = 0x4, scoped, tag = 'scoped memory for tpu_custom_call.1']
    #allocation11 [shape = 'u8[65536]{0}', space=vmem, size = 0x10000, scoped, tag = 'input window, operand 5, single buffered']
    #allocation12 [shape = 'u8[65536]{0}', space=vmem, size = 0x10000, scoped, tag = 'input window, operand 7, single buffered']
    #allocation13 [shape = 's32[1]{0}', space=sflag, size = 0x4, scoped, tag = 'scoped memory for tpu_custom_call.1']
    #allocation14 [shape = 'u8[262144]{0}', space=vmem, size = 0x40000, scoped, tag = 'input window, operand 11, single buffered']
    #allocation15 [shape = 'u8[524288]{0}', space=vmem, size = 0x80000, scoped, tag = 'input window, operand 13, single buffered']
    #allocation16 [shape = 's32[1]{0}', space=sflag, size = 0x4, scoped, tag = 'scoped memory for tpu_custom_call.1']
    #allocation17 [shape = 'u8[131072]{0}', space=vmem, size = 0x20000, scoped, tag = 'input window, operand 15, single buffered']
    #allocation18 [shape = 'u8[65536]{0}', space=vmem, size = 0x10000, scoped, tag = 'input window, operand 17, single buffered']
    #allocation19 [shape = 's32[1]{0}', space=sflag, size = 0x4, scoped, tag = 'scoped memory for tpu_custom_call.1']
    #allocation20 [shape = 'u8[8192]{0}', space=vmem, size = 0x2000, scoped, tag = 'output window, operand 0, single buffered']
    #allocation21 [shape = 'u8[32768]{0}', space=vmem, size = 0x8000, scoped, tag = 'output window, operand 1, single buffered']
    #allocation22 [shape = 's32[1]{0}', space=sflag, size = 0x4, scoped, tag = 'scoped memory for tpu_custom_call.1']
    %26 = vsyncpa [#allocation4], 0
    %27 = vsyncpa [#allocation7], 0
    %28 = vsyncpa [#allocation10], 0
    %29 = vsyncpa [#allocation13], 0
    %30 = vsyncpa [#allocation16], 0
    %31 = vsyncpa [#allocation19], 0
    %32 = vsyncpa [#allocation5], 0
    %33 = vsyncpa [#allocation22], 0
    // Predicated region
    $region2: #{tpu_custom_call.1} parent=1 // pred_check
      _
    $region3: #{tpu_custom_call.1} parent=1 // pred_check_branch
      %35 = sbr.rel (0) target = $region5
    $region4: #{tpu_custom_call.1} parent=1 // pred_region
      %s37 = ssub.s32 256, 256
      %38 = vsyncadd [#allocation4], %s37
      %s39 = sshll.u32 [#allocation3], 4
      %s40 = int_to_ptr.vmem [resolvable:$true] %s39
      %45 = dma.hbm_to_vmem [thread:$0]  %s0, 256, %s40, [#allocation4], 128, 128, 8
    $region5: #{tpu_custom_call.1} parent=1 // pred_fallthru
      _
    // Predicated region
    $region6: #{tpu_custom_call.1} parent=1 // pred_check
      _
    $region7: #{tpu_custom_call.1} parent=1 // pred_check_branch
      %47 = sbr.rel (0) target = $region9
    $region8: #{tpu_custom_call.1} parent=1 // pred_region
      %s49 = ssub.s32 32, 32
      %50 = vsyncadd [#allocation7], %s49
      %s51 = sshll.u32 [#allocation6], 4
      %s52 = int_to_ptr.vmem [resolvable:$true] %s51
      %57 = dma.hbm_to_vmem [thread:$0]  %s1, 32, %s52, [#allocation7], 16, 16, 1
    $region9: #{tpu_custom_call.1} parent=1 // pred_fallthru
      _
    // Predicated region
    $region10: #{tpu_custom_call.1} parent=1 // pred_check
      _
    $region11: #{tpu_custom_call.1} parent=1 // pred_check_branch
      %59 = sbr.rel (0) target = $region13
    $region12: #{tpu_custom_call.1} parent=1 // pred_region
      _
    $region13: #{tpu_custom_call.1} parent=1 // pred_fallthru
      _
    // Predicated region
    $region14: #{tpu_custom_call.1} parent=1 // pred_check
      _
    $region15: #{tpu_custom_call.1} parent=1 // pred_check_branch
      %61 = sbr.rel (0) target = $region17
    $region16: #{tpu_custom_call.1} parent=1 // pred_region
      %s63 = ssub.s32 16, 16
      %64 = vsyncadd [#allocation7], %s63
      %s66 = sshll.u32 [#allocation8], 4
      %s67 = int_to_ptr.vmem [resolvable:$true] %s66
      %69 = dma.hbm_to_vmem [thread:$0]  %s3, 16, %s67, [#allocation7]
    $region17: #{tpu_custom_call.1} parent=1 // pred_fallthru
      _
    // Predicated region
    $region18: #{tpu_custom_call.1} parent=1 // pred_check
      _
    $region19: #{tpu_custom_call.1} parent=1 // pred_check_branch
      %71 = sbr.rel (0) target = $region21
    $region20: #{tpu_custom_call.1} parent=1 // pred_region
      %s73 = ssub.s32 6144, 6144
      %74 = vsyncadd [#allocation10], %s73
      %s75 = sshll.u32 [#allocation9], 4
      %s76 = int_to_ptr.vmem [resolvable:$true] %s75
      %81 = dma.hbm_to_vmem [thread:$0]  %s4, 6144, %s76, [#allocation10], 384, 384, 24
    $region21: #{tpu_custom_call.1} parent=1 // pred_fallthru
      _
    // Predicated region
    $region22: #{tpu_custom_call.1} parent=1 // pred_check
      _
    $region23: #{tpu_custom_call.1} parent=1 // pred_check_branch
      %83 = sbr.rel (0) target = $region25
    $region24: #{tpu_custom_call.1} parent=1 // pred_region
      %s85 = ssub.s32 2048, 2048
      %86 = vsyncadd [#allocation10], %s85
      %s87 = sshll.u32 [#allocation11], 4
      %s88 = int_to_ptr.vmem [resolvable:$true] %s87
      %93 = dma.hbm_to_vmem [thread:$0]  %s5, 2048, %s88, [#allocation10], 128, 128, 8
    $region25: #{tpu_custom_call.1} parent=1 // pred_fallthru
      _
    // Predicated region
    $region26: #{tpu_custom_call.1} parent=1 // pred_check
      _
    $region27: #{tpu_custom_call.1} parent=1 // pred_check_branch
      %95 = sbr.rel (0) target = $region29
    $region28: #{tpu_custom_call.1} parent=1 // pred_region
      _
    $region29: #{tpu_custom_call.1} parent=1 // pred_fallthru
      _
    // Predicated region
    $region30: #{tpu_custom_call.1} parent=1 // pred_check
      _
    $region31: #{tpu_custom_call.1} parent=1 // pred_check_branch
      %97 = sbr.rel (0) target = $region33
    $region32: #{tpu_custom_call.1} parent=1 // pred_region
      %s99 = ssub.s32 2048, 2048
      %100 = vsyncadd [#allocation13], %s99
      %s101 = sshll.u32 [#allocation12], 4
      %s102 = int_to_ptr.vmem [resolvable:$true] %s101
      %107 = dma.hbm_to_vmem [thread:$0]  %s7, 2048, %s102, [#allocation13], 128, 128, 8
    $region33: #{tpu_custom_call.1} parent=1 // pred_fallthru
      _
    // Predicated region
    $region34: #{tpu_custom_call.1} parent=1 // pred_check
      _
    $region35: #{tpu_custom_call.1} parent=1 // pred_check_branch
      %109 = sbr.rel (0) target = $region37
    $region36: #{tpu_custom_call.1} parent=1 // pred_region
      _
    $region37: #{tpu_custom_call.1} parent=1 // pred_fallthru
      _
    // Predicated region
    $region38: #{tpu_custom_call.1} parent=1 // pred_check
      _
    $region39: #{tpu_custom_call.1} parent=1 // pred_check_branch
      %111 = sbr.rel (0) target = $region41
    $region40: #{tpu_custom_call.1} parent=1 // pred_region
      _
    $region41: #{tpu_custom_call.1} parent=1 // pred_fallthru
      _
    // Predicated region
    $region42: #{tpu_custom_call.1} parent=1 // pred_check
      _
    $region43: #{tpu_custom_call.1} parent=1 // pred_check_branch
      %113 = sbr.rel (0) target = $region45
    $region44: #{tpu_custom_call.1} parent=1 // pred_region
      _
    $region45: #{tpu_custom_call.1} parent=1 // pred_fallthru
      _
    // Predicated region
    $region46: #{tpu_custom_call.1} parent=1 // pred_check
      _
    $region47: #{tpu_custom_call.1} parent=1 // pred_check_branch
      %115 = sbr.rel (0) target = $region49
    $region48: #{tpu_custom_call.1} parent=1 // pred_region
      %s117 = ssub.s32 8192, 8192
      %118 = vsyncadd [#allocation13], %s117
      %s119 = sshll.u32 [#allocation14], 4
      %s120 = int_to_ptr.vmem [resolvable:$true] %s119
      %125 = dma.hbm_to_vmem [thread:$0]  %s11, 8192, %s120, [#allocation13], 512, 512, 32
    $region49: #{tpu_custom_call.1} parent=1 // pred_fallthru
      _
    // Predicated region
    $region50: #{tpu_custom_call.1} parent=1 // pred_check
      _
    $region51: #{tpu_custom_call.1} parent=1 // pred_check_branch
      %127 = sbr.rel (0) target = $region53
    $region52: #{tpu_custom_call.1} parent=1 // pred_region
      _
    $region53: #{tpu_custom_call.1} parent=1 // pred_fallthru
      _
    // Predicated region
    $region54: #{tpu_custom_call.1} parent=1 // pred_check
      _
    $region55: #{tpu_custom_call.1} parent=1 // pred_check_branch
      %129 = sbr.rel (0) target = $region57
    $region56: #{tpu_custom_call.1} parent=1 // pred_region
      %s131 = ssub.s32 16384, 16384
      %132 = vsyncadd [#allocation16], %s131
      %s133 = sshll.u32 [#allocation15], 4
      %s134 = int_to_ptr.vmem [resolvable:$true] %s133
      %139 = dma.hbm_to_vmem [thread:$0]  %s13, 16384, %s134, [#allocation16], 256, 256, 16
    $region57: #{tpu_custom_call.1} parent=1 // pred_fallthru
      _
    // Predicated region
    $region58: #{tpu_custom_call.1} parent=1 // pred_check
      _
    $region59: #{tpu_custom_call.1} parent=1 // pred_check_branch
      %141 = sbr.rel (0) target = $region61
    $region60: #{tpu_custom_call.1} parent=1 // pred_region
      _
    $region61: #{tpu_custom_call.1} parent=1 // pred_fallthru
      _
    // Predicated region
    $region62: #{tpu_custom_call.1} parent=1 // pred_check
      _
    $region63: #{tpu_custom_call.1} parent=1 // pred_check_branch
      %143 = sbr.rel (0) target = $region65
    $region64: #{tpu_custom_call.1} parent=1 // pred_region
      %s145 = ssub.s32 4096, 4096
      %146 = vsyncadd [#allocation16], %s145
      %s147 = sshll.u32 [#allocation17], 4
      %s148 = int_to_ptr.vmem [resolvable:$true] %s147
      %153 = dma.hbm_to_vmem [thread:$0]  %s15, 4096, %s148, [#allocation16], 128, 128, 8
    $region65: #{tpu_custom_call.1} parent=1 // pred_fallthru
      _
    // Predicated region
    $region66: #{tpu_custom_call.1} parent=1 // pred_check
      _
    $region67: #{tpu_custom_call.1} parent=1 // pred_check_branch
      %155 = sbr.rel (0) target = $region69
    $region68: #{tpu_custom_call.1} parent=1 // pred_region
      _
    $region69: #{tpu_custom_call.1} parent=1 // pred_fallthru
      _
    // Predicated region
    $region70: #{tpu_custom_call.1} parent=1 // pred_check
      _
    $region71: #{tpu_custom_call.1} parent=1 // pred_check_branch
      %157 = sbr.rel (0) target = $region73
    $region72: #{tpu_custom_call.1} parent=1 // pred_region
      %s159 = ssub.s32 2048, 2048
      %160 = vsyncadd [#allocation19], %s159
      %s161 = sshll.u32 [#allocation18], 4
      %s162 = int_to_ptr.vmem [resolvable:$true] %s161
      %167 = dma.hbm_to_vmem [thread:$0]  %s17, 2048, %s162, [#allocation19], 128, 128, 8
    $region73: #{tpu_custom_call.1} parent=1 // pred_fallthru
      _
    // Predicated region
    $region74: #{tpu_custom_call.1} parent=1 // pred_check
      _
    $region75: #{tpu_custom_call.1} parent=1 // pred_check_branch
      %169 = sbr.rel (0) target = $region77
    $region76: #{tpu_custom_call.1} parent=1 // pred_region
      _
    $region77: #{tpu_custom_call.1} parent=1 // pred_fallthru
      _
    // Predicated region
    $region78: #{tpu_custom_call.1} parent=1 // pred_check
      _
    $region79: #{tpu_custom_call.1} parent=1 // pred_check_branch
      %171 = sbr.rel (0) target = $region81
    $region80: #{tpu_custom_call.1} parent=1 // pred_region
      %172 = dma.done [#allocation4], 256
    $region81: #{tpu_custom_call.1} parent=1 // pred_fallthru
      _
    // Predicated region
    $region82: #{tpu_custom_call.1} parent=1 // pred_check
      _
    $region83: #{tpu_custom_call.1} parent=1 // pred_check_branch
      %174 = sbr.rel (0) target = $region85
    $region84: #{tpu_custom_call.1} parent=1 // pred_region
      %175 = dma.done [#allocation7], 32
    $region85: #{tpu_custom_call.1} parent=1 // pred_fallthru
      _
    // Predicated region
    $region86: #{tpu_custom_call.1} parent=1 // pred_check
      _
    $region87: #{tpu_custom_call.1} parent=1 // pred_check_branch
      %177 = sbr.rel (0) target = $region89
    $region88: #{tpu_custom_call.1} parent=1 // pred_region
      %178 = dma.done [#allocation7], 16
    $region89: #{tpu_custom_call.1} parent=1 // pred_fallthru
      _
    // Predicated region
    $region90: #{tpu_custom_call.1} parent=1 // pred_check
      _
    $region91: #{tpu_custom_call.1} parent=1 // pred_check_branch
      %180 = sbr.rel (0) target = $region93
    $region92: #{tpu_custom_call.1} parent=1 // pred_region
      %181 = dma.done [#allocation10], 6144
    $region93: #{tpu_custom_call.1} parent=1 // pred_fallthru
      _
    // Predicated region
    $region94: #{tpu_custom_call.1} parent=1 // pred_check
      _
    $region95: #{tpu_custom_call.1} parent=1 // pred_check_branch
      %183 = sbr.rel (0) target = $region97
    $region96: #{tpu_custom_call.1} parent=1 // pred_region
      %184 = dma.done [#allocation10], 2048
    $region97: #{tpu_custom_call.1} parent=1 // pred_fallthru
      _
    // Predicated region
    $region98: #{tpu_custom_call.1} parent=1 // pred_check
      _
    $region99: #{tpu_custom_call.1} parent=1 // pred_check_branch
      %186 = sbr.rel (0) target = $region101
    $region100: #{tpu_custom_call.1} parent=1 // pred_region
      %187 = dma.done [#allocation13], 2048
    $region101: #{tpu_custom_call.1} parent=1 // pred_fallthru
      _
    // Predicated region
    $region102: #{tpu_custom_call.1} parent=1 // pred_check
      _
    $region103: #{tpu_custom_call.1} parent=1 // pred_check_branch
      %189 = sbr.rel (0) target = $region105
    $region104: #{tpu_custom_call.1} parent=1 // pred_region
      %190 = dma.done [#allocation13], 8192
    $region105: #{tpu_custom_call.1} parent=1 // pred_fallthru
      _
    // Predicated region
    $region106: #{tpu_custom_call.1} parent=1 // pred_check
      _
    $region107: #{tpu_custom_call.1} parent=1 // pred_check_branch
      %192 = sbr.rel (0) target = $region109
    $region108: #{tpu_custom_call.1} parent=1 // pred_region
      %193 = dma.done [#allocation16], 16384
    $region109: #{tpu_custom_call.1} parent=1 // pred_fallthru
      _
    // Predicated region
    $region110: #{tpu_custom_call.1} parent=1 // pred_check
      _
    $region111: #{tpu_custom_call.1} parent=1 // pred_check_branch
      %195 = sbr.rel (0) target = $region113
    $region112: #{tpu_custom_call.1} parent=1 // pred_region
      %196 = dma.done [#allocation16], 4096
    $region113: #{tpu_custom_call.1} parent=1 // pred_fallthru
      _
    // Predicated region
    $region114: #{tpu_custom_call.1} parent=1 // pred_check
      _
    $region115: #{tpu_custom_call.1} parent=1 // pred_check_branch
      %198 = sbr.rel (0) target = $region117
    $region116: #{tpu_custom_call.1} parent=1 // pred_region
      %199 = dma.done [#allocation19], 2048
    $region117: #{tpu_custom_call.1} parent=1 // pred_fallthru
      _
    %v200 = vld [vmem:[#allocation3] sm:$0xff]
    %v201 = vld [vmem:[#allocation3 + $0x8] sm:$0xff]
    %v202 = vld [vmem:[%s2] sm:$0x1]
    %v203 = vld [vmem:[#allocation8] sm:$0x1]
    %204 = vadd.xlane.f32.xlu0 %v200
    %v205 = vpop.xlane.xlu0 %204
    %206 = vadd.xlane.f32.xlu0 %v201
    %v207 = vpop.xlane.xlu0 %206
    %v208 = vrcp.pop 128.0
    %v209 = vmul.f32 %v205, %v208
    %v210 = vmul.f32 %v207, %v208
    %v211 = vsub.f32 %v200, %v209
    %v212 = vsub.f32 %v201, %v210
    %v213 = vmul.f32 %v211, %v211
    %v214 = vmul.f32 %v212, %v212
    %215 = vadd.xlane.f32.xlu0 %v213
    %v216 = vpop.xlane.xlu0 %215
    %217 = vadd.xlane.f32.xlu0 %v214
    %v218 = vpop.xlane.xlu0 %217
    %v219 = vmul.f32 %v216, %v208
    %v220 = vmul.f32 %v218, %v208
    %v221 = vadd.f32 %v219, 1e-05
    %v222 = vadd.f32 %v220, 1e-05
    %v223 = vrsqrt.pop %v221
    %v224 = vrsqrt.pop %v222
    %v225 = vmul.f32 %v211, %v223
    %v226 = vmul.f32 %v212, %v224
    %v228 = vlaneseq
    %v229 = vshrl.u32 %v228, 7
    %v230 = vsub.s32 0, %v229
    %v231 = vrot.slane %v202, %v230
    %v233 = vmul.f32 %v225, %v231
    %v234 = vmul.f32 %v226, %v231
    %v236 = vlaneseq
    %v237 = vshrl.u32 %v236, 7
    %v238 = vsub.s32 0, %v237
    %v239 = vrot.slane %v203, %v238
    %v241 = vadd.f32 %v233, %v239
    %v242 = vadd.f32 %v234, %v239
    %v243 = vld [vmem:[#allocation9] sm:$0xff]
    %v244 = vld [vmem:[#allocation9 + $0x8] sm:$0xff]
    %v245 = vld [vmem:[#allocation9 + $0x10] sm:$0xff]
    %v246 = vld [vmem:[#allocation9 + $0x18] sm:$0xff]
    %v247 = vld [vmem:[#allocation9 + $0x20] sm:$0xff]
    %v248 = vld [vmem:[#allocation9 + $0x28] sm:$0xff]
    %v249 = vld [vmem:[#allocation9 + $0x30] sm:$0xff]
    %v250 = vld [vmem:[#allocation9 + $0x38] sm:$0xff]
    %v251 = vld [vmem:[#allocation9 + $0x40] sm:$0xff]
    %v252 = vld [vmem:[#allocation9 + $0x48] sm:$0xff]
    %v253 = vld [vmem:[#allocation9 + $0x50] sm:$0xff]
    %v254 = vld [vmem:[#allocation9 + $0x58] sm:$0xff]
    %v255 = vld [vmem:[#allocation9 + $0x60] sm:$0xff]
    %v256 = vld [vmem:[#allocation9 + $0x68] sm:$0xff]
    %v257 = vld [vmem:[#allocation9 + $0x70] sm:$0xff]
    %v258 = vld [vmem:[#allocation9 + $0x78] sm:$0xff]
    %v259 = vld [vmem:[#allocation9 + $0x80] sm:$0xff]
    %v260 = vld [vmem:[#allocation9 + $0x88] sm:$0xff]
    %v261 = vld [vmem:[#allocation9 + $0x90] sm:$0xff]
    %v262 = vld [vmem:[#allocation9 + $0x98] sm:$0xff]
    %v263 = vld [vmem:[#allocation9 + $0xa0] sm:$0xff]
    %v264 = vld [vmem:[#allocation9 + $0xa8] sm:$0xff]
    %v265 = vld [vmem:[#allocation9 + $0xb0] sm:$0xff]
    %v266 = vld [vmem:[#allocation9 + $0xb8] sm:$0xff]
    %v267 = vld [vmem:[#allocation9 + $0xc0] sm:$0xff]
    %v268 = vld [vmem:[#allocation9 + $0xc8] sm:$0xff]
    %v269 = vld [vmem:[#allocation9 + $0xd0] sm:$0xff]
    %v270 = vld [vmem:[#allocation9 + $0xd8] sm:$0xff]
    %v271 = vld [vmem:[#allocation9 + $0xe0] sm:$0xff]
    %v272 = vld [vmem:[#allocation9 + $0xe8] sm:$0xff]
    %v273 = vld [vmem:[#allocation9 + $0xf0] sm:$0xff]
    %v274 = vld [vmem:[#allocation9 + $0xf8] sm:$0xff]
    %v275 = vld [vmem:[#allocation9 + $0x100] sm:$0xff]
    %v276 = vld [vmem:[#allocation9 + $0x108] sm:$0xff]
    %v277 = vld [vmem:[#allocation9 + $0x110] sm:$0xff]
    %v278 = vld [vmem:[#allocation9 + $0x118] sm:$0xff]
    %v279 = vld [vmem:[#allocation9 + $0x120] sm:$0xff]
    %v280 = vld [vmem:[#allocation9 + $0x128] sm:$0xff]
    %v281 = vld [vmem:[#allocation9 + $0x130] sm:$0xff]
    %v282 = vld [vmem:[#allocation9 + $0x138] sm:$0xff]
    %v283 = vld [vmem:[#allocation9 + $0x140] sm:$0xff]
    %v284 = vld [vmem:[#allocation9 + $0x148] sm:$0xff]
    %v285 = vld [vmem:[#allocation9 + $0x150] sm:$0xff]
    %v286 = vld [vmem:[#allocation9 + $0x158] sm:$0xff]
    %v287 = vld [vmem:[#allocation9 + $0x160] sm:$0xff]
    %v288 = vld [vmem:[#allocation9 + $0x168] sm:$0xff]
    %v289 = vld [vmem:[#allocation9 + $0x170] sm:$0xff]
    %v290 = vld [vmem:[#allocation9 + $0x178] sm:$0xff]
    %291 = vmatprep.subr.mxu0 %v289
    %292 = vmatpush1.msra.mxu0 %v288
    %293 = vmatprep.subr.mxu0 %v286
    %294 = vmatpush1.msra.mxu0 %v285
    %295 = vmatprep.subr.mxu0 %v283
    %296 = vmatpush1.msra.mxu0 %v282
    %297 = vmatprep.subr.mxu0 %v280
    %298 = vmatpush1.msra.mxu0 %v279
    %299 = vmatprep.subr.mxu0 %v277
    %300 = vmatpush1.msra.mxu0 %v276
    %301 = vmatprep.subr.mxu0 %v274
    %302 = vmatpush1.msra.mxu0 %v273
    %303 = vmatprep.subr.mxu0 %v271
    %304 = vmatpush1.msra.mxu0 %v270
    %305 = vmatprep.subr.mxu0 %v268
    %306 = vmatpush1.msra.mxu0 %v267
    %307 = vmatprep.subr.mxu0 %v265
    %308 = vmatpush1.msra.mxu0 %v264
    %309 = vmatprep.subr.mxu0 %v262
    %310 = vmatpush1.msra.mxu0 %v261
    %311 = vmatprep.subr.mxu0 %v259
    %312 = vmatpush1.msra.mxu0 %v258
    %313 = vmatprep.subr.mxu0 %v256
    %314 = vmatpush1.msra.mxu0 %v255
    %315 = vmatprep.subr.mxu0 %v253
    %316 = vmatpush1.msra.mxu0 %v252
    %317 = vmatprep.subr.mxu0 %v250
    %318 = vmatpush1.msra.mxu0 %v249
    %319 = vmatprep.subr.mxu0 %v247
    %320 = vmatpush1.msra.mxu0 %v246
    %321 = vmatprep.subr.mxu0 %v244
    %322 = vmatpush1.msra.mxu0 %v243
    %323 = vmatprep.subr.mxu0 0.0
    %324 = vmatpush2.msra.mxu0 0.0
    %325 = vmatprep.subr.mxu0 0.0
    %326 = vmatpush2.msra.mxu0 0.0
    %327 = vmatprep.subr.mxu0 0.0
    %328 = vmatpush2.msra.mxu0 0.0
    %329 = vmatprep.subr.mxu0 0.0
    %330 = vmatpush2.msra.mxu0 0.0
    %331 = vmatprep.subr.mxu0 0.0
    %332 = vmatpush2.msra.mxu0 0.0
    %333 = vmatprep.subr.mxu0 0.0
    %334 = vmatpush2.msra.mxu0 0.0
    %335 = vmatprep.subr.mxu0 0.0
    %336 = vmatpush2.msra.mxu0 0.0
    %337 = vmatprep.subr.mxu0 0.0
    %338 = vmatpush2.msra.mxu0 0.0
    %339 = vmatprep.subr.mxu0 0.0
    %340 = vmatpush2.msra.mxu0 0.0
    %341 = vmatprep.subr.mxu0 0.0
    %342 = vmatpush2.msra.mxu0 0.0
    %343 = vmatprep.subr.mxu0 0.0
    %344 = vmatpush2.msra.mxu0 0.0
    %345 = vmatprep.subr.mxu0 0.0
    %346 = vmatpush2.msra.mxu0 0.0
    %347 = vmatprep.subr.mxu0 0.0
    %348 = vmatpush2.msra.mxu0 0.0
    %349 = vmatprep.subr.mxu0 0.0
    %350 = vmatpush2.msra.mxu0 0.0
    %351 = vmatprep.subr.mxu0 0.0
    %352 = vmatpush2.msra.mxu0 0.0
    %353 = vmatprep.subr.mxu0 0.0
    %354 = vmatpush2.msra.mxu0 0.0
    %355 = vmatprep.mubr.f32.mxu0 0.0
    %356 = vmatmul.mubr.f32.gmra.mxu0 %v241
    %v357 = vpop.f32.mrf.mxu0
    %v358 = vadd.f32 0.0, %v357
    %v359 = vpop.f32.mrf.mxu0
    %v360 = vadd.f32 0.0, %v359
    %361 = vmatprep.mubr.f32.mxu0 0.0
    %362 = vmatmul.mubr.f32.gmra.mxu0 %v242
    %v363 = vpop.f32.mrf.mxu0
    %v364 = vadd.f32 0.0, %v363
    %v365 = vpop.f32.mrf.mxu0
    %v366 = vadd.f32 0.0, %v365
    %367 = vdwg.mxu0
    %368 = vmatprep.subr.mxu0 0.0
    %369 = vmatpush1.msra.mxu0 %v290
    %370 = vmatprep.subr.mxu0 0.0
    %371 = vmatpush1.msra.mxu0 %v287
    %372 = vmatprep.subr.mxu0 0.0
    %373 = vmatpush1.msra.mxu0 %v284
    %374 = vmatprep.subr.mxu0 0.0
    %375 = vmatpush1.msra.mxu0 %v281
    %376 = vmatprep.subr.mxu0 0.0
    %377 = vmatpush1.msra.mxu0 %v278
    %378 = vmatprep.subr.mxu0 0.0
    %379 = vmatpush1.msra.mxu0 %v275
    %380 = vmatprep.subr.mxu0 0.0
    %381 = vmatpush1.msra.mxu0 %v272
    %382 = vmatprep.subr.mxu0 0.0
    %383 = vmatpush1.msra.mxu0 %v269
    %384 = vmatprep.subr.mxu0 0.0
    %385 = vmatpush1.msra.mxu0 %v266
    %386 = vmatprep.subr.mxu0 0.0
    %387 = vmatpush1.msra.mxu0 %v263
    %388 = vmatprep.subr.mxu0 0.0
    %389 = vmatpush1.msra.mxu0 %v260
    %390 = vmatprep.subr.mxu0 0.0
    %391 = vmatpush1.msra.mxu0 %v257
    %392 = vmatprep.subr.mxu0 0.0
    %393 = vmatpush1.msra.mxu0 %v254
    %394 = vmatprep.subr.mxu0 0.0
    %395 = vmatpush1.msra.mxu0 %v251
    %396 = vmatprep.subr.mxu0 0.0
    %397 = vmatpush1.msra.mxu0 %v248
    %398 = vmatprep.subr.mxu0 0.0
    %399 = vmatpush1.msra.mxu0 %v245
    %400 = vmatprep.subr.mxu0 0.0
    %401 = vmatpush2.msra.mxu0 0.0
    %402 = vmatprep.subr.mxu0 0.0
    %403 = vmatpush2.msra.mxu0 0.0
    %404 = vmatprep.subr.mxu0 0.0
    %405 = vmatpush2.msra.mxu0 0.0
    %406 = vmatprep.subr.mxu0 0.0
    %407 = vmatpush2.msra.mxu0 0.0
    %408 = vmatprep.subr.mxu0 0.0
    %409 = vmatpush2.msra.mxu0 0.0
    %410 = vmatprep.subr.mxu0 0.0
    %411 = vmatpush2.msra.mxu0 0.0
    %412 = vmatprep.subr.mxu0 0.0
    %413 = vmatpush2.msra.mxu0 0.0
    %414 = vmatprep.subr.mxu0 0.0
    %415 = vmatpush2.msra.mxu0 0.0
    %416 = vmatprep.subr.mxu0 0.0
    %417 = vmatpush2.msra.mxu0 0.0
    %418 = vmatprep.subr.mxu0 0.0
    %419 = vmatpush2.msra.mxu0 0.0
    %420 = vmatprep.subr.mxu0 0.0
    %421 = vmatpush2.msra.mxu0 0.0
    %422 = vmatprep.subr.mxu0 0.0
    %423 = vmatpush2.msra.mxu0 0.0
    %424 = vmatprep.subr.mxu0 0.0
    %425 = vmatpush2.msra.mxu0 0.0
    %426 = vmatprep.subr.mxu0 0.0
    %427 = vmatpush2.msra.mxu0 0.0
    %428 = vmatprep.subr.mxu0 0.0
    %429 = vmatpush2.msra.mxu0 0.0
    %430 = vmatprep.subr.mxu0 0.0
    %431 = vmatpush2.msra.mxu0 0.0
    %432 = vmatprep.mubr.f32.mxu0 0.0
    %433 = vmatmul.mubr.f32.gmra.mxu0 %v241
    %v434 = vpop.f32.mrf.mxu0
    %v435 = vadd.f32 0.0, %v434
    %v436 = vpop.f32.mrf.mxu0
    %437 = vmatprep.mubr.f32.mxu0 0.0
    %438 = vmatmul.mubr.f32.gmra.mxu0 %v242
    %v439 = vpop.f32.mrf.mxu0
    %v440 = vadd.f32 0.0, %v439
    %v441 = vpop.f32.mrf.mxu0
    %442 = vdwg.mxu0
    %v443 = vlaneseq
    %v444 = vshrl.u32 %v443, 7
    %v445 = vlaneseq
    %v446 = vand.u32 %v445, 127
    %v447 = vld [vmem:[#allocation6] sm:$0x1]
    %v448 = vld [vmem:[#allocation6 + $0x1] sm:$0x1]
    %vm449 = vcmp.ne.f32.partialorder %v447, 0.0
    %vm450 = vcmp.ne.f32.partialorder %v448, 0.0
    %vm451 = vcmp.ge.s32.totalorder %v444, %v446
    %v452 = vsel %vm451, 1, 0
    %vm453 = vcmp.eq.s32.totalorder %v452, 1
    %v454 = vsel %vm449, 1, 0
    %v455 = vsel %vm450, 1, 0
    %v456 = vlaneseq
    %v457 = vshrl.u32 %v456, 7
    %v458 = vsub.s32 0, %v457
    %v459 = vrot.slane %v454, %v458
    %v460 = vlaneseq
    %v461 = vshrl.u32 %v460, 7
    %v462 = vsub.s32 0, %v461
    %v463 = vrot.slane %v455, %v462
    %vm464 = vcmp.eq.s32.totalorder %v459, 1
    %vm465 = vcmp.eq.s32.totalorder %v463, 1
    %vm466 = vmand %vm453, %vm464
    %vm467 = vmand %vm453, %vm465
    %v468 = vsel %vm466, 0.0, -1e+09
    %v469 = vsel %vm467, 0.0, -1e+09
    %vm470 = vcmask 261120
    %v472 = vsel %vm470, %v358, 0
    %v475 = vsel %vm470, %v360, 0
    %477 = vmatprep.subr.mxu0 0.0
    %478 = vmatpush1.xpose.msra.mxu0 0.0
    %479 = vmatprep.subr.mxu0 0.0
    %480 = vmatpush1.xpose.msra.mxu0 0.0
    %481 = vmatprep.subr.mxu0 0.0
    %482 = vmatpush1.xpose.msra.mxu0 0.0
    %483 = vmatprep.subr.mxu0 0.0
    %484 = vmatpush1.xpose.msra.mxu0 0.0
    %485 = vmatprep.subr.mxu0 0.0
    %486 = vmatpush1.xpose.msra.mxu0 0.0
    %487 = vmatprep.subr.mxu0 0.0
    %488 = vmatpush1.xpose.msra.mxu0 0.0
    %489 = vmatprep.subr.mxu0 0.0
    %490 = vmatpush1.xpose.msra.mxu0 0.0
    %491 = vmatprep.subr.mxu0 0.0
    %492 = vmatpush1.xpose.msra.mxu0 0.0
    %493 = vmatprep.subr.mxu0 0.0
    %494 = vmatpush1.xpose.msra.mxu0 0.0
    %495 = vmatprep.subr.mxu0 0.0
    %496 = vmatpush1.xpose.msra.mxu0 0.0
    %497 = vmatprep.subr.mxu0 0.0
    %498 = vmatpush1.xpose.msra.mxu0 0.0
    %499 = vmatprep.subr.mxu0 0.0
    %500 = vmatpush1.xpose.msra.mxu0 0.0
    %501 = vmatprep.subr.mxu0 0.0
    %502 = vmatpush1.xpose.msra.mxu0 0.0
    %503 = vmatprep.subr.mxu0 0.0
    %504 = vmatpush1.xpose.msra.mxu0 0.0
    %505 = vmatprep.subr.mxu0 0.0
    %506 = vmatpush1.xpose.msra.mxu0 0.0
    %507 = vmatprep.subr.mxu0 0.0
    %508 = vmatpush1.xpose.msra.mxu0 %v475
    %509 = vmatprep.subr.mxu0 0.0
    %510 = vmatpush2.xpose.msra.mxu0 0.0
    %511 = vmatprep.subr.mxu0 0.0
    %512 = vmatpush2.xpose.msra.mxu0 0.0
    %513 = vmatprep.subr.mxu0 0.0
    %514 = vmatpush2.xpose.msra.mxu0 0.0
    %515 = vmatprep.subr.mxu0 0.0
    %516 = vmatpush2.xpose.msra.mxu0 0.0
    %517 = vmatprep.subr.mxu0 0.0
    %518 = vmatpush2.xpose.msra.mxu0 0.0
    %519 = vmatprep.subr.mxu0 0.0
    %520 = vmatpush2.xpose.msra.mxu0 0.0
    %521 = vmatprep.subr.mxu0 0.0
    %522 = vmatpush2.xpose.msra.mxu0 0.0
    %523 = vmatprep.subr.mxu0 0.0
    %524 = vmatpush2.xpose.msra.mxu0 0.0
    %525 = vmatprep.subr.mxu0 0.0
    %526 = vmatpush2.xpose.msra.mxu0 0.0
    %527 = vmatprep.subr.mxu0 0.0
    %528 = vmatpush2.xpose.msra.mxu0 0.0
    %529 = vmatprep.subr.mxu0 0.0
    %530 = vmatpush2.xpose.msra.mxu0 0.0
    %531 = vmatprep.subr.mxu0 0.0
    %532 = vmatpush2.xpose.msra.mxu0 0.0
    %533 = vmatprep.subr.mxu0 0.0
    %534 = vmatpush2.xpose.msra.mxu0 0.0
    %535 = vmatprep.subr.mxu0 0.0
    %536 = vmatpush2.xpose.msra.mxu0 0.0
    %537 = vmatprep.subr.mxu0 0.0
    %538 = vmatpush2.xpose.msra.mxu0 0.0
    %539 = vmatprep.subr.mxu0 0.0
    %540 = vmatpush2.xpose.msra.mxu0 0.0
    %541 = vmatprep.mubr.f32.mxu0 0.0
    %542 = vmatmul.mubr.f32.gmra.mxu0 %v472
    %v543 = vpop.f32.mrf.mxu0
    %v544 = vadd.f32 0.0, %v543
    %v545 = vpop.f32.mrf.mxu0
    %546 = vdwg.mxu0
    %v548 = vsel %vm470, %v364, 0
    %v551 = vsel %vm470, %v366, 0
    %553 = vmatprep.subr.mxu0 0.0
    %554 = vmatpush1.xpose.msra.mxu0 0.0
    %555 = vmatprep.subr.mxu0 0.0
    %556 = vmatpush1.xpose.msra.mxu0 0.0
    %557 = vmatprep.subr.mxu0 0.0
    %558 = vmatpush1.xpose.msra.mxu0 0.0
    %559 = vmatprep.subr.mxu0 0.0
    %560 = vmatpush1.xpose.msra.mxu0 0.0
    %561 = vmatprep.subr.mxu0 0.0
    %562 = vmatpush1.xpose.msra.mxu0 0.0
    %563 = vmatprep.subr.mxu0 0.0
    %564 = vmatpush1.xpose.msra.mxu0 0.0
    %565 = vmatprep.subr.mxu0 0.0
    %566 = vmatpush1.xpose.msra.mxu0 0.0
    %567 = vmatprep.subr.mxu0 0.0
    %568 = vmatpush1.xpose.msra.mxu0 0.0
    %569 = vmatprep.subr.mxu0 0.0
    %570 = vmatpush1.xpose.msra.mxu0 0.0
    %571 = vmatprep.subr.mxu0 0.0
    %572 = vmatpush1.xpose.msra.mxu0 0.0
    %573 = vmatprep.subr.mxu0 0.0
    %574 = vmatpush1.xpose.msra.mxu0 0.0
    %575 = vmatprep.subr.mxu0 0.0
    %576 = vmatpush1.xpose.msra.mxu0 0.0
    %577 = vmatprep.subr.mxu0 0.0
    %578 = vmatpush1.xpose.msra.mxu0 0.0
    %579 = vmatprep.subr.mxu0 0.0
    %580 = vmatpush1.xpose.msra.mxu0 0.0
    %581 = vmatprep.subr.mxu0 0.0
    %582 = vmatpush1.xpose.msra.mxu0 0.0
    %583 = vmatprep.subr.mxu0 0.0
    %584 = vmatpush1.xpose.msra.mxu0 %v551
    %585 = vmatprep.subr.mxu0 0.0
    %586 = vmatpush2.xpose.msra.mxu0 0.0
    %587 = vmatprep.subr.mxu0 0.0
    %588 = vmatpush2.xpose.msra.mxu0 0.0
    %589 = vmatprep.subr.mxu0 0.0
    %590 = vmatpush2.xpose.msra.mxu0 0.0
    %591 = vmatprep.subr.mxu0 0.0
    %592 = vmatpush2.xpose.msra.mxu0 0.0
    %593 = vmatprep.subr.mxu0 0.0
    %594 = vmatpush2.xpose.msra.mxu0 0.0
    %595 = vmatprep.subr.mxu0 0.0
    %596 = vmatpush2.xpose.msra.mxu0 0.0
    %597 = vmatprep.subr.mxu0 0.0
    %598 = vmatpush2.xpose.msra.mxu0 0.0
    %599 = vmatprep.subr.mxu0 0.0
    %600 = vmatpush2.xpose.msra.mxu0 0.0
    %601 = vmatprep.subr.mxu0 0.0
    %602 = vmatpush2.xpose.msra.mxu0 0.0
    %603 = vmatprep.subr.mxu0 0.0
    %604 = vmatpush2.xpose.msra.mxu0 0.0
    %605 = vmatprep.subr.mxu0 0.0
    %606 = vmatpush2.xpose.msra.mxu0 0.0
    %607 = vmatprep.subr.mxu0 0.0
    %608 = vmatpush2.xpose.msra.mxu0 0.0
    %609 = vmatprep.subr.mxu0 0.0
    %610 = vmatpush2.xpose.msra.mxu0 0.0
    %611 = vmatprep.subr.mxu0 0.0
    %612 = vmatpush2.xpose.msra.mxu0 0.0
    %613 = vmatprep.subr.mxu0 0.0
    %614 = vmatpush2.xpose.msra.mxu0 0.0
    %615 = vmatprep.subr.mxu0 0.0
    %616 = vmatpush2.xpose.msra.mxu0 0.0
    %617 = vmatprep.mubr.f32.mxu0 0.0
    %618 = vmatmul.mubr.f32.gmra.mxu0 %v548
    %v619 = vpop.f32.mrf.mxu0
    %v620 = vadd.f32 0.0, %v619
    %v621 = vpop.f32.mrf.mxu0
    %622 = vdwg.mxu0
    %v623 = vmul.f32 %v544, 0.17677669
    %v624 = vmul.f32 %v620, 0.17677669
    %v625 = vadd.f32 %v623, %v468
    %v626 = vadd.f32 %v624, %v469
    %vm627 = vcmask 64512
    %v628 = vsel %vm627, %v625, -inf
    %629 = vmax.xlane.f32.xlu0 %v628
    %v630 = vpop.xlane.xlu0 %629
    %v631 = vsel %vm627, %v626, -inf
    %632 = vmax.xlane.f32.xlu0 %v631
    %v633 = vpop.xlane.xlu0 %632
    %v634 = vsub.f32 %v625, %v630
    %v635 = vsub.f32 %v626, %v633
    %v636 = vmul.f32 %v634, 1.442695
    %v637 = vpow.pop %v636
    %v638 = vmul.f32 %v635, 1.442695
    %v639 = vpow.pop %v638
    %v640 = vsel %vm627, %v637, 0.0
    %641 = vadd.xlane.f32.xlu0 %v640
    %v642 = vpop.xlane.xlu0 %641
    %v643 = vsel %vm627, %v639, 0.0
    %644 = vadd.xlane.f32.xlu0 %v643
    %v645 = vpop.xlane.xlu0 %644
    %v646 = vrcp.pop %v642
    %v647 = vmul.f32 1.0, %v646
    %v648 = vrcp.pop %v645
    %v649 = vmul.f32 1.0, %v648
    %v650 = vmul.f32 %v637, %v647
    %v651 = vmul.f32 %v639, %v649
    %652 = vst.msk [vmem:[#allocation21] sm:$0xff] %vm627, %v650
    %653 = vst.msk [vmem:[#allocation21 + $0x20] sm:$0xff] %vm627, %v651
    %v655 = vsel %vm627, %v650, 0
    %657 = vmatprep.subr.mxu0 0.0
    %658 = vmatpush1.msra.mxu0 0.0
    %659 = vmatprep.subr.mxu0 0.0
    %660 = vmatpush1.msra.mxu0 0.0
    %661 = vmatprep.subr.mxu0 0.0
    %662 = vmatpush1.msra.mxu0 0.0
    %663 = vmatprep.subr.mxu0 0.0
    %664 = vmatpush1.msra.mxu0 0.0
    %665 = vmatprep.subr.mxu0 0.0
    %666 = vmatpush1.msra.mxu0 0.0
    %667 = vmatprep.subr.mxu0 0.0
    %668 = vmatpush1.msra.mxu0 0.0
    %669 = vmatprep.subr.mxu0 0.0
    %670 = vmatpush1.msra.mxu0 0.0
    %671 = vmatprep.subr.mxu0 0.0
    %672 = vmatpush1.msra.mxu0 0.0
    %673 = vmatprep.subr.mxu0 0.0
    %674 = vmatpush1.msra.mxu0 0.0
    %675 = vmatprep.subr.mxu0 0.0
    %676 = vmatpush1.msra.mxu0 0.0
    %677 = vmatprep.subr.mxu0 0.0
    %678 = vmatpush1.msra.mxu0 0.0
    %679 = vmatprep.subr.mxu0 0.0
    %680 = vmatpush1.msra.mxu0 0.0
    %681 = vmatprep.subr.mxu0 0.0
    %682 = vmatpush1.msra.mxu0 0.0
    %683 = vmatprep.subr.mxu0 0.0
    %684 = vmatpush1.msra.mxu0 0.0
    %685 = vmatprep.subr.mxu0 0.0
    %686 = vmatpush1.msra.mxu0 0.0
    %687 = vmatprep.subr.mxu0 0.0
    %688 = vmatpush1.msra.mxu0 %v435
    %689 = vmatprep.subr.mxu0 0.0
    %690 = vmatpush2.msra.mxu0 0.0
    %691 = vmatprep.subr.mxu0 0.0
    %692 = vmatpush2.msra.mxu0 0.0
    %693 = vmatprep.subr.mxu0 0.0
    %694 = vmatpush2.msra.mxu0 0.0
    %695 = vmatprep.subr.mxu0 0.0
    %696 = vmatpush2.msra.mxu0 0.0
    %697 = vmatprep.subr.mxu0 0.0
    %698 = vmatpush2.msra.mxu0 0.0
    %699 = vmatprep.subr.mxu0 0.0
    %700 = vmatpush2.msra.mxu0 0.0
    %701 = vmatprep.subr.mxu0 0.0
    %702 = vmatpush2.msra.mxu0 0.0
    %703 = vmatprep.subr.mxu0 0.0
    %704 = vmatpush2.msra.mxu0 0.0
    %705 = vmatprep.subr.mxu0 0.0
    %706 = vmatpush2.msra.mxu0 0.0
    %707 = vmatprep.subr.mxu0 0.0
    %708 = vmatpush2.msra.mxu0 0.0
    %709 = vmatprep.subr.mxu0 0.0
    %710 = vmatpush2.msra.mxu0 0.0
    %711 = vmatprep.subr.mxu0 0.0
    %712 = vmatpush2.msra.mxu0 0.0
    %713 = vmatprep.subr.mxu0 0.0
    %714 = vmatpush2.msra.mxu0 0.0
    %715 = vmatprep.subr.mxu0 0.0
    %716 = vmatpush2.msra.mxu0 0.0
    %717 = vmatprep.subr.mxu0 0.0
    %718 = vmatpush2.msra.mxu0 0.0
    %719 = vmatprep.subr.mxu0 0.0
    %720 = vmatpush2.msra.mxu0 0.0
    %721 = vmatprep.mubr.f32.mxu0 0.0
    %722 = vmatmul.mubr.f32.gmra.mxu0 %v655
    %v723 = vpop.f32.mrf.mxu0
    %v724 = vadd.f32 0.0, %v723
    %v725 = vpop.f32.mrf.mxu0
    %726 = vdwg.mxu0
    %v728 = vsel %vm627, %v651, 0
    %730 = vmatprep.subr.mxu0 0.0
    %731 = vmatpush1.msra.mxu0 0.0
    %732 = vmatprep.subr.mxu0 0.0
    %733 = vmatpush1.msra.mxu0 0.0
    %734 = vmatprep.subr.mxu0 0.0
    %735 = vmatpush1.msra.mxu0 0.0
    %736 = vmatprep.subr.mxu0 0.0
    %737 = vmatpush1.msra.mxu0 0.0
    %738 = vmatprep.subr.mxu0 0.0
    %739 = vmatpush1.msra.mxu0 0.0
    %740 = vmatprep.subr.mxu0 0.0
    %741 = vmatpush1.msra.mxu0 0.0
    %742 = vmatprep.subr.mxu0 0.0
    %743 = vmatpush1.msra.mxu0 0.0
    %744 = vmatprep.subr.mxu0 0.0
    %745 = vmatpush1.msra.mxu0 0.0
    %746 = vmatprep.subr.mxu0 0.0
    %747 = vmatpush1.msra.mxu0 0.0
    %748 = vmatprep.subr.mxu0 0.0
    %749 = vmatpush1.msra.mxu0 0.0
    %750 = vmatprep.subr.mxu0 0.0
    %751 = vmatpush1.msra.mxu0 0.0
    %752 = vmatprep.subr.mxu0 0.0
    %753 = vmatpush1.msra.mxu0 0.0
    %754 = vmatprep.subr.mxu0 0.0
    %755 = vmatpush1.msra.mxu0 0.0
    %756 = vmatprep.subr.mxu0 0.0
    %757 = vmatpush1.msra.mxu0 0.0
    %758 = vmatprep.subr.mxu0 0.0
    %759 = vmatpush1.msra.mxu0 0.0
    %760 = vmatprep.subr.mxu0 0.0
    %761 = vmatpush1.msra.mxu0 %v440
    %762 = vmatprep.subr.mxu0 0.0
    %763 = vmatpush2.msra.mxu0 0.0
    %764 = vmatprep.subr.mxu0 0.0
    %765 = vmatpush2.msra.mxu0 0.0
    %766 = vmatprep.subr.mxu0 0.0
    %767 = vmatpush2.msra.mxu0 0.0
    %768 = vmatprep.subr.mxu0 0.0
    %769 = vmatpush2.msra.mxu0 0.0
    %770 = vmatprep.subr.mxu0 0.0
    %771 = vmatpush2.msra.mxu0 0.0
    %772 = vmatprep.subr.mxu0 0.0
    %773 = vmatpush2.msra.mxu0 0.0
    %774 = vmatprep.subr.mxu0 0.0
    %775 = vmatpush2.msra.mxu0 0.0
    %776 = vmatprep.subr.mxu0 0.0
    %777 = vmatpush2.msra.mxu0 0.0
    %778 = vmatprep.subr.mxu0 0.0
    %779 = vmatpush2.msra.mxu0 0.0
    %780 = vmatprep.subr.mxu0 0.0
    %781 = vmatpush2.msra.mxu0 0.0
    %782 = vmatprep.subr.mxu0 0.0
    %783 = vmatpush2.msra.mxu0 0.0
    %784 = vmatprep.subr.mxu0 0.0
    %785 = vmatpush2.msra.mxu0 0.0
    %786 = vmatprep.subr.mxu0 0.0
    %787 = vmatpush2.msra.mxu0 0.0
    %788 = vmatprep.subr.mxu0 0.0
    %789 = vmatpush2.msra.mxu0 0.0
    %790 = vmatprep.subr.mxu0 0.0
    %791 = vmatpush2.msra.mxu0 0.0
    %792 = vmatprep.subr.mxu0 0.0
    %793 = vmatpush2.msra.mxu0 0.0
    %794 = vmatprep.mubr.f32.mxu0 0.0
    %795 = vmatmul.mubr.f32.gmra.mxu0 %v728
    %v796 = vpop.f32.mrf.mxu0
    %v797 = vadd.f32 0.0, %v796
    %v798 = vpop.f32.mrf.mxu0
    %799 = vdwg.mxu0
    %800 = vst.msk [vmem:[#allocation2] sm:$0xff] %vm470, %v724
    %801 = vst.msk [vmem:[#allocation2 + $0x8] sm:$0xff] %vm470, %v797
    %802 = vrot.lane.b32.xlu0 %v358, 96
    %v803 = vpop.permute.xlu0 %802
    %804 = vrot.lane.b32.xlu0 %v360, 96
    %v805 = vpop.permute.xlu0 %804
    %v806 = vsel %vm470, %v803, 0
    %v808 = vsel %vm470, %v805, 0
    %810 = vmatprep.subr.mxu0 0.0
    %811 = vmatpush1.xpose.msra.mxu0 0.0
    %812 = vmatprep.subr.mxu0 0.0
    %813 = vmatpush1.xpose.msra.mxu0 0.0
    %814 = vmatprep.subr.mxu0 0.0
    %815 = vmatpush1.xpose.msra.mxu0 0.0
    %816 = vmatprep.subr.mxu0 0.0
    %817 = vmatpush1.xpose.msra.mxu0 0.0
    %818 = vmatprep.subr.mxu0 0.0
    %819 = vmatpush1.xpose.msra.mxu0 0.0
    %820 = vmatprep.subr.mxu0 0.0
    %821 = vmatpush1.xpose.msra.mxu0 0.0
    %822 = vmatprep.subr.mxu0 0.0
    %823 = vmatpush1.xpose.msra.mxu0 0.0
    %824 = vmatprep.subr.mxu0 0.0
    %825 = vmatpush1.xpose.msra.mxu0 0.0
    %826 = vmatprep.subr.mxu0 0.0
    %827 = vmatpush1.xpose.msra.mxu0 0.0
    %828 = vmatprep.subr.mxu0 0.0
    %829 = vmatpush1.xpose.msra.mxu0 0.0
    %830 = vmatprep.subr.mxu0 0.0
    %831 = vmatpush1.xpose.msra.mxu0 0.0
    %832 = vmatprep.subr.mxu0 0.0
    %833 = vmatpush1.xpose.msra.mxu0 0.0
    %834 = vmatprep.subr.mxu0 0.0
    %835 = vmatpush1.xpose.msra.mxu0 0.0
    %836 = vmatprep.subr.mxu0 0.0
    %837 = vmatpush1.xpose.msra.mxu0 0.0
    %838 = vmatprep.subr.mxu0 0.0
    %839 = vmatpush1.xpose.msra.mxu0 0.0
    %840 = vmatprep.subr.mxu0 0.0
    %841 = vmatpush1.xpose.msra.mxu0 %v808
    %842 = vmatprep.subr.mxu0 0.0
    %843 = vmatpush2.xpose.msra.mxu0 0.0
    %844 = vmatprep.subr.mxu0 0.0
    %845 = vmatpush2.xpose.msra.mxu0 0.0
    %846 = vmatprep.subr.mxu0 0.0
    %847 = vmatpush2.xpose.msra.mxu0 0.0
    %848 = vmatprep.subr.mxu0 0.0
    %849 = vmatpush2.xpose.msra.mxu0 0.0
    %850 = vmatprep.subr.mxu0 0.0
    %851 = vmatpush2.xpose.msra.mxu0 0.0
    %852 = vmatprep.subr.mxu0 0.0
    %853 = vmatpush2.xpose.msra.mxu0 0.0
    %854 = vmatprep.subr.mxu0 0.0
    %855 = vmatpush2.xpose.msra.mxu0 0.0
    %856 = vmatprep.subr.mxu0 0.0
    %857 = vmatpush2.xpose.msra.mxu0 0.0
    %858 = vmatprep.subr.mxu0 0.0
    %859 = vmatpush2.xpose.msra.mxu0 0.0
    %860 = vmatprep.subr.mxu0 0.0
    %861 = vmatpush2.xpose.msra.mxu0 0.0
    %862 = vmatprep.subr.mxu0 0.0
    %863 = vmatpush2.xpose.msra.mxu0 0.0
    %864 = vmatprep.subr.mxu0 0.0
    %865 = vmatpush2.xpose.msra.mxu0 0.0
    %866 = vmatprep.subr.mxu0 0.0
    %867 = vmatpush2.xpose.msra.mxu0 0.0
    %868 = vmatprep.subr.mxu0 0.0
    %869 = vmatpush2.xpose.msra.mxu0 0.0
    %870 = vmatprep.subr.mxu0 0.0
    %871 = vmatpush2.xpose.msra.mxu0 0.0
    %872 = vmatprep.subr.mxu0 0.0
    %873 = vmatpush2.xpose.msra.mxu0 0.0
    %874 = vmatprep.mubr.f32.mxu0 0.0
    %875 = vmatmul.mubr.f32.gmra.mxu0 %v806
    %v876 = vpop.f32.mrf.mxu0
    %v877 = vadd.f32 0.0, %v876
    %v878 = vpop.f32.mrf.mxu0
    %879 = vdwg.mxu0
    %880 = vrot.lane.b32.xlu0 %v364, 96
    %v881 = vpop.permute.xlu0 %880
    %882 = vrot.lane.b32.xlu0 %v366, 96
    %v883 = vpop.permute.xlu0 %882
    %v884 = vsel %vm470, %v881, 0
    %v886 = vsel %vm470, %v883, 0
    %888 = vmatprep.subr.mxu0 0.0
    %889 = vmatpush1.xpose.msra.mxu0 0.0
    %890 = vmatprep.subr.mxu0 0.0
    %891 = vmatpush1.xpose.msra.mxu0 0.0
    %892 = vmatprep.subr.mxu0 0.0
    %893 = vmatpush1.xpose.msra.mxu0 0.0
    %894 = vmatprep.subr.mxu0 0.0
    %895 = vmatpush1.xpose.msra.mxu0 0.0
    %896 = vmatprep.subr.mxu0 0.0
    %897 = vmatpush1.xpose.msra.mxu0 0.0
    %898 = vmatprep.subr.mxu0 0.0
    %899 = vmatpush1.xpose.msra.mxu0 0.0
    %900 = vmatprep.subr.mxu0 0.0
    %901 = vmatpush1.xpose.msra.mxu0 0.0
    %902 = vmatprep.subr.mxu0 0.0
    %903 = vmatpush1.xpose.msra.mxu0 0.0
    %904 = vmatprep.subr.mxu0 0.0
    %905 = vmatpush1.xpose.msra.mxu0 0.0
    %906 = vmatprep.subr.mxu0 0.0
    %907 = vmatpush1.xpose.msra.mxu0 0.0
    %908 = vmatprep.subr.mxu0 0.0
    %909 = vmatpush1.xpose.msra.mxu0 0.0
    %910 = vmatprep.subr.mxu0 0.0
    %911 = vmatpush1.xpose.msra.mxu0 0.0
    %912 = vmatprep.subr.mxu0 0.0
    %913 = vmatpush1.xpose.msra.mxu0 0.0
    %914 = vmatprep.subr.mxu0 0.0
    %915 = vmatpush1.xpose.msra.mxu0 0.0
    %916 = vmatprep.subr.mxu0 0.0
    %917 = vmatpush1.xpose.msra.mxu0 0.0
    %918 = vmatprep.subr.mxu0 0.0
    %919 = vmatpush1.xpose.msra.mxu0 %v886
    %920 = vmatprep.subr.mxu0 0.0
    %921 = vmatpush2.xpose.msra.mxu0 0.0
    %922 = vmatprep.subr.mxu0 0.0
    %923 = vmatpush2.xpose.msra.mxu0 0.0
    %924 = vmatprep.subr.mxu0 0.0
    %925 = vmatpush2.xpose.msra.mxu0 0.0
    %926 = vmatprep.subr.mxu0 0.0
    %927 = vmatpush2.xpose.msra.mxu0 0.0
    %928 = vmatprep.subr.mxu0 0.0
    %929 = vmatpush2.xpose.msra.mxu0 0.0
    %930 = vmatprep.subr.mxu0 0.0
    %931 = vmatpush2.xpose.msra.mxu0 0.0
    %932 = vmatprep.subr.mxu0 0.0
    %933 = vmatpush2.xpose.msra.mxu0 0.0
    %934 = vmatprep.subr.mxu0 0.0
    %935 = vmatpush2.xpose.msra.mxu0 0.0
    %936 = vmatprep.subr.mxu0 0.0
    %937 = vmatpush2.xpose.msra.mxu0 0.0
    %938 = vmatprep.subr.mxu0 0.0
    %939 = vmatpush2.xpose.msra.mxu0 0.0
    %940 = vmatprep.subr.mxu0 0.0
    %941 = vmatpush2.xpose.msra.mxu0 0.0
    %942 = vmatprep.subr.mxu0 0.0
    %943 = vmatpush2.xpose.msra.mxu0 0.0
    %944 = vmatprep.subr.mxu0 0.0
    %945 = vmatpush2.xpose.msra.mxu0 0.0
    %946 = vmatprep.subr.mxu0 0.0
    %947 = vmatpush2.xpose.msra.mxu0 0.0
    %948 = vmatprep.subr.mxu0 0.0
    %949 = vmatpush2.xpose.msra.mxu0 0.0
    %950 = vmatprep.subr.mxu0 0.0
    %951 = vmatpush2.xpose.msra.mxu0 0.0
    %952 = vmatprep.mubr.f32.mxu0 0.0
    %953 = vmatmul.mubr.f32.gmra.mxu0 %v884
    %v954 = vpop.f32.mrf.mxu0
    %v955 = vadd.f32 0.0, %v954
    %v956 = vpop.f32.mrf.mxu0
    %957 = vdwg.mxu0
    %v958 = vmul.f32 %v877, 0.17677669
    %v959 = vmul.f32 %v955, 0.17677669
    %v960 = vadd.f32 %v958, %v468
    %v961 = vadd.f32 %v959, %v469
    %v962 = vsel %vm627, %v960, -inf
    %963 = vmax.xlane.f32.xlu0 %v962
    %v964 = vpop.xlane.xlu0 %963
    %v965 = vsel %vm627, %v961, -inf
    %966 = vmax.xlane.f32.xlu0 %v965
    %v967 = vpop.xlane.xlu0 %966
    %v968 = vsub.f32 %v960, %v964
    %v969 = vsub.f32 %v961, %v967
    %v970 = vmul.f32 %v968, 1.442695
    %v971 = vpow.pop %v970
    %v972 = vmul.f32 %v969, 1.442695
    %v973 = vpow.pop %v972
    %v974 = vsel %vm627, %v971, 0.0
    %975 = vadd.xlane.f32.xlu0 %v974
    %v976 = vpop.xlane.xlu0 %975
    %v977 = vsel %vm627, %v973, 0.0
    %978 = vadd.xlane.f32.xlu0 %v977
    %v979 = vpop.xlane.xlu0 %978
    %v980 = vrcp.pop %v976
    %v981 = vmul.f32 1.0, %v980
    %v982 = vrcp.pop %v979
    %v983 = vmul.f32 1.0, %v982
    %v984 = vmul.f32 %v971, %v981
    %v985 = vmul.f32 %v973, %v983
    %s986 = scalar_lea.vmem [#allocation21], 8
    %987 = vst.msk [vmem:[%s986] sm:$0xff] %vm627, %v984
    %988 = vst.msk [vmem:[%s986 + $0x20] sm:$0xff] %vm627, %v985
    %990 = vrot.lane.b32.xlu0 %v435, 96
    %v991 = vpop.permute.xlu0 %990
    %v994 = vsel %vm627, %v984, 0
    %996 = vmatprep.subr.mxu0 0.0
    %997 = vmatpush1.msra.mxu0 0.0
    %998 = vmatprep.subr.mxu0 0.0
    %999 = vmatpush1.msra.mxu0 0.0
    %1000 = vmatprep.subr.mxu0 0.0
    %1001 = vmatpush1.msra.mxu0 0.0
    %1002 = vmatprep.subr.mxu0 0.0
    %1003 = vmatpush1.msra.mxu0 0.0
    %1004 = vmatprep.subr.mxu0 0.0
    %1005 = vmatpush1.msra.mxu0 0.0
    %1006 = vmatprep.subr.mxu0 0.0
    %1007 = vmatpush1.msra.mxu0 0.0
    %1008 = vmatprep.subr.mxu0 0.0
    %1009 = vmatpush1.msra.mxu0 0.0
    %1010 = vmatprep.subr.mxu0 0.0
    %1011 = vmatpush1.msra.mxu0 0.0
    %1012 = vmatprep.subr.mxu0 0.0
    %1013 = vmatpush1.msra.mxu0 0.0
    %1014 = vmatprep.subr.mxu0 0.0
    %1015 = vmatpush1.msra.mxu0 0.0
    %1016 = vmatprep.subr.mxu0 0.0
    %1017 = vmatpush1.msra.mxu0 0.0
    %1018 = vmatprep.subr.mxu0 0.0
    %1019 = vmatpush1.msra.mxu0 0.0
    %1020 = vmatprep.subr.mxu0 0.0
    %1021 = vmatpush1.msra.mxu0 0.0
    %1022 = vmatprep.subr.mxu0 0.0
    %1023 = vmatpush1.msra.mxu0 0.0
    %1024 = vmatprep.subr.mxu0 0.0
    %1025 = vmatpush1.msra.mxu0 0.0
    %1026 = vmatprep.subr.mxu0 0.0
    %1027 = vmatpush1.msra.mxu0 %v991
    %1028 = vmatprep.subr.mxu0 0.0
    %1029 = vmatpush2.msra.mxu0 0.0
    %1030 = vmatprep.subr.mxu0 0.0
    %1031 = vmatpush2.msra.mxu0 0.0
    %1032 = vmatprep.subr.mxu0 0.0
    %1033 = vmatpush2.msra.mxu0 0.0
    %1034 = vmatprep.subr.mxu0 0.0
    %1035 = vmatpush2.msra.mxu0 0.0
    %1036 = vmatprep.subr.mxu0 0.0
    %1037 = vmatpush2.msra.mxu0 0.0
    %1038 = vmatprep.subr.mxu0 0.0
    %1039 = vmatpush2.msra.mxu0 0.0
    %1040 = vmatprep.subr.mxu0 0.0
    %1041 = vmatpush2.msra.mxu0 0.0
    %1042 = vmatprep.subr.mxu0 0.0
    %1043 = vmatpush2.msra.mxu0 0.0
    %1044 = vmatprep.subr.mxu0 0.0
    %1045 = vmatpush2.msra.mxu0 0.0
    %1046 = vmatprep.subr.mxu0 0.0
    %1047 = vmatpush2.msra.mxu0 0.0
    %1048 = vmatprep.subr.mxu0 0.0
    %1049 = vmatpush2.msra.mxu0 0.0
    %1050 = vmatprep.subr.mxu0 0.0
    %1051 = vmatpush2.msra.mxu0 0.0
    %1052 = vmatprep.subr.mxu0 0.0
    %1053 = vmatpush2.msra.mxu0 0.0
    %1054 = vmatprep.subr.mxu0 0.0
    %1055 = vmatpush2.msra.mxu0 0.0
    %1056 = vmatprep.subr.mxu0 0.0
    %1057 = vmatpush2.msra.mxu0 0.0
    %1058 = vmatprep.subr.mxu0 0.0
    %1059 = vmatpush2.msra.mxu0 0.0
    %1060 = vmatprep.mubr.f32.mxu0 0.0
    %1061 = vmatmul.mubr.f32.gmra.mxu0 %v994
    %v1062 = vpop.f32.mrf.mxu0
    %v1063 = vadd.f32 0.0, %v1062
    %v1064 = vpop.f32.mrf.mxu0
    %1065 = vdwg.mxu0
    %1067 = vrot.lane.b32.xlu0 %v440, 96
    %v1068 = vpop.permute.xlu0 %1067
    %v1071 = vsel %vm627, %v985, 0
    %1073 = vmatprep.subr.mxu0 0.0
    %1074 = vmatpush1.msra.mxu0 0.0
    %1075 = vmatprep.subr.mxu0 0.0
    %1076 = vmatpush1.msra.mxu0 0.0
    %1077 = vmatprep.subr.mxu0 0.0
    %1078 = vmatpush1.msra.mxu0 0.0
    %1079 = vmatprep.subr.mxu0 0.0
    %1080 = vmatpush1.msra.mxu0 0.0
    %1081 = vmatprep.subr.mxu0 0.0
    %1082 = vmatpush1.msra.mxu0 0.0
    %1083 = vmatprep.subr.mxu0 0.0
    %1084 = vmatpush1.msra.mxu0 0.0
    %1085 = vmatprep.subr.mxu0 0.0
    %1086 = vmatpush1.msra.mxu0 0.0
    %1087 = vmatprep.subr.mxu0 0.0
    %1088 = vmatpush1.msra.mxu0 0.0
    %1089 = vmatprep.subr.mxu0 0.0
    %1090 = vmatpush1.msra.mxu0 0.0
    %1091 = vmatprep.subr.mxu0 0.0
    %1092 = vmatpush1.msra.mxu0 0.0
    %1093 = vmatprep.subr.mxu0 0.0
    %1094 = vmatpush1.msra.mxu0 0.0
    %1095 = vmatprep.subr.mxu0 0.0
    %1096 = vmatpush1.msra.mxu0 0.0
    %1097 = vmatprep.subr.mxu0 0.0
    %1098 = vmatpush1.msra.mxu0 0.0
    %1099 = vmatprep.subr.mxu0 0.0
    %1100 = vmatpush1.msra.mxu0 0.0
    %1101 = vmatprep.subr.mxu0 0.0
    %1102 = vmatpush1.msra.mxu0 0.0
    %1103 = vmatprep.subr.mxu0 0.0
    %1104 = vmatpush1.msra.mxu0 %v1068
    %1105 = vmatprep.subr.mxu0 0.0
    %1106 = vmatpush2.msra.mxu0 0.0
    %1107 = vmatprep.subr.mxu0 0.0
    %1108 = vmatpush2.msra.mxu0 0.0
    %1109 = vmatprep.subr.mxu0 0.0
    %1110 = vmatpush2.msra.mxu0 0.0
    %1111 = vmatprep.subr.mxu0 0.0
    %1112 = vmatpush2.msra.mxu0 0.0
    %1113 = vmatprep.subr.mxu0 0.0
    %1114 = vmatpush2.msra.mxu0 0.0
    %1115 = vmatprep.subr.mxu0 0.0
    %1116 = vmatpush2.msra.mxu0 0.0
    %1117 = vmatprep.subr.mxu0 0.0
    %1118 = vmatpush2.msra.mxu0 0.0
    %1119 = vmatprep.subr.mxu0 0.0
    %1120 = vmatpush2.msra.mxu0 0.0
    %1121 = vmatprep.subr.mxu0 0.0
    %1122 = vmatpush2.msra.mxu0 0.0
    %1123 = vmatprep.subr.mxu0 0.0
    %1124 = vmatpush2.msra.mxu0 0.0
    %1125 = vmatprep.subr.mxu0 0.0
    %1126 = vmatpush2.msra.mxu0 0.0
    %1127 = vmatprep.subr.mxu0 0.0
    %1128 = vmatpush2.msra.mxu0 0.0
    %1129 = vmatprep.subr.mxu0 0.0
    %1130 = vmatpush2.msra.mxu0 0.0
    %1131 = vmatprep.subr.mxu0 0.0
    %1132 = vmatpush2.msra.mxu0 0.0
    %1133 = vmatprep.subr.mxu0 0.0
    %1134 = vmatpush2.msra.mxu0 0.0
    %1135 = vmatprep.subr.mxu0 0.0
    %1136 = vmatpush2.msra.mxu0 0.0
    %1137 = vmatprep.mubr.f32.mxu0 0.0
    %1138 = vmatmul.mubr.f32.gmra.mxu0 %v1071
    %v1139 = vpop.f32.mrf.mxu0
    %v1140 = vadd.f32 0.0, %v1139
    %v1141 = vpop.f32.mrf.mxu0
    %1142 = vdwg.mxu0
    %1145 = vrot.lane.b32.xlu0 %v1063, 32
    %v1146 = vpop.permute.xlu0 %1145
    %1147 = vrot.lane.b32.xlu0 %v1140, 32
    %v1148 = vpop.permute.xlu0 %1147
    %vm1151 = vcmask 523520
    %1152 = vst.msk [vmem:[#allocation2] sm:$0xff] %vm1151, %v1146
    %1153 = vst.msk [vmem:[#allocation2 + $0x8] sm:$0xff] %vm1151, %v1148
    %1154 = vrot.lane.b32.xlu0 %v358, 64
    %v1155 = vpop.permute.xlu0 %1154
    %1156 = vrot.lane.b32.xlu0 %v360, 64
    %v1157 = vpop.permute.xlu0 %1156
    %v1158 = vsel %vm470, %v1155, 0
    %v1160 = vsel %vm470, %v1157, 0
    %1162 = vmatprep.subr.mxu0 0.0
    %1163 = vmatpush1.xpose.msra.mxu0 0.0
    %1164 = vmatprep.subr.mxu0 0.0
    %1165 = vmatpush1.xpose.msra.mxu0 0.0
    %1166 = vmatprep.subr.mxu0 0.0
    %1167 = vmatpush1.xpose.msra.mxu0 0.0
    %1168 = vmatprep.subr.mxu0 0.0
    %1169 = vmatpush1.xpose.msra.mxu0 0.0
    %1170 = vmatprep.subr.mxu0 0.0
    %1171 = vmatpush1.xpose.msra.mxu0 0.0
    %1172 = vmatprep.subr.mxu0 0.0
    %1173 = vmatpush1.xpose.msra.mxu0 0.0
    %1174 = vmatprep.subr.mxu0 0.0
    %1175 = vmatpush1.xpose.msra.mxu0 0.0
    %1176 = vmatprep.subr.mxu0 0.0
    %1177 = vmatpush1.xpose.msra.mxu0 0.0
    %1178 = vmatprep.subr.mxu0 0.0
    %1179 = vmatpush1.xpose.msra.mxu0 0.0
    %1180 = vmatprep.subr.mxu0 0.0
    %1181 = vmatpush1.xpose.msra.mxu0 0.0
    %1182 = vmatprep.subr.mxu0 0.0
    %1183 = vmatpush1.xpose.msra.mxu0 0.0
    %1184 = vmatprep.subr.mxu0 0.0
    %1185 = vmatpush1.xpose.msra.mxu0 0.0
    %1186 = vmatprep.subr.mxu0 0.0
    %1187 = vmatpush1.xpose.msra.mxu0 0.0
    %1188 = vmatprep.subr.mxu0 0.0
    %1189 = vmatpush1.xpose.msra.mxu0 0.0
    %1190 = vmatprep.subr.mxu0 0.0
    %1191 = vmatpush1.xpose.msra.mxu0 0.0
    %1192 = vmatprep.subr.mxu0 0.0
    %1193 = vmatpush1.xpose.msra.mxu0 %v1160
    %1194 = vmatprep.subr.mxu0 0.0
    %1195 = vmatpush2.xpose.msra.mxu0 0.0
    %1196 = vmatprep.subr.mxu0 0.0
    %1197 = vmatpush2.xpose.msra.mxu0 0.0
    %1198 = vmatprep.subr.mxu0 0.0
    %1199 = vmatpush2.xpose.msra.mxu0 0.0
    %1200 = vmatprep.subr.mxu0 0.0
    %1201 = vmatpush2.xpose.msra.mxu0 0.0
    %1202 = vmatprep.subr.mxu0 0.0
    %1203 = vmatpush2.xpose.msra.mxu0 0.0
    %1204 = vmatprep.subr.mxu0 0.0
    %1205 = vmatpush2.xpose.msra.mxu0 0.0
    %1206 = vmatprep.subr.mxu0 0.0
    %1207 = vmatpush2.xpose.msra.mxu0 0.0
    %1208 = vmatprep.subr.mxu0 0.0
    %1209 = vmatpush2.xpose.msra.mxu0 0.0
    %1210 = vmatprep.subr.mxu0 0.0
    %1211 = vmatpush2.xpose.msra.mxu0 0.0
    %1212 = vmatprep.subr.mxu0 0.0
    %1213 = vmatpush2.xpose.msra.mxu0 0.0
    %1214 = vmatprep.subr.mxu0 0.0
    %1215 = vmatpush2.xpose.msra.mxu0 0.0
    %1216 = vmatprep.subr.mxu0 0.0
    %1217 = vmatpush2.xpose.msra.mxu0 0.0
    %1218 = vmatprep.subr.mxu0 0.0
    %1219 = vmatpush2.xpose.msra.mxu0 0.0
    %1220 = vmatprep.subr.mxu0 0.0
    %1221 = vmatpush2.xpose.msra.mxu0 0.0
    %1222 = vmatprep.subr.mxu0 0.0
    %1223 = vmatpush2.xpose.msra.mxu0 0.0
    %1224 = vmatprep.subr.mxu0 0.0
    %1225 = vmatpush2.xpose.msra.mxu0 0.0
    %1226 = vmatprep.mubr.f32.mxu0 0.0
    %1227 = vmatmul.mubr.f32.gmra.mxu0 %v1158
    %v1228 = vpop.f32.mrf.mxu0
    %v1229 = vadd.f32 0.0, %v1228
    %v1230 = vpop.f32.mrf.mxu0
    %1231 = vdwg.mxu0
    %1232 = vrot.lane.b32.xlu0 %v364, 64
    %v1233 = vpop.permute.xlu0 %1232
    %1234 = vrot.lane.b32.xlu0 %v366, 64
    %v1235 = vpop.permute.xlu0 %1234
    %v1236 = vsel %vm470, %v1233, 0
    %v1238 = vsel %vm470, %v1235, 0
    %1240 = vmatprep.subr.mxu0 0.0
    %1241 = vmatpush1.xpose.msra.mxu0 0.0
    %1242 = vmatprep.subr.mxu0 0.0
    %1243 = vmatpush1.xpose.msra.mxu0 0.0
    %1244 = vmatprep.subr.mxu0 0.0
    %1245 = vmatpush1.xpose.msra.mxu0 0.0
    %1246 = vmatprep.subr.mxu0 0.0
    %1247 = vmatpush1.xpose.msra.mxu0 0.0
    %1248 = vmatprep.subr.mxu0 0.0
    %1249 = vmatpush1.xpose.msra.mxu0 0.0
    %1250 = vmatprep.subr.mxu0 0.0
    %1251 = vmatpush1.xpose.msra.mxu0 0.0
    %1252 = vmatprep.subr.mxu0 0.0
    %1253 = vmatpush1.xpose.msra.mxu0 0.0
    %1254 = vmatprep.subr.mxu0 0.0
    %1255 = vmatpush1.xpose.msra.mxu0 0.0
    %1256 = vmatprep.subr.mxu0 0.0
    %1257 = vmatpush1.xpose.msra.mxu0 0.0
    %1258 = vmatprep.subr.mxu0 0.0
    %1259 = vmatpush1.xpose.msra.mxu0 0.0
    %1260 = vmatprep.subr.mxu0 0.0
    %1261 = vmatpush1.xpose.msra.mxu0 0.0
    %1262 = vmatprep.subr.mxu0 0.0
    %1263 = vmatpush1.xpose.msra.mxu0 0.0
    %1264 = vmatprep.subr.mxu0 0.0
    %1265 = vmatpush1.xpose.msra.mxu0 0.0
    %1266 = vmatprep.subr.mxu0 0.0
    %1267 = vmatpush1.xpose.msra.mxu0 0.0
    %1268 = vmatprep.subr.mxu0 0.0
    %1269 = vmatpush1.xpose.msra.mxu0 0.0
    %1270 = vmatprep.subr.mxu0 0.0
    %1271 = vmatpush1.xpose.msra.mxu0 %v1238
    %1272 = vmatprep.subr.mxu0 0.0
    %1273 = vmatpush2.xpose.msra.mxu0 0.0
    %1274 = vmatprep.subr.mxu0 0.0
    %1275 = vmatpush2.xpose.msra.mxu0 0.0
    %1276 = vmatprep.subr.mxu0 0.0
    %1277 = vmatpush2.xpose.msra.mxu0 0.0
    %1278 = vmatprep.subr.mxu0 0.0
    %1279 = vmatpush2.xpose.msra.mxu0 0.0
    %1280 = vmatprep.subr.mxu0 0.0
    %1281 = vmatpush2.xpose.msra.mxu0 0.0
    %1282 = vmatprep.subr.mxu0 0.0
    %1283 = vmatpush2.xpose.msra.mxu0 0.0
    %1284 = vmatprep.subr.mxu0 0.0
    %1285 = vmatpush2.xpose.msra.mxu0 0.0
    %1286 = vmatprep.subr.mxu0 0.0
    %1287 = vmatpush2.xpose.msra.mxu0 0.0
    %1288 = vmatprep.subr.mxu0 0.0
    %1289 = vmatpush2.xpose.msra.mxu0 0.0
    %1290 = vmatprep.subr.mxu0 0.0
    %1291 = vmatpush2.xpose.msra.mxu0 0.0
    %1292 = vmatprep.subr.mxu0 0.0
    %1293 = vmatpush2.xpose.msra.mxu0 0.0
    %1294 = vmatprep.subr.mxu0 0.0
    %1295 = vmatpush2.xpose.msra.mxu0 0.0
    %1296 = vmatprep.subr.mxu0 0.0
    %1297 = vmatpush2.xpose.msra.mxu0 0.0
    %1298 = vmatprep.subr.mxu0 0.0
    %1299 = vmatpush2.xpose.msra.mxu0 0.0
    %1300 = vmatprep.subr.mxu0 0.0
    %1301 = vmatpush2.xpose.msra.mxu0 0.0
    %1302 = vmatprep.subr.mxu0 0.0
    %1303 = vmatpush2.xpose.msra.mxu0 0.0
    %1304 = vmatprep.mubr.f32.mxu0 0.0
    %1305 = vmatmul.mubr.f32.gmra.mxu0 %v1236
    %v1306 = vpop.f32.mrf.mxu0
    %v1307 = vadd.f32 0.0, %v1306
    %v1308 = vpop.f32.mrf.mxu0
    %1309 = vdwg.mxu0
    %v1310 = vmul.f32 %v1229, 0.17677669
    %v1311 = vmul.f32 %v1307, 0.17677669
    %v1312 = vadd.f32 %v1310, %v468
    %v1313 = vadd.f32 %v1311, %v469
    %v1314 = vsel %vm627, %v1312, -inf
    %1315 = vmax.xlane.f32.xlu0 %v1314
    %v1316 = vpop.xlane.xlu0 %1315
    %v1317 = vsel %vm627, %v1313, -inf
    %1318 = vmax.xlane.f32.xlu0 %v1317
    %v1319 = vpop.xlane.xlu0 %1318
    %v1320 = vsub.f32 %v1312, %v1316
    %v1321 = vsub.f32 %v1313, %v1319
    %v1322 = vmul.f32 %v1320, 1.442695
    %v1323 = vpow.pop %v1322
    %v1324 = vmul.f32 %v1321, 1.442695
    %v1325 = vpow.pop %v1324
    %v1326 = vsel %vm627, %v1323, 0.0
    %1327 = vadd.xlane.f32.xlu0 %v1326
    %v1328 = vpop.xlane.xlu0 %1327
    %v1329 = vsel %vm627, %v1325, 0.0
    %1330 = vadd.xlane.f32.xlu0 %v1329
    %v1331 = vpop.xlane.xlu0 %1330
    %v1332 = vrcp.pop %v1328
    %v1333 = vmul.f32 1.0, %v1332
    %v1334 = vrcp.pop %v1331
    %v1335 = vmul.f32 1.0, %v1334
    %v1336 = vmul.f32 %v1323, %v1333
    %v1337 = vmul.f32 %v1325, %v1335
    %s1338 = scalar_lea.vmem [#allocation21], 16
    %1339 = vst.msk [vmem:[%s1338] sm:$0xff] %vm627, %v1336
    %1340 = vst.msk [vmem:[%s1338 + $0x20] sm:$0xff] %vm627, %v1337
    %1341 = vrot.lane.b32.xlu0 %v435, 64
    %v1342 = vpop.permute.xlu0 %1341
    %v1345 = vsel %vm627, %v1336, 0
    %1347 = vmatprep.subr.mxu0 0.0
    %1348 = vmatpush1.msra.mxu0 0.0
    %1349 = vmatprep.subr.mxu0 0.0
    %1350 = vmatpush1.msra.mxu0 0.0
    %1351 = vmatprep.subr.mxu0 0.0
    %1352 = vmatpush1.msra.mxu0 0.0
    %1353 = vmatprep.subr.mxu0 0.0
    %1354 = vmatpush1.msra.mxu0 0.0
    %1355 = vmatprep.subr.mxu0 0.0
    %1356 = vmatpush1.msra.mxu0 0.0
    %1357 = vmatprep.subr.mxu0 0.0
    %1358 = vmatpush1.msra.mxu0 0.0
    %1359 = vmatprep.subr.mxu0 0.0
    %1360 = vmatpush1.msra.mxu0 0.0
    %1361 = vmatprep.subr.mxu0 0.0
    %1362 = vmatpush1.msra.mxu0 0.0
    %1363 = vmatprep.subr.mxu0 0.0
    %1364 = vmatpush1.msra.mxu0 0.0
    %1365 = vmatprep.subr.mxu0 0.0
    %1366 = vmatpush1.msra.mxu0 0.0
    %1367 = vmatprep.subr.mxu0 0.0
    %1368 = vmatpush1.msra.mxu0 0.0
    %1369 = vmatprep.subr.mxu0 0.0
    %1370 = vmatpush1.msra.mxu0 0.0
    %1371 = vmatprep.subr.mxu0 0.0
    %1372 = vmatpush1.msra.mxu0 0.0
    %1373 = vmatprep.subr.mxu0 0.0
    %1374 = vmatpush1.msra.mxu0 0.0
    %1375 = vmatprep.subr.mxu0 0.0
    %1376 = vmatpush1.msra.mxu0 0.0
    %1377 = vmatprep.subr.mxu0 0.0
    %1378 = vmatpush1.msra.mxu0 %v1342
    %1379 = vmatprep.subr.mxu0 0.0
    %1380 = vmatpush2.msra.mxu0 0.0
    %1381 = vmatprep.subr.mxu0 0.0
    %1382 = vmatpush2.msra.mxu0 0.0
    %1383 = vmatprep.subr.mxu0 0.0
    %1384 = vmatpush2.msra.mxu0 0.0
    %1385 = vmatprep.subr.mxu0 0.0
    %1386 = vmatpush2.msra.mxu0 0.0
    %1387 = vmatprep.subr.mxu0 0.0
    %1388 = vmatpush2.msra.mxu0 0.0
    %1389 = vmatprep.subr.mxu0 0.0
    %1390 = vmatpush2.msra.mxu0 0.0
    %1391 = vmatprep.subr.mxu0 0.0
    %1392 = vmatpush2.msra.mxu0 0.0
    %1393 = vmatprep.subr.mxu0 0.0
    %1394 = vmatpush2.msra.mxu0 0.0
    %1395 = vmatprep.subr.mxu0 0.0
    %1396 = vmatpush2.msra.mxu0 0.0
    %1397 = vmatprep.subr.mxu0 0.0
    %1398 = vmatpush2.msra.mxu0 0.0
    %1399 = vmatprep.subr.mxu0 0.0
    %1400 = vmatpush2.msra.mxu0 0.0
    %1401 = vmatprep.subr.mxu0 0.0
    %1402 = vmatpush2.msra.mxu0 0.0
    %1403 = vmatprep.subr.mxu0 0.0
    %1404 = vmatpush2.msra.mxu0 0.0
    %1405 = vmatprep.subr.mxu0 0.0
    %1406 = vmatpush2.msra.mxu0 0.0
    %1407 = vmatprep.subr.mxu0 0.0
    %1408 = vmatpush2.msra.mxu0 0.0
    %1409 = vmatprep.subr.mxu0 0.0
    %1410 = vmatpush2.msra.mxu0 0.0
    %1411 = vmatprep.mubr.f32.mxu0 0.0
    %1412 = vmatmul.mubr.f32.gmra.mxu0 %v1345
    %v1413 = vpop.f32.mrf.mxu0
    %v1414 = vadd.f32 0.0, %v1413
    %v1415 = vpop.f32.mrf.mxu0
    %1416 = vdwg.mxu0
    %1417 = vrot.lane.b32.xlu0 %v440, 64
    %v1418 = vpop.permute.xlu0 %1417
    %v1421 = vsel %vm627, %v1337, 0
    %1423 = vmatprep.subr.mxu0 0.0
    %1424 = vmatpush1.msra.mxu0 0.0
    %1425 = vmatprep.subr.mxu0 0.0
    %1426 = vmatpush1.msra.mxu0 0.0
    %1427 = vmatprep.subr.mxu0 0.0
    %1428 = vmatpush1.msra.mxu0 0.0
    %1429 = vmatprep.subr.mxu0 0.0
    %1430 = vmatpush1.msra.mxu0 0.0
    %1431 = vmatprep.subr.mxu0 0.0
    %1432 = vmatpush1.msra.mxu0 0.0
    %1433 = vmatprep.subr.mxu0 0.0
    %1434 = vmatpush1.msra.mxu0 0.0
    %1435 = vmatprep.subr.mxu0 0.0
    %1436 = vmatpush1.msra.mxu0 0.0
    %1437 = vmatprep.subr.mxu0 0.0
    %1438 = vmatpush1.msra.mxu0 0.0
    %1439 = vmatprep.subr.mxu0 0.0
    %1440 = vmatpush1.msra.mxu0 0.0
    %1441 = vmatprep.subr.mxu0 0.0
    %1442 = vmatpush1.msra.mxu0 0.0
    %1443 = vmatprep.subr.mxu0 0.0
    %1444 = vmatpush1.msra.mxu0 0.0
    %1445 = vmatprep.subr.mxu0 0.0
    %1446 = vmatpush1.msra.mxu0 0.0
    %1447 = vmatprep.subr.mxu0 0.0
    %1448 = vmatpush1.msra.mxu0 0.0
    %1449 = vmatprep.subr.mxu0 0.0
    %1450 = vmatpush1.msra.mxu0 0.0
    %1451 = vmatprep.subr.mxu0 0.0
    %1452 = vmatpush1.msra.mxu0 0.0
    %1453 = vmatprep.subr.mxu0 0.0
    %1454 = vmatpush1.msra.mxu0 %v1418
    %1455 = vmatprep.subr.mxu0 0.0
    %1456 = vmatpush2.msra.mxu0 0.0
    %1457 = vmatprep.subr.mxu0 0.0
    %1458 = vmatpush2.msra.mxu0 0.0
    %1459 = vmatprep.subr.mxu0 0.0
    %1460 = vmatpush2.msra.mxu0 0.0
    %1461 = vmatprep.subr.mxu0 0.0
    %1462 = vmatpush2.msra.mxu0 0.0
    %1463 = vmatprep.subr.mxu0 0.0
    %1464 = vmatpush2.msra.mxu0 0.0
    %1465 = vmatprep.subr.mxu0 0.0
    %1466 = vmatpush2.msra.mxu0 0.0
    %1467 = vmatprep.subr.mxu0 0.0
    %1468 = vmatpush2.msra.mxu0 0.0
    %1469 = vmatprep.subr.mxu0 0.0
    %1470 = vmatpush2.msra.mxu0 0.0
    %1471 = vmatprep.subr.mxu0 0.0
    %1472 = vmatpush2.msra.mxu0 0.0
    %1473 = vmatprep.subr.mxu0 0.0
    %1474 = vmatpush2.msra.mxu0 0.0
    %1475 = vmatprep.subr.mxu0 0.0
    %1476 = vmatpush2.msra.mxu0 0.0
    %1477 = vmatprep.subr.mxu0 0.0
    %1478 = vmatpush2.msra.mxu0 0.0
    %1479 = vmatprep.subr.mxu0 0.0
    %1480 = vmatpush2.msra.mxu0 0.0
    %1481 = vmatprep.subr.mxu0 0.0
    %1482 = vmatpush2.msra.mxu0 0.0
    %1483 = vmatprep.subr.mxu0 0.0
    %1484 = vmatpush2.msra.mxu0 0.0
    %1485 = vmatprep.subr.mxu0 0.0
    %1486 = vmatpush2.msra.mxu0 0.0
    %1487 = vmatprep.mubr.f32.mxu0 0.0
    %1488 = vmatmul.mubr.f32.gmra.mxu0 %v1421
    %v1489 = vpop.f32.mrf.mxu0
    %v1490 = vadd.f32 0.0, %v1489
    %v1491 = vpop.f32.mrf.mxu0
    %1492 = vdwg.mxu0
    %1495 = vrot.lane.b32.xlu0 %v1414, 64
    %v1496 = vpop.permute.xlu0 %1495
    %1497 = vrot.lane.b32.xlu0 %v1490, 64
    %v1498 = vpop.permute.xlu0 %1497
    %vm1501 = vcmask 785920
    %1502 = vst.msk [vmem:[#allocation2] sm:$0xff] %vm1501, %v1496
    %1503 = vst.msk [vmem:[#allocation2 + $0x8] sm:$0xff] %vm1501, %v1498
    %1504 = vrot.lane.b32.xlu0 %v358, 32
    %v1505 = vpop.permute.xlu0 %1504
    %1506 = vrot.lane.b32.xlu0 %v360, 32
    %v1507 = vpop.permute.xlu0 %1506
    %v1508 = vsel %vm470, %v1505, 0
    %v1510 = vsel %vm470, %v1507, 0
    %1512 = vmatprep.subr.mxu0 0.0
    %1513 = vmatpush1.xpose.msra.mxu0 0.0
    %1514 = vmatprep.subr.mxu0 0.0
    %1515 = vmatpush1.xpose.msra.mxu0 0.0
    %1516 = vmatprep.subr.mxu0 0.0
    %1517 = vmatpush1.xpose.msra.mxu0 0.0
    %1518 = vmatprep.subr.mxu0 0.0
    %1519 = vmatpush1.xpose.msra.mxu0 0.0
    %1520 = vmatprep.subr.mxu0 0.0
    %1521 = vmatpush1.xpose.msra.mxu0 0.0
    %1522 = vmatprep.subr.mxu0 0.0
    %1523 = vmatpush1.xpose.msra.mxu0 0.0
    %1524 = vmatprep.subr.mxu0 0.0
    %1525 = vmatpush1.xpose.msra.mxu0 0.0
    %1526 = vmatprep.subr.mxu0 0.0
    %1527 = vmatpush1.xpose.msra.mxu0 0.0
    %1528 = vmatprep.subr.mxu0 0.0
    %1529 = vmatpush1.xpose.msra.mxu0 0.0
    %1530 = vmatprep.subr.mxu0 0.0
    %1531 = vmatpush1.xpose.msra.mxu0 0.0
    %1532 = vmatprep.subr.mxu0 0.0
    %1533 = vmatpush1.xpose.msra.mxu0 0.0
    %1534 = vmatprep.subr.mxu0 0.0
    %1535 = vmatpush1.xpose.msra.mxu0 0.0
    %1536 = vmatprep.subr.mxu0 0.0
    %1537 = vmatpush1.xpose.msra.mxu0 0.0
    %1538 = vmatprep.subr.mxu0 0.0
    %1539 = vmatpush1.xpose.msra.mxu0 0.0
    %1540 = vmatprep.subr.mxu0 0.0
    %1541 = vmatpush1.xpose.msra.mxu0 0.0
    %1542 = vmatprep.subr.mxu0 0.0
    %1543 = vmatpush1.xpose.msra.mxu0 %v1510
    %1544 = vmatprep.subr.mxu0 0.0
    %1545 = vmatpush2.xpose.msra.mxu0 0.0
    %1546 = vmatprep.subr.mxu0 0.0
    %1547 = vmatpush2.xpose.msra.mxu0 0.0
    %1548 = vmatprep.subr.mxu0 0.0
    %1549 = vmatpush2.xpose.msra.mxu0 0.0
    %1550 = vmatprep.subr.mxu0 0.0
    %1551 = vmatpush2.xpose.msra.mxu0 0.0
    %1552 = vmatprep.subr.mxu0 0.0
    %1553 = vmatpush2.xpose.msra.mxu0 0.0
    %1554 = vmatprep.subr.mxu0 0.0
    %1555 = vmatpush2.xpose.msra.mxu0 0.0
    %1556 = vmatprep.subr.mxu0 0.0
    %1557 = vmatpush2.xpose.msra.mxu0 0.0
    %1558 = vmatprep.subr.mxu0 0.0
    %1559 = vmatpush2.xpose.msra.mxu0 0.0
    %1560 = vmatprep.subr.mxu0 0.0
    %1561 = vmatpush2.xpose.msra.mxu0 0.0
    %1562 = vmatprep.subr.mxu0 0.0
    %1563 = vmatpush2.xpose.msra.mxu0 0.0
    %1564 = vmatprep.subr.mxu0 0.0
    %1565 = vmatpush2.xpose.msra.mxu0 0.0
    %1566 = vmatprep.subr.mxu0 0.0
    %1567 = vmatpush2.xpose.msra.mxu0 0.0
    %1568 = vmatprep.subr.mxu0 0.0
    %1569 = vmatpush2.xpose.msra.mxu0 0.0
    %1570 = vmatprep.subr.mxu0 0.0
    %1571 = vmatpush2.xpose.msra.mxu0 0.0
    %1572 = vmatprep.subr.mxu0 0.0
    %1573 = vmatpush2.xpose.msra.mxu0 0.0
    %1574 = vmatprep.subr.mxu0 0.0
    %1575 = vmatpush2.xpose.msra.mxu0 0.0
    %1576 = vmatprep.mubr.f32.mxu0 0.0
    %1577 = vmatmul.mubr.f32.gmra.mxu0 %v1508
    %v1578 = vpop.f32.mrf.mxu0
    %v1579 = vadd.f32 0.0, %v1578
    %v1580 = vpop.f32.mrf.mxu0
    %1581 = vdwg.mxu0
    %1582 = vrot.lane.b32.xlu0 %v364, 32
    %v1583 = vpop.permute.xlu0 %1582
    %1584 = vrot.lane.b32.xlu0 %v366, 32
    %v1585 = vpop.permute.xlu0 %1584
    %v1586 = vsel %vm470, %v1583, 0
    %v1588 = vsel %vm470, %v1585, 0
    %1590 = vmatprep.subr.mxu0 0.0
    %1591 = vmatpush1.xpose.msra.mxu0 0.0
    %1592 = vmatprep.subr.mxu0 0.0
    %1593 = vmatpush1.xpose.msra.mxu0 0.0
    %1594 = vmatprep.subr.mxu0 0.0
    %1595 = vmatpush1.xpose.msra.mxu0 0.0
    %1596 = vmatprep.subr.mxu0 0.0
    %1597 = vmatpush1.xpose.msra.mxu0 0.0
    %1598 = vmatprep.subr.mxu0 0.0
    %1599 = vmatpush1.xpose.msra.mxu0 0.0
    %1600 = vmatprep.subr.mxu0 0.0
    %1601 = vmatpush1.xpose.msra.mxu0 0.0
    %1602 = vmatprep.subr.mxu0 0.0
    %1603 = vmatpush1.xpose.msra.mxu0 0.0
    %1604 = vmatprep.subr.mxu0 0.0
    %1605 = vmatpush1.xpose.msra.mxu0 0.0
    %1606 = vmatprep.subr.mxu0 0.0
    %1607 = vmatpush1.xpose.msra.mxu0 0.0
    %1608 = vmatprep.subr.mxu0 0.0
    %1609 = vmatpush1.xpose.msra.mxu0 0.0
    %1610 = vmatprep.subr.mxu0 0.0
    %1611 = vmatpush1.xpose.msra.mxu0 0.0
    %1612 = vmatprep.subr.mxu0 0.0
    %1613 = vmatpush1.xpose.msra.mxu0 0.0
    %1614 = vmatprep.subr.mxu0 0.0
    %1615 = vmatpush1.xpose.msra.mxu0 0.0
    %1616 = vmatprep.subr.mxu0 0.0
    %1617 = vmatpush1.xpose.msra.mxu0 0.0
    %1618 = vmatprep.subr.mxu0 0.0
    %1619 = vmatpush1.xpose.msra.mxu0 0.0
    %1620 = vmatprep.subr.mxu0 0.0
    %1621 = vmatpush1.xpose.msra.mxu0 %v1588
    %1622 = vmatprep.subr.mxu0 0.0
    %1623 = vmatpush2.xpose.msra.mxu0 0.0
    %1624 = vmatprep.subr.mxu0 0.0
    %1625 = vmatpush2.xpose.msra.mxu0 0.0
    %1626 = vmatprep.subr.mxu0 0.0
    %1627 = vmatpush2.xpose.msra.mxu0 0.0
    %1628 = vmatprep.subr.mxu0 0.0
    %1629 = vmatpush2.xpose.msra.mxu0 0.0
    %1630 = vmatprep.subr.mxu0 0.0
    %1631 = vmatpush2.xpose.msra.mxu0 0.0
    %1632 = vmatprep.subr.mxu0 0.0
    %1633 = vmatpush2.xpose.msra.mxu0 0.0
    %1634 = vmatprep.subr.mxu0 0.0
    %1635 = vmatpush2.xpose.msra.mxu0 0.0
    %1636 = vmatprep.subr.mxu0 0.0
    %1637 = vmatpush2.xpose.msra.mxu0 0.0
    %1638 = vmatprep.subr.mxu0 0.0
    %1639 = vmatpush2.xpose.msra.mxu0 0.0
    %1640 = vmatprep.subr.mxu0 0.0
    %1641 = vmatpush2.xpose.msra.mxu0 0.0
    %1642 = vmatprep.subr.mxu0 0.0
    %1643 = vmatpush2.xpose.msra.mxu0 0.0
    %1644 = vmatprep.subr.mxu0 0.0
    %1645 = vmatpush2.xpose.msra.mxu0 0.0
    %1646 = vmatprep.subr.mxu0 0.0
    %1647 = vmatpush2.xpose.msra.mxu0 0.0
    %1648 = vmatprep.subr.mxu0 0.0
    %1649 = vmatpush2.xpose.msra.mxu0 0.0
    %1650 = vmatprep.subr.mxu0 0.0
    %1651 = vmatpush2.xpose.msra.mxu0 0.0
    %1652 = vmatprep.subr.mxu0 0.0
    %1653 = vmatpush2.xpose.msra.mxu0 0.0
    %1654 = vmatprep.mubr.f32.mxu0 0.0
    %1655 = vmatmul.mubr.f32.gmra.mxu0 %v1586
    %v1656 = vpop.f32.mrf.mxu0
    %v1657 = vadd.f32 0.0, %v1656
    %v1658 = vpop.f32.mrf.mxu0
    %1659 = vdwg.mxu0
    %v1660 = vmul.f32 %v1579, 0.17677669
    %v1661 = vmul.f32 %v1657, 0.17677669
    %v1662 = vadd.f32 %v1660, %v468
    %v1663 = vadd.f32 %v1661, %v469
    %v1664 = vsel %vm627, %v1662, -inf
    %1665 = vmax.xlane.f32.xlu0 %v1664
    %v1666 = vpop.xlane.xlu0 %1665
    %v1667 = vsel %vm627, %v1663, -inf
    %1668 = vmax.xlane.f32.xlu0 %v1667
    %v1669 = vpop.xlane.xlu0 %1668
    %v1670 = vsub.f32 %v1662, %v1666
    %v1671 = vsub.f32 %v1663, %v1669
    %v1672 = vmul.f32 %v1670, 1.442695
    %v1673 = vpow.pop %v1672
    %v1674 = vmul.f32 %v1671, 1.442695
    %v1675 = vpow.pop %v1674
    %v1676 = vsel %vm627, %v1673, 0.0
    %1677 = vadd.xlane.f32.xlu0 %v1676
    %v1678 = vpop.xlane.xlu0 %1677
    %v1679 = vsel %vm627, %v1675, 0.0
    %1680 = vadd.xlane.f32.xlu0 %v1679
    %v1681 = vpop.xlane.xlu0 %1680
    %v1682 = vrcp.pop %v1678
    %v1683 = vmul.f32 1.0, %v1682
    %v1684 = vrcp.pop %v1681
    %v1685 = vmul.f32 1.0, %v1684
    %v1686 = vmul.f32 %v1673, %v1683
    %v1687 = vmul.f32 %v1675, %v1685
    %s1688 = scalar_lea.vmem [#allocation21], 24
    %1689 = vst.msk [vmem:[%s1688] sm:$0xff] %vm627, %v1686
    %1690 = vst.msk [vmem:[%s1688 + $0x20] sm:$0xff] %vm627, %v1687
    %1691 = vrot.lane.b32.xlu0 %v435, 32
    %v1692 = vpop.permute.xlu0 %1691
    %v1695 = vsel %vm627, %v1686, 0
    %1697 = vmatprep.subr.mxu0 0.0
    %1698 = vmatpush1.msra.mxu0 0.0
    %1699 = vmatprep.subr.mxu0 0.0
    %1700 = vmatpush1.msra.mxu0 0.0
    %1701 = vmatprep.subr.mxu0 0.0
    %1702 = vmatpush1.msra.mxu0 0.0
    %1703 = vmatprep.subr.mxu0 0.0
    %1704 = vmatpush1.msra.mxu0 0.0
    %1705 = vmatprep.subr.mxu0 0.0
    %1706 = vmatpush1.msra.mxu0 0.0
    %1707 = vmatprep.subr.mxu0 0.0
    %1708 = vmatpush1.msra.mxu0 0.0
    %1709 = vmatprep.subr.mxu0 0.0
    %1710 = vmatpush1.msra.mxu0 0.0
    %1711 = vmatprep.subr.mxu0 0.0
    %1712 = vmatpush1.msra.mxu0 0.0
    %1713 = vmatprep.subr.mxu0 0.0
    %1714 = vmatpush1.msra.mxu0 0.0
    %1715 = vmatprep.subr.mxu0 0.0
    %1716 = vmatpush1.msra.mxu0 0.0
    %1717 = vmatprep.subr.mxu0 0.0
    %1718 = vmatpush1.msra.mxu0 0.0
    %1719 = vmatprep.subr.mxu0 0.0
    %1720 = vmatpush1.msra.mxu0 0.0
    %1721 = vmatprep.subr.mxu0 0.0
    %1722 = vmatpush1.msra.mxu0 0.0
    %1723 = vmatprep.subr.mxu0 0.0
    %1724 = vmatpush1.msra.mxu0 0.0
    %1725 = vmatprep.subr.mxu0 0.0
    %1726 = vmatpush1.msra.mxu0 0.0
    %1727 = vmatprep.subr.mxu0 0.0
    %1728 = vmatpush1.msra.mxu0 %v1692
    %1729 = vmatprep.subr.mxu0 0.0
    %1730 = vmatpush2.msra.mxu0 0.0
    %1731 = vmatprep.subr.mxu0 0.0
    %1732 = vmatpush2.msra.mxu0 0.0
    %1733 = vmatprep.subr.mxu0 0.0
    %1734 = vmatpush2.msra.mxu0 0.0
    %1735 = vmatprep.subr.mxu0 0.0
    %1736 = vmatpush2.msra.mxu0 0.0
    %1737 = vmatprep.subr.mxu0 0.0
    %1738 = vmatpush2.msra.mxu0 0.0
    %1739 = vmatprep.subr.mxu0 0.0
    %1740 = vmatpush2.msra.mxu0 0.0
    %1741 = vmatprep.subr.mxu0 0.0
    %1742 = vmatpush2.msra.mxu0 0.0
    %1743 = vmatprep.subr.mxu0 0.0
    %1744 = vmatpush2.msra.mxu0 0.0
    %1745 = vmatprep.subr.mxu0 0.0
    %1746 = vmatpush2.msra.mxu0 0.0
    %1747 = vmatprep.subr.mxu0 0.0
    %1748 = vmatpush2.msra.mxu0 0.0
    %1749 = vmatprep.subr.mxu0 0.0
    %1750 = vmatpush2.msra.mxu0 0.0
    %1751 = vmatprep.subr.mxu0 0.0
    %1752 = vmatpush2.msra.mxu0 0.0
    %1753 = vmatprep.subr.mxu0 0.0
    %1754 = vmatpush2.msra.mxu0 0.0
    %1755 = vmatprep.subr.mxu0 0.0
    %1756 = vmatpush2.msra.mxu0 0.0
    %1757 = vmatprep.subr.mxu0 0.0
    %1758 = vmatpush2.msra.mxu0 0.0
    %1759 = vmatprep.subr.mxu0 0.0
    %1760 = vmatpush2.msra.mxu0 0.0
    %1761 = vmatprep.mubr.f32.mxu0 0.0
    %1762 = vmatmul.mubr.f32.gmra.mxu0 %v1695
    %v1763 = vpop.f32.mrf.mxu0
    %v1764 = vadd.f32 0.0, %v1763
    %v1765 = vpop.f32.mrf.mxu0
    %1766 = vdwg.mxu0
    %1767 = vrot.lane.b32.xlu0 %v440, 32
    %v1768 = vpop.permute.xlu0 %1767
    %v1771 = vsel %vm627, %v1687, 0
    %1773 = vmatprep.subr.mxu0 0.0
    %1774 = vmatpush1.msra.mxu0 0.0
    %1775 = vmatprep.subr.mxu0 0.0
    %1776 = vmatpush1.msra.mxu0 0.0
    %1777 = vmatprep.subr.mxu0 0.0
    %1778 = vmatpush1.msra.mxu0 0.0
    %1779 = vmatprep.subr.mxu0 0.0
    %1780 = vmatpush1.msra.mxu0 0.0
    %1781 = vmatprep.subr.mxu0 0.0
    %1782 = vmatpush1.msra.mxu0 0.0
    %1783 = vmatprep.subr.mxu0 0.0
    %1784 = vmatpush1.msra.mxu0 0.0
    %1785 = vmatprep.subr.mxu0 0.0
    %1786 = vmatpush1.msra.mxu0 0.0
    %1787 = vmatprep.subr.mxu0 0.0
    %1788 = vmatpush1.msra.mxu0 0.0
    %1789 = vmatprep.subr.mxu0 0.0
    %1790 = vmatpush1.msra.mxu0 0.0
    %1791 = vmatprep.subr.mxu0 0.0
    %1792 = vmatpush1.msra.mxu0 0.0
    %1793 = vmatprep.subr.mxu0 0.0
    %1794 = vmatpush1.msra.mxu0 0.0
    %1795 = vmatprep.subr.mxu0 0.0
    %1796 = vmatpush1.msra.mxu0 0.0
    %1797 = vmatprep.subr.mxu0 0.0
    %1798 = vmatpush1.msra.mxu0 0.0
    %1799 = vmatprep.subr.mxu0 0.0
    %1800 = vmatpush1.msra.mxu0 0.0
    %1801 = vmatprep.subr.mxu0 0.0
    %1802 = vmatpush1.msra.mxu0 0.0
    %1803 = vmatprep.subr.mxu0 0.0
    %1804 = vmatpush1.msra.mxu0 %v1768
    %1805 = vmatprep.subr.mxu0 0.0
    %1806 = vmatpush2.msra.mxu0 0.0
    %1807 = vmatprep.subr.mxu0 0.0
    %1808 = vmatpush2.msra.mxu0 0.0
    %1809 = vmatprep.subr.mxu0 0.0
    %1810 = vmatpush2.msra.mxu0 0.0
    %1811 = vmatprep.subr.mxu0 0.0
    %1812 = vmatpush2.msra.mxu0 0.0
    %1813 = vmatprep.subr.mxu0 0.0
    %1814 = vmatpush2.msra.mxu0 0.0
    %1815 = vmatprep.subr.mxu0 0.0
    %1816 = vmatpush2.msra.mxu0 0.0
    %1817 = vmatprep.subr.mxu0 0.0
    %1818 = vmatpush2.msra.mxu0 0.0
    %1819 = vmatprep.subr.mxu0 0.0
    %1820 = vmatpush2.msra.mxu0 0.0
    %1821 = vmatprep.subr.mxu0 0.0
    %1822 = vmatpush2.msra.mxu0 0.0
    %1823 = vmatprep.subr.mxu0 0.0
    %1824 = vmatpush2.msra.mxu0 0.0
    %1825 = vmatprep.subr.mxu0 0.0
    %1826 = vmatpush2.msra.mxu0 0.0
    %1827 = vmatprep.subr.mxu0 0.0
    %1828 = vmatpush2.msra.mxu0 0.0
    %1829 = vmatprep.subr.mxu0 0.0
    %1830 = vmatpush2.msra.mxu0 0.0
    %1831 = vmatprep.subr.mxu0 0.0
    %1832 = vmatpush2.msra.mxu0 0.0
    %1833 = vmatprep.subr.mxu0 0.0
    %1834 = vmatpush2.msra.mxu0 0.0
    %1835 = vmatprep.subr.mxu0 0.0
    %1836 = vmatpush2.msra.mxu0 0.0
    %1837 = vmatprep.mubr.f32.mxu0 0.0
    %1838 = vmatmul.mubr.f32.gmra.mxu0 %v1771
    %v1839 = vpop.f32.mrf.mxu0
    %v1840 = vadd.f32 0.0, %v1839
    %v1841 = vpop.f32.mrf.mxu0
    %1842 = vdwg.mxu0
    %1845 = vrot.lane.b32.xlu0 %v1764, 96
    %v1846 = vpop.permute.xlu0 %1845
    %1847 = vrot.lane.b32.xlu0 %v1840, 96
    %v1848 = vpop.permute.xlu0 %1847
    %vm1851 = vcmask 1048320
    %1852 = vst.msk [vmem:[#allocation2] sm:$0xff] %vm1851, %v1846
    %1853 = vst.msk [vmem:[#allocation2 + $0x8] sm:$0xff] %vm1851, %v1848
    %v1854 = vld [vmem:[#allocation2] sm:$0xff]
    %v1855 = vld [vmem:[#allocation2 + $0x8] sm:$0xff]
    %v1856 = vld [vmem:[#allocation11] sm:$0xff]
    %v1857 = vld [vmem:[#allocation11 + $0x8] sm:$0xff]
    %v1858 = vld [vmem:[#allocation11 + $0x10] sm:$0xff]
    %v1859 = vld [vmem:[#allocation11 + $0x18] sm:$0xff]
    %v1860 = vld [vmem:[#allocation11 + $0x20] sm:$0xff]
    %v1861 = vld [vmem:[#allocation11 + $0x28] sm:$0xff]
    %v1862 = vld [vmem:[#allocation11 + $0x30] sm:$0xff]
    %v1863 = vld [vmem:[#allocation11 + $0x38] sm:$0xff]
    %v1864 = vld [vmem:[#allocation11 + $0x40] sm:$0xff]
    %v1865 = vld [vmem:[#allocation11 + $0x48] sm:$0xff]
    %v1866 = vld [vmem:[#allocation11 + $0x50] sm:$0xff]
    %v1867 = vld [vmem:[#allocation11 + $0x58] sm:$0xff]
    %v1868 = vld [vmem:[#allocation11 + $0x60] sm:$0xff]
    %v1869 = vld [vmem:[#allocation11 + $0x68] sm:$0xff]
    %v1870 = vld [vmem:[#allocation11 + $0x70] sm:$0xff]
    %v1871 = vld [vmem:[#allocation11 + $0x78] sm:$0xff]
    %v1872 = vld [vmem:[%s6] sm:$0x1]
    %v1874 = vlaneseq
    %v1875 = vshrl.u32 %v1874, 7
    %v1876 = vsub.s32 0, %v1875
    %v1877 = vrot.slane %v1872, %v1876
    %1879 = vmatprep.subr.mxu0 0.0
    %1880 = vmatpush1.msra.mxu0 %v1871
    %1881 = vmatprep.subr.mxu0 0.0
    %1882 = vmatpush1.msra.mxu0 %v1870
    %1883 = vmatprep.subr.mxu0 0.0
    %1884 = vmatpush1.msra.mxu0 %v1869
    %1885 = vmatprep.subr.mxu0 0.0
    %1886 = vmatpush1.msra.mxu0 %v1868
    %1887 = vmatprep.subr.mxu0 0.0
    %1888 = vmatpush1.msra.mxu0 %v1867
    %1889 = vmatprep.subr.mxu0 0.0
    %1890 = vmatpush1.msra.mxu0 %v1866
    %1891 = vmatprep.subr.mxu0 0.0
    %1892 = vmatpush1.msra.mxu0 %v1865
    %1893 = vmatprep.subr.mxu0 0.0
    %1894 = vmatpush1.msra.mxu0 %v1864
    %1895 = vmatprep.subr.mxu0 0.0
    %1896 = vmatpush1.msra.mxu0 %v1863
    %1897 = vmatprep.subr.mxu0 0.0
    %1898 = vmatpush1.msra.mxu0 %v1862
    %1899 = vmatprep.subr.mxu0 0.0
    %1900 = vmatpush1.msra.mxu0 %v1861
    %1901 = vmatprep.subr.mxu0 0.0
    %1902 = vmatpush1.msra.mxu0 %v1860
    %1903 = vmatprep.subr.mxu0 0.0
    %1904 = vmatpush1.msra.mxu0 %v1859
    %1905 = vmatprep.subr.mxu0 0.0
    %1906 = vmatpush1.msra.mxu0 %v1858
    %1907 = vmatprep.subr.mxu0 0.0
    %1908 = vmatpush1.msra.mxu0 %v1857
    %1909 = vmatprep.subr.mxu0 0.0
    %1910 = vmatpush1.msra.mxu0 %v1856
    %1911 = vmatprep.subr.mxu0 0.0
    %1912 = vmatpush2.msra.mxu0 0.0
    %1913 = vmatprep.subr.mxu0 0.0
    %1914 = vmatpush2.msra.mxu0 0.0
    %1915 = vmatprep.subr.mxu0 0.0
    %1916 = vmatpush2.msra.mxu0 0.0
    %1917 = vmatprep.subr.mxu0 0.0
    %1918 = vmatpush2.msra.mxu0 0.0
    %1919 = vmatprep.subr.mxu0 0.0
    %1920 = vmatpush2.msra.mxu0 0.0
    %1921 = vmatprep.subr.mxu0 0.0
    %1922 = vmatpush2.msra.mxu0 0.0
    %1923 = vmatprep.subr.mxu0 0.0
    %1924 = vmatpush2.msra.mxu0 0.0
    %1925 = vmatprep.subr.mxu0 0.0
    %1926 = vmatpush2.msra.mxu0 0.0
    %1927 = vmatprep.subr.mxu0 0.0
    %1928 = vmatpush2.msra.mxu0 0.0
    %1929 = vmatprep.subr.mxu0 0.0
    %1930 = vmatpush2.msra.mxu0 0.0
    %1931 = vmatprep.subr.mxu0 0.0
    %1932 = vmatpush2.msra.mxu0 0.0
    %1933 = vmatprep.subr.mxu0 0.0
    %1934 = vmatpush2.msra.mxu0 0.0
    %1935 = vmatprep.subr.mxu0 0.0
    %1936 = vmatpush2.msra.mxu0 0.0
    %1937 = vmatprep.subr.mxu0 0.0
    %1938 = vmatpush2.msra.mxu0 0.0
    %1939 = vmatprep.subr.mxu0 0.0
    %1940 = vmatpush2.msra.mxu0 0.0
    %1941 = vmatprep.subr.mxu0 0.0
    %1942 = vmatpush2.msra.mxu0 0.0
    %1943 = vmatprep.mubr.f32.mxu0 0.0
    %1944 = vmatmul.mubr.f32.gmra.mxu0 %v1854
    %v1945 = vpop.f32.mrf.mxu0
    %v1946 = vadd.f32 %v1877, %v1945
    %v1947 = vpop.f32.mrf.mxu0
    %1948 = vmatprep.mubr.f32.mxu0 0.0
    %1949 = vmatmul.mubr.f32.gmra.mxu0 %v1855
    %v1950 = vpop.f32.mrf.mxu0
    %v1951 = vadd.f32 %v1877, %v1950
    %v1952 = vpop.f32.mrf.mxu0
    %1953 = vdwg.mxu0
    %v1954 = vld [vmem:[#allocation12] sm:$0xff]
    %v1955 = vld [vmem:[#allocation12 + $0x8] sm:$0xff]
    %v1956 = vld [vmem:[#allocation12 + $0x10] sm:$0xff]
    %v1957 = vld [vmem:[#allocation12 + $0x18] sm:$0xff]
    %v1958 = vld [vmem:[#allocation12 + $0x20] sm:$0xff]
    %v1959 = vld [vmem:[#allocation12 + $0x28] sm:$0xff]
    %v1960 = vld [vmem:[#allocation12 + $0x30] sm:$0xff]
    %v1961 = vld [vmem:[#allocation12 + $0x38] sm:$0xff]
    %v1962 = vld [vmem:[#allocation12 + $0x40] sm:$0xff]
    %v1963 = vld [vmem:[#allocation12 + $0x48] sm:$0xff]
    %v1964 = vld [vmem:[#allocation12 + $0x50] sm:$0xff]
    %v1965 = vld [vmem:[#allocation12 + $0x58] sm:$0xff]
    %v1966 = vld [vmem:[#allocation12 + $0x60] sm:$0xff]
    %v1967 = vld [vmem:[#allocation12 + $0x68] sm:$0xff]
    %v1968 = vld [vmem:[#allocation12 + $0x70] sm:$0xff]
    %v1969 = vld [vmem:[#allocation12 + $0x78] sm:$0xff]
    %v1970 = vld [vmem:[%s8] sm:$0x1]
    %v1972 = vlaneseq
    %v1973 = vshrl.u32 %v1972, 7
    %v1974 = vsub.s32 0, %v1973
    %v1975 = vrot.slane %v1970, %v1974
    %1977 = vmatprep.subr.mxu0 0.0
    %1978 = vmatpush1.msra.mxu0 %v1969
    %1979 = vmatprep.subr.mxu0 0.0
    %1980 = vmatpush1.msra.mxu0 %v1968
    %1981 = vmatprep.subr.mxu0 0.0
    %1982 = vmatpush1.msra.mxu0 %v1967
    %1983 = vmatprep.subr.mxu0 0.0
    %1984 = vmatpush1.msra.mxu0 %v1966
    %1985 = vmatprep.subr.mxu0 0.0
    %1986 = vmatpush1.msra.mxu0 %v1965
    %1987 = vmatprep.subr.mxu0 0.0
    %1988 = vmatpush1.msra.mxu0 %v1964
    %1989 = vmatprep.subr.mxu0 0.0
    %1990 = vmatpush1.msra.mxu0 %v1963
    %1991 = vmatprep.subr.mxu0 0.0
    %1992 = vmatpush1.msra.mxu0 %v1962
    %1993 = vmatprep.subr.mxu0 0.0
    %1994 = vmatpush1.msra.mxu0 %v1961
    %1995 = vmatprep.subr.mxu0 0.0
    %1996 = vmatpush1.msra.mxu0 %v1960
    %1997 = vmatprep.subr.mxu0 0.0
    %1998 = vmatpush1.msra.mxu0 %v1959
    %1999 = vmatprep.subr.mxu0 0.0
    %2000 = vmatpush1.msra.mxu0 %v1958
    %2001 = vmatprep.subr.mxu0 0.0
    %2002 = vmatpush1.msra.mxu0 %v1957
    %2003 = vmatprep.subr.mxu0 0.0
    %2004 = vmatpush1.msra.mxu0 %v1956
    %2005 = vmatprep.subr.mxu0 0.0
    %2006 = vmatpush1.msra.mxu0 %v1955
    %2007 = vmatprep.subr.mxu0 0.0
    %2008 = vmatpush1.msra.mxu0 %v1954
    %2009 = vmatprep.subr.mxu0 0.0
    %2010 = vmatpush2.msra.mxu0 0.0
    %2011 = vmatprep.subr.mxu0 0.0
    %2012 = vmatpush2.msra.mxu0 0.0
    %2013 = vmatprep.subr.mxu0 0.0
    %2014 = vmatpush2.msra.mxu0 0.0
    %2015 = vmatprep.subr.mxu0 0.0
    %2016 = vmatpush2.msra.mxu0 0.0
    %2017 = vmatprep.subr.mxu0 0.0
    %2018 = vmatpush2.msra.mxu0 0.0
    %2019 = vmatprep.subr.mxu0 0.0
    %2020 = vmatpush2.msra.mxu0 0.0
    %2021 = vmatprep.subr.mxu0 0.0
    %2022 = vmatpush2.msra.mxu0 0.0
    %2023 = vmatprep.subr.mxu0 0.0
    %2024 = vmatpush2.msra.mxu0 0.0
    %2025 = vmatprep.subr.mxu0 0.0
    %2026 = vmatpush2.msra.mxu0 0.0
    %2027 = vmatprep.subr.mxu0 0.0
    %2028 = vmatpush2.msra.mxu0 0.0
    %2029 = vmatprep.subr.mxu0 0.0
    %2030 = vmatpush2.msra.mxu0 0.0
    %2031 = vmatprep.subr.mxu0 0.0
    %2032 = vmatpush2.msra.mxu0 0.0
    %2033 = vmatprep.subr.mxu0 0.0
    %2034 = vmatpush2.msra.mxu0 0.0
    %2035 = vmatprep.subr.mxu0 0.0
    %2036 = vmatpush2.msra.mxu0 0.0
    %2037 = vmatprep.subr.mxu0 0.0
    %2038 = vmatpush2.msra.mxu0 0.0
    %2039 = vmatprep.subr.mxu0 0.0
    %2040 = vmatpush2.msra.mxu0 0.0
    %2041 = vmatprep.mubr.f32.mxu0 0.0
    %2042 = vmatmul.mubr.f32.gmra.mxu0 %v1946
    %v2043 = vpop.f32.mrf.mxu0
    %v2044 = vadd.f32 %v1975, %v2043
    %v2045 = vpop.f32.mrf.mxu0
    %2046 = vmatprep.mubr.f32.mxu0 0.0
    %2047 = vmatmul.mubr.f32.gmra.mxu0 %v1951
    %v2048 = vpop.f32.mrf.mxu0
    %v2049 = vadd.f32 %v1975, %v2048
    %v2050 = vpop.f32.mrf.mxu0
    %2051 = vdwg.mxu0
    %v2052 = vxor.u32 %v2044, 2147483648
    %v2053 = vxor.u32 %v2049, 2147483648
    %v2054 = vmul.f32 %v2052, 1.442695
    %v2055 = vpow.pop %v2054
    %v2056 = vmul.f32 %v2053, 1.442695
    %v2057 = vpow.pop %v2056
    %v2058 = vadd.f32 %v2055, 1.0
    %v2059 = vadd.f32 %v2057, 1.0
    %v2060 = vrcp.pop %v2058
    %v2061 = vmul.f32 1.0, %v2060
    %v2062 = vrcp.pop %v2059
    %v2063 = vmul.f32 1.0, %v2062
    %v2064 = vmul.f32 %v2061, %v200
    %v2065 = vmul.f32 %v2063, %v201
    %v2066 = vadd.f32 %v1946, %v2064
    %v2067 = vadd.f32 %v1951, %v2065
    %v2068 = vld [vmem:[%s9] sm:$0x1]
    %v2069 = vld [vmem:[%s10] sm:$0x1]
    %2070 = vadd.xlane.f32.xlu0 %v2066
    %v2071 = vpop.xlane.xlu0 %2070
    %2072 = vadd.xlane.f32.xlu0 %v2067
    %v2073 = vpop.xlane.xlu0 %2072
    %v2074 = vmul.f32 %v2071, %v208
    %v2075 = vmul.f32 %v2073, %v208
    %v2076 = vsub.f32 %v2066, %v2074
    %v2077 = vsub.f32 %v2067, %v2075
    %v2078 = vmul.f32 %v2076, %v2076
    %v2079 = vmul.f32 %v2077, %v2077
    %2080 = vadd.xlane.f32.xlu0 %v2078
    %v2081 = vpop.xlane.xlu0 %2080
    %2082 = vadd.xlane.f32.xlu0 %v2079
    %v2083 = vpop.xlane.xlu0 %2082
    %v2084 = vmul.f32 %v2081, %v208
    %v2085 = vmul.f32 %v2083, %v208
    %v2086 = vadd.f32 %v2084, 1e-05
    %v2087 = vadd.f32 %v2085, 1e-05
    %v2088 = vrsqrt.pop %v2086
    %v2089 = vrsqrt.pop %v2087
    %v2090 = vmul.f32 %v2076, %v2088
    %v2091 = vmul.f32 %v2077, %v2089
    %v2093 = vlaneseq
    %v2094 = vshrl.u32 %v2093, 7
    %v2095 = vsub.s32 0, %v2094
    %v2096 = vrot.slane %v2068, %v2095
    %v2098 = vmul.f32 %v2090, %v2096
    %v2099 = vmul.f32 %v2091, %v2096
    %v2101 = vlaneseq
    %v2102 = vshrl.u32 %v2101, 7
    %v2103 = vsub.s32 0, %v2102
    %v2104 = vrot.slane %v2069, %v2103
    %v2106 = vadd.f32 %v2098, %v2104
    %v2107 = vadd.f32 %v2099, %v2104
    %v2108 = vld [vmem:[#allocation14] sm:$0xff]
    %v2109 = vld [vmem:[#allocation14 + $0x8] sm:$0xff]
    %v2110 = vld [vmem:[#allocation14 + $0x10] sm:$0xff]
    %v2111 = vld [vmem:[#allocation14 + $0x18] sm:$0xff]
    %v2112 = vld [vmem:[#allocation14 + $0x20] sm:$0xff]
    %v2113 = vld [vmem:[#allocation14 + $0x28] sm:$0xff]
    %v2114 = vld [vmem:[#allocation14 + $0x30] sm:$0xff]
    %v2115 = vld [vmem:[#allocation14 + $0x38] sm:$0xff]
    %v2116 = vld [vmem:[#allocation14 + $0x40] sm:$0xff]
    %v2117 = vld [vmem:[#allocation14 + $0x48] sm:$0xff]
    %v2118 = vld [vmem:[#allocation14 + $0x50] sm:$0xff]
    %v2119 = vld [vmem:[#allocation14 + $0x58] sm:$0xff]
    %v2120 = vld [vmem:[#allocation14 + $0x60] sm:$0xff]
    %v2121 = vld [vmem:[#allocation14 + $0x68] sm:$0xff]
    %v2122 = vld [vmem:[#allocation14 + $0x70] sm:$0xff]
    %v2123 = vld [vmem:[#allocation14 + $0x78] sm:$0xff]
    %v2124 = vld [vmem:[#allocation14 + $0x80] sm:$0xff]
    %v2125 = vld [vmem:[#allocation14 + $0x88] sm:$0xff]
    %v2126 = vld [vmem:[#allocation14 + $0x90] sm:$0xff]
    %v2127 = vld [vmem:[#allocation14 + $0x98] sm:$0xff]
    %v2128 = vld [vmem:[#allocation14 + $0xa0] sm:$0xff]
    %v2129 = vld [vmem:[#allocation14 + $0xa8] sm:$0xff]
    %v2130 = vld [vmem:[#allocation14 + $0xb0] sm:$0xff]
    %v2131 = vld [vmem:[#allocation14 + $0xb8] sm:$0xff]
    %v2132 = vld [vmem:[#allocation14 + $0xc0] sm:$0xff]
    %v2133 = vld [vmem:[#allocation14 + $0xc8] sm:$0xff]
    %v2134 = vld [vmem:[#allocation14 + $0xd0] sm:$0xff]
    %v2135 = vld [vmem:[#allocation14 + $0xd8] sm:$0xff]
    %v2136 = vld [vmem:[#allocation14 + $0xe0] sm:$0xff]
    %v2137 = vld [vmem:[#allocation14 + $0xe8] sm:$0xff]
    %v2138 = vld [vmem:[#allocation14 + $0xf0] sm:$0xff]
    %v2139 = vld [vmem:[#allocation14 + $0xf8] sm:$0xff]
    %v2140 = vld [vmem:[#allocation14 + $0x100] sm:$0xff]
    %v2141 = vld [vmem:[#allocation14 + $0x108] sm:$0xff]
    %v2142 = vld [vmem:[#allocation14 + $0x110] sm:$0xff]
    %v2143 = vld [vmem:[#allocation14 + $0x118] sm:$0xff]
    %v2144 = vld [vmem:[#allocation14 + $0x120] sm:$0xff]
    %v2145 = vld [vmem:[#allocation14 + $0x128] sm:$0xff]
    %v2146 = vld [vmem:[#allocation14 + $0x130] sm:$0xff]
    %v2147 = vld [vmem:[#allocation14 + $0x138] sm:$0xff]
    %v2148 = vld [vmem:[#allocation14 + $0x140] sm:$0xff]
    %v2149 = vld [vmem:[#allocation14 + $0x148] sm:$0xff]
    %v2150 = vld [vmem:[#allocation14 + $0x150] sm:$0xff]
    %v2151 = vld [vmem:[#allocation14 + $0x158] sm:$0xff]
    %v2152 = vld [vmem:[#allocation14 + $0x160] sm:$0xff]
    %v2153 = vld [vmem:[#allocation14 + $0x168] sm:$0xff]
    %v2154 = vld [vmem:[#allocation14 + $0x170] sm:$0xff]
    %v2155 = vld [vmem:[#allocation14 + $0x178] sm:$0xff]
    %v2156 = vld [vmem:[#allocation14 + $0x180] sm:$0xff]
    %v2157 = vld [vmem:[#allocation14 + $0x188] sm:$0xff]
    %v2158 = vld [vmem:[#allocation14 + $0x190] sm:$0xff]
    %v2159 = vld [vmem:[#allocation14 + $0x198] sm:$0xff]
    %v2160 = vld [vmem:[#allocation14 + $0x1a0] sm:$0xff]
    %v2161 = vld [vmem:[#allocation14 + $0x1a8] sm:$0xff]
    %v2162 = vld [vmem:[#allocation14 + $0x1b0] sm:$0xff]
    %v2163 = vld [vmem:[#allocation14 + $0x1b8] sm:$0xff]
    %v2164 = vld [vmem:[#allocation14 + $0x1c0] sm:$0xff]
    %v2165 = vld [vmem:[#allocation14 + $0x1c8] sm:$0xff]
    %v2166 = vld [vmem:[#allocation14 + $0x1d0] sm:$0xff]
    %v2167 = vld [vmem:[#allocation14 + $0x1d8] sm:$0xff]
    %v2168 = vld [vmem:[#allocation14 + $0x1e0] sm:$0xff]
    %v2169 = vld [vmem:[#allocation14 + $0x1e8] sm:$0xff]
    %v2170 = vld [vmem:[#allocation14 + $0x1f0] sm:$0xff]
    %v2171 = vld [vmem:[#allocation14 + $0x1f8] sm:$0xff]
    %v2172 = vld [vmem:[%s12] sm:$0xf]
    %v2174 = vlaneseq
    %v2175 = vshrl.u32 %v2174, 7
    %v2176 = vsub.s32 0, %v2175
    %v2177 = vrot.slane %v2172, %v2176
    %v2178 = vlaneseq
    %v2179 = vshrl.u32 %v2178, 7
    %v2180 = vsub.s32 1, %v2179
    %v2181 = vrot.slane %v2172, %v2180
    %v2182 = vlaneseq
    %v2183 = vshrl.u32 %v2182, 7
    %v2184 = vsub.s32 2, %v2183
    %v2185 = vrot.slane %v2172, %v2184
    %v2186 = vlaneseq
    %v2187 = vshrl.u32 %v2186, 7
    %v2188 = vsub.s32 3, %v2187
    %v2189 = vrot.slane %v2172, %v2188
    %2194 = vmatprep.subr.mxu0 %v2169
    %2195 = vmatpush1.msra.mxu0 %v2168
    %2196 = vmatprep.subr.mxu0 %v2165
    %2197 = vmatpush1.msra.mxu0 %v2164
    %2198 = vmatprep.subr.mxu0 %v2161
    %2199 = vmatpush1.msra.mxu0 %v2160
    %2200 = vmatprep.subr.mxu0 %v2157
    %2201 = vmatpush1.msra.mxu0 %v2156
    %2202 = vmatprep.subr.mxu0 %v2153
    %2203 = vmatpush1.msra.mxu0 %v2152
    %2204 = vmatprep.subr.mxu0 %v2149
    %2205 = vmatpush1.msra.mxu0 %v2148
    %2206 = vmatprep.subr.mxu0 %v2145
    %2207 = vmatpush1.msra.mxu0 %v2144
    %2208 = vmatprep.subr.mxu0 %v2141
    %2209 = vmatpush1.msra.mxu0 %v2140
    %2210 = vmatprep.subr.mxu0 %v2137
    %2211 = vmatpush1.msra.mxu0 %v2136
    %2212 = vmatprep.subr.mxu0 %v2133
    %2213 = vmatpush1.msra.mxu0 %v2132
    %2214 = vmatprep.subr.mxu0 %v2129
    %2215 = vmatpush1.msra.mxu0 %v2128
    %2216 = vmatprep.subr.mxu0 %v2125
    %2217 = vmatpush1.msra.mxu0 %v2124
    %2218 = vmatprep.subr.mxu0 %v2121
    %2219 = vmatpush1.msra.mxu0 %v2120
    %2220 = vmatprep.subr.mxu0 %v2117
    %2221 = vmatpush1.msra.mxu0 %v2116
    %2222 = vmatprep.subr.mxu0 %v2113
    %2223 = vmatpush1.msra.mxu0 %v2112
    %2224 = vmatprep.subr.mxu0 %v2109
    %2225 = vmatpush1.msra.mxu0 %v2108
    %2226 = vmatprep.subr.mxu0 0.0
    %2227 = vmatpush2.msra.mxu0 0.0
    %2228 = vmatprep.subr.mxu0 0.0
    %2229 = vmatpush2.msra.mxu0 0.0
    %2230 = vmatprep.subr.mxu0 0.0
    %2231 = vmatpush2.msra.mxu0 0.0
    %2232 = vmatprep.subr.mxu0 0.0
    %2233 = vmatpush2.msra.mxu0 0.0
    %2234 = vmatprep.subr.mxu0 0.0
    %2235 = vmatpush2.msra.mxu0 0.0
    %2236 = vmatprep.subr.mxu0 0.0
    %2237 = vmatpush2.msra.mxu0 0.0
    %2238 = vmatprep.subr.mxu0 0.0
    %2239 = vmatpush2.msra.mxu0 0.0
    %2240 = vmatprep.subr.mxu0 0.0
    %2241 = vmatpush2.msra.mxu0 0.0
    %2242 = vmatprep.subr.mxu0 0.0
    %2243 = vmatpush2.msra.mxu0 0.0
    %2244 = vmatprep.subr.mxu0 0.0
    %2245 = vmatpush2.msra.mxu0 0.0
    %2246 = vmatprep.subr.mxu0 0.0
    %2247 = vmatpush2.msra.mxu0 0.0
    %2248 = vmatprep.subr.mxu0 0.0
    %2249 = vmatpush2.msra.mxu0 0.0
    %2250 = vmatprep.subr.mxu0 0.0
    %2251 = vmatpush2.msra.mxu0 0.0
    %2252 = vmatprep.subr.mxu0 0.0
    %2253 = vmatpush2.msra.mxu0 0.0
    %2254 = vmatprep.subr.mxu0 0.0
    %2255 = vmatpush2.msra.mxu0 0.0
    %2256 = vmatprep.subr.mxu0 0.0
    %2257 = vmatpush2.msra.mxu0 0.0
    %2258 = vmatprep.mubr.f32.mxu0 0.0
    %2259 = vmatmul.mubr.f32.gmra.mxu0 %v2106
    %v2260 = vpop.f32.mrf.mxu0
    %v2261 = vadd.f32 %v2177, %v2260
    %v2262 = vpop.f32.mrf.mxu0
    %v2263 = vadd.f32 %v2181, %v2262
    %2264 = vmatprep.mubr.f32.mxu0 0.0
    %2265 = vmatmul.mubr.f32.gmra.mxu0 %v2107
    %v2266 = vpop.f32.mrf.mxu0
    %v2267 = vadd.f32 %v2177, %v2266
    %v2268 = vpop.f32.mrf.mxu0
    %v2269 = vadd.f32 %v2181, %v2268
    %2270 = vdwg.mxu0
    %2271 = vmatprep.subr.mxu0 %v2171
    %2272 = vmatpush1.msra.mxu0 %v2170
    %2273 = vmatprep.subr.mxu0 %v2167
    %2274 = vmatpush1.msra.mxu0 %v2166
    %2275 = vmatprep.subr.mxu0 %v2163
    %2276 = vmatpush1.msra.mxu0 %v2162
    %2277 = vmatprep.subr.mxu0 %v2159
    %2278 = vmatpush1.msra.mxu0 %v2158
    %2279 = vmatprep.subr.mxu0 %v2155
    %2280 = vmatpush1.msra.mxu0 %v2154
    %2281 = vmatprep.subr.mxu0 %v2151
    %2282 = vmatpush1.msra.mxu0 %v2150
    %2283 = vmatprep.subr.mxu0 %v2147
    %2284 = vmatpush1.msra.mxu0 %v2146
    %2285 = vmatprep.subr.mxu0 %v2143
    %2286 = vmatpush1.msra.mxu0 %v2142
    %2287 = vmatprep.subr.mxu0 %v2139
    %2288 = vmatpush1.msra.mxu0 %v2138
    %2289 = vmatprep.subr.mxu0 %v2135
    %2290 = vmatpush1.msra.mxu0 %v2134
    %2291 = vmatprep.subr.mxu0 %v2131
    %2292 = vmatpush1.msra.mxu0 %v2130
    %2293 = vmatprep.subr.mxu0 %v2127
    %2294 = vmatpush1.msra.mxu0 %v2126
    %2295 = vmatprep.subr.mxu0 %v2123
    %2296 = vmatpush1.msra.mxu0 %v2122
    %2297 = vmatprep.subr.mxu0 %v2119
    %2298 = vmatpush1.msra.mxu0 %v2118
    %2299 = vmatprep.subr.mxu0 %v2115
    %2300 = vmatpush1.msra.mxu0 %v2114
    %2301 = vmatprep.subr.mxu0 %v2111
    %2302 = vmatpush1.msra.mxu0 %v2110
    %2303 = vmatprep.subr.mxu0 0.0
    %2304 = vmatpush2.msra.mxu0 0.0
    %2305 = vmatprep.subr.mxu0 0.0
    %2306 = vmatpush2.msra.mxu0 0.0
    %2307 = vmatprep.subr.mxu0 0.0
    %2308 = vmatpush2.msra.mxu0 0.0
    %2309 = vmatprep.subr.mxu0 0.0
    %2310 = vmatpush2.msra.mxu0 0.0
    %2311 = vmatprep.subr.mxu0 0.0
    %2312 = vmatpush2.msra.mxu0 0.0
    %2313 = vmatprep.subr.mxu0 0.0
    %2314 = vmatpush2.msra.mxu0 0.0
    %2315 = vmatprep.subr.mxu0 0.0
    %2316 = vmatpush2.msra.mxu0 0.0
    %2317 = vmatprep.subr.mxu0 0.0
    %2318 = vmatpush2.msra.mxu0 0.0
    %2319 = vmatprep.subr.mxu0 0.0
    %2320 = vmatpush2.msra.mxu0 0.0
    %2321 = vmatprep.subr.mxu0 0.0
    %2322 = vmatpush2.msra.mxu0 0.0
    %2323 = vmatprep.subr.mxu0 0.0
    %2324 = vmatpush2.msra.mxu0 0.0
    %2325 = vmatprep.subr.mxu0 0.0
    %2326 = vmatpush2.msra.mxu0 0.0
    %2327 = vmatprep.subr.mxu0 0.0
    %2328 = vmatpush2.msra.mxu0 0.0
    %2329 = vmatprep.subr.mxu0 0.0
    %2330 = vmatpush2.msra.mxu0 0.0
    %2331 = vmatprep.subr.mxu0 0.0
    %2332 = vmatpush2.msra.mxu0 0.0
    %2333 = vmatprep.subr.mxu0 0.0
    %2334 = vmatpush2.msra.mxu0 0.0
    %2335 = vmatprep.mubr.f32.mxu0 0.0
    %2336 = vmatmul.mubr.f32.gmra.mxu0 %v2106
    %v2337 = vpop.f32.mrf.mxu0
    %v2338 = vadd.f32 %v2185, %v2337
    %v2339 = vpop.f32.mrf.mxu0
    %v2340 = vadd.f32 %v2189, %v2339
    %2341 = vmatprep.mubr.f32.mxu0 0.0
    %2342 = vmatmul.mubr.f32.gmra.mxu0 %v2107
    %v2343 = vpop.f32.mrf.mxu0
    %v2344 = vadd.f32 %v2185, %v2343
    %v2345 = vpop.f32.mrf.mxu0
    %v2346 = vadd.f32 %v2189, %v2345
    %2347 = vdwg.mxu0
    %v2348 = vmul.f32 %v2261, 0.5
    %v2349 = vmul.f32 %v2263, 0.5
    %v2350 = vmul.f32 %v2338, 0.5
    %v2351 = vmul.f32 %v2340, 0.5
    %v2352 = vmul.f32 %v2267, 0.5
    %v2353 = vmul.f32 %v2269, 0.5
    %v2354 = vmul.f32 %v2344, 0.5
    %v2355 = vmul.f32 %v2346, 0.5
    %v2356 = vmul.f32 %v2261, 0.70710677
    %v2357 = vmul.f32 %v2263, 0.70710677
    %v2358 = vmul.f32 %v2338, 0.70710677
    %v2359 = vmul.f32 %v2340, 0.70710677
    %v2360 = vmul.f32 %v2267, 0.70710677
    %v2361 = vmul.f32 %v2269, 0.70710677
    %v2362 = vmul.f32 %v2344, 0.70710677
    %v2363 = vmul.f32 %v2346, 0.70710677
    %vm2364 = vcmp.ge.f32.partialorder %v2356, 0.0
    %vm2365 = vcmp.ge.f32.partialorder %v2357, 0.0
    %vm2366 = vcmp.ge.f32.partialorder %v2358, 0.0
    %vm2367 = vcmp.ge.f32.partialorder %v2359, 0.0
    %vm2368 = vcmp.ge.f32.partialorder %v2360, 0.0
    %vm2369 = vcmp.ge.f32.partialorder %v2361, 0.0
    %vm2370 = vcmp.ge.f32.partialorder %v2362, 0.0
    %vm2371 = vcmp.ge.f32.partialorder %v2363, 0.0
    %v2372 = vsel %vm2364, 1.0, -1.0
    %v2373 = vsel %vm2365, 1.0, -1.0
    %v2374 = vsel %vm2366, 1.0, -1.0
    %v2375 = vsel %vm2367, 1.0, -1.0
    %v2376 = vsel %vm2368, 1.0, -1.0
    %v2377 = vsel %vm2369, 1.0, -1.0
    %v2378 = vsel %vm2370, 1.0, -1.0
    %v2379 = vsel %vm2371, 1.0, -1.0
    %v2380 = vand.u32 2147483647, %v2356
    %v2381 = vand.u32 2147483647, %v2357
    %v2382 = vand.u32 2147483647, %v2358
    %v2383 = vand.u32 2147483647, %v2359
    %v2384 = vand.u32 2147483647, %v2360
    %v2385 = vand.u32 2147483647, %v2361
    %v2386 = vand.u32 2147483647, %v2362
    %v2387 = vand.u32 2147483647, %v2363
    %v2388 = vmul.f32 %v2380, 0.3275911
    %v2389 = vmul.f32 %v2381, 0.3275911
    %v2390 = vmul.f32 %v2382, 0.3275911
    %v2391 = vmul.f32 %v2383, 0.3275911
    %v2392 = vmul.f32 %v2384, 0.3275911
    %v2393 = vmul.f32 %v2385, 0.3275911
    %v2394 = vmul.f32 %v2386, 0.3275911
    %v2395 = vmul.f32 %v2387, 0.3275911
    %v2396 = vadd.f32 %v2388, 1.0
    %v2397 = vadd.f32 %v2389, 1.0
    %v2398 = vadd.f32 %v2390, 1.0
    %v2399 = vadd.f32 %v2391, 1.0
    %v2400 = vadd.f32 %v2392, 1.0
    %v2401 = vadd.f32 %v2393, 1.0
    %v2402 = vadd.f32 %v2394, 1.0
    %v2403 = vadd.f32 %v2395, 1.0
    %v2404 = vrcp.pop %v2396
    %v2405 = vmul.f32 1.0, %v2404
    %v2406 = vrcp.pop %v2397
    %v2407 = vmul.f32 1.0, %v2406
    %v2408 = vrcp.pop %v2398
    %v2409 = vmul.f32 1.0, %v2408
    %v2410 = vrcp.pop %v2399
    %v2411 = vmul.f32 1.0, %v2410
    %v2412 = vrcp.pop %v2400
    %v2413 = vmul.f32 1.0, %v2412
    %v2414 = vrcp.pop %v2401
    %v2415 = vmul.f32 1.0, %v2414
    %v2416 = vrcp.pop %v2402
    %v2417 = vmul.f32 1.0, %v2416
    %v2418 = vrcp.pop %v2403
    %v2419 = vmul.f32 1.0, %v2418
    %v2420 = vmul.f32 %v2405, 1.0614054
    %v2421 = vmul.f32 %v2407, 1.0614054
    %v2422 = vmul.f32 %v2409, 1.0614054
    %v2423 = vmul.f32 %v2411, 1.0614054
    %v2424 = vmul.f32 %v2413, 1.0614054
    %v2425 = vmul.f32 %v2415, 1.0614054
    %v2426 = vmul.f32 %v2417, 1.0614054
    %v2427 = vmul.f32 %v2419, 1.0614054
    %v2428 = vadd.f32 %v2420, -1.4531521
    %v2429 = vadd.f32 %v2421, -1.4531521
    %v2430 = vadd.f32 %v2422, -1.4531521
    %v2431 = vadd.f32 %v2423, -1.4531521
    %v2432 = vadd.f32 %v2424, -1.4531521
    %v2433 = vadd.f32 %v2425, -1.4531521
    %v2434 = vadd.f32 %v2426, -1.4531521
    %v2435 = vadd.f32 %v2427, -1.4531521
    %v2436 = vmul.f32 %v2428, %v2405
    %v2437 = vmul.f32 %v2429, %v2407
    %v2438 = vmul.f32 %v2430, %v2409
    %v2439 = vmul.f32 %v2431, %v2411
    %v2440 = vmul.f32 %v2432, %v2413
    %v2441 = vmul.f32 %v2433, %v2415
    %v2442 = vmul.f32 %v2434, %v2417
    %v2443 = vmul.f32 %v2435, %v2419
    %v2444 = vadd.f32 %v2436, 1.4214138
    %v2445 = vadd.f32 %v2437, 1.4214138
    %v2446 = vadd.f32 %v2438, 1.4214138
    %v2447 = vadd.f32 %v2439, 1.4214138
    %v2448 = vadd.f32 %v2440, 1.4214138
    %v2449 = vadd.f32 %v2441, 1.4214138
    %v2450 = vadd.f32 %v2442, 1.4214138
    %v2451 = vadd.f32 %v2443, 1.4214138
    %v2452 = vmul.f32 %v2444, %v2405
    %v2453 = vmul.f32 %v2445, %v2407
    %v2454 = vmul.f32 %v2446, %v2409
    %v2455 = vmul.f32 %v2447, %v2411
    %v2456 = vmul.f32 %v2448, %v2413
    %v2457 = vmul.f32 %v2449, %v2415
    %v2458 = vmul.f32 %v2450, %v2417
    %v2459 = vmul.f32 %v2451, %v2419
    %v2460 = vadd.f32 %v2452, -0.28449672
    %v2461 = vadd.f32 %v2453, -0.28449672
    %v2462 = vadd.f32 %v2454, -0.28449672
    %v2463 = vadd.f32 %v2455, -0.28449672
    %v2464 = vadd.f32 %v2456, -0.28449672
    %v2465 = vadd.f32 %v2457, -0.28449672
    %v2466 = vadd.f32 %v2458, -0.28449672
    %v2467 = vadd.f32 %v2459, -0.28449672
    %v2468 = vmul.f32 %v2460, %v2405
    %v2469 = vmul.f32 %v2461, %v2407
    %v2470 = vmul.f32 %v2462, %v2409
    %v2471 = vmul.f32 %v2463, %v2411
    %v2472 = vmul.f32 %v2464, %v2413
    %v2473 = vmul.f32 %v2465, %v2415
    %v2474 = vmul.f32 %v2466, %v2417
    %v2475 = vmul.f32 %v2467, %v2419
    %v2476 = vadd.f32 %v2468, 0.2548296
    %v2477 = vadd.f32 %v2469, 0.2548296
    %v2478 = vadd.f32 %v2470, 0.2548296
    %v2479 = vadd.f32 %v2471, 0.2548296
    %v2480 = vadd.f32 %v2472, 0.2548296
    %v2481 = vadd.f32 %v2473, 0.2548296
    %v2482 = vadd.f32 %v2474, 0.2548296
    %v2483 = vadd.f32 %v2475, 0.2548296
    %v2484 = vmul.f32 %v2476, %v2405
    %v2485 = vmul.f32 %v2477, %v2407
    %v2486 = vmul.f32 %v2478, %v2409
    %v2487 = vmul.f32 %v2479, %v2411
    %v2488 = vmul.f32 %v2480, %v2413
    %v2489 = vmul.f32 %v2481, %v2415
    %v2490 = vmul.f32 %v2482, %v2417
    %v2491 = vmul.f32 %v2483, %v2419
    %v2492 = vsub.f32 0.0, %v2380
    %v2493 = vsub.f32 0.0, %v2381
    %v2494 = vsub.f32 0.0, %v2382
    %v2495 = vsub.f32 0.0, %v2383
    %v2496 = vsub.f32 0.0, %v2384
    %v2497 = vsub.f32 0.0, %v2385
    %v2498 = vsub.f32 0.0, %v2386
    %v2499 = vsub.f32 0.0, %v2387
    %v2500 = vmul.f32 %v2492, %v2380
    %v2501 = vmul.f32 %v2493, %v2381
    %v2502 = vmul.f32 %v2494, %v2382
    %v2503 = vmul.f32 %v2495, %v2383
    %v2504 = vmul.f32 %v2496, %v2384
    %v2505 = vmul.f32 %v2497, %v2385
    %v2506 = vmul.f32 %v2498, %v2386
    %v2507 = vmul.f32 %v2499, %v2387
    %v2508 = vmul.f32 %v2500, 1.442695
    %v2509 = vpow.pop %v2508
    %v2510 = vmul.f32 %v2501, 1.442695
    %v2511 = vpow.pop %v2510
    %v2512 = vmul.f32 %v2502, 1.442695
    %v2513 = vpow.pop %v2512
    %v2514 = vmul.f32 %v2503, 1.442695
    %v2515 = vpow.pop %v2514
    %v2516 = vmul.f32 %v2504, 1.442695
    %v2517 = vpow.pop %v2516
    %v2518 = vmul.f32 %v2505, 1.442695
    %v2519 = vpow.pop %v2518
    %v2520 = vmul.f32 %v2506, 1.442695
    %v2521 = vpow.pop %v2520
    %v2522 = vmul.f32 %v2507, 1.442695
    %v2523 = vpow.pop %v2522
    %v2524 = vmul.f32 %v2484, %v2509
    %v2525 = vmul.f32 %v2485, %v2511
    %v2526 = vmul.f32 %v2486, %v2513
    %v2527 = vmul.f32 %v2487, %v2515
    %v2528 = vmul.f32 %v2488, %v2517
    %v2529 = vmul.f32 %v2489, %v2519
    %v2530 = vmul.f32 %v2490, %v2521
    %v2531 = vmul.f32 %v2491, %v2523
    %v2532 = vsub.f32 1.0, %v2524
    %v2533 = vsub.f32 1.0, %v2525
    %v2534 = vsub.f32 1.0, %v2526
    %v2535 = vsub.f32 1.0, %v2527
    %v2536 = vsub.f32 1.0, %v2528
    %v2537 = vsub.f32 1.0, %v2529
    %v2538 = vsub.f32 1.0, %v2530
    %v2539 = vsub.f32 1.0, %v2531
    %v2540 = vmul.f32 %v2372, %v2532
    %v2541 = vmul.f32 %v2373, %v2533
    %v2542 = vmul.f32 %v2374, %v2534
    %v2543 = vmul.f32 %v2375, %v2535
    %v2544 = vmul.f32 %v2376, %v2536
    %v2545 = vmul.f32 %v2377, %v2537
    %v2546 = vmul.f32 %v2378, %v2538
    %v2547 = vmul.f32 %v2379, %v2539
    %v2548 = vadd.f32 %v2540, 1.0
    %v2549 = vadd.f32 %v2541, 1.0
    %v2550 = vadd.f32 %v2542, 1.0
    %v2551 = vadd.f32 %v2543, 1.0
    %v2552 = vadd.f32 %v2544, 1.0
    %v2553 = vadd.f32 %v2545, 1.0
    %v2554 = vadd.f32 %v2546, 1.0
    %v2555 = vadd.f32 %v2547, 1.0
    %v2556 = vmul.f32 %v2348, %v2548
    %v2557 = vmul.f32 %v2349, %v2549
    %v2558 = vmul.f32 %v2350, %v2550
    %v2559 = vmul.f32 %v2351, %v2551
    %v2560 = vmul.f32 %v2352, %v2552
    %v2561 = vmul.f32 %v2353, %v2553
    %v2562 = vmul.f32 %v2354, %v2554
    %v2563 = vmul.f32 %v2355, %v2555
    %v2564 = vld [vmem:[#allocation15] sm:$0xff]
    %v2565 = vld [vmem:[#allocation15 + $0x8] sm:$0xff]
    %v2566 = vld [vmem:[#allocation15 + $0x10] sm:$0xff]
    %v2567 = vld [vmem:[#allocation15 + $0x18] sm:$0xff]
    %v2568 = vld [vmem:[#allocation15 + $0x20] sm:$0xff]
    %v2569 = vld [vmem:[#allocation15 + $0x28] sm:$0xff]
    %v2570 = vld [vmem:[#allocation15 + $0x30] sm:$0xff]
    %v2571 = vld [vmem:[#allocation15 + $0x38] sm:$0xff]
    %v2572 = vld [vmem:[#allocation15 + $0x40] sm:$0xff]
    %v2573 = vld [vmem:[#allocation15 + $0x48] sm:$0xff]
    %v2574 = vld [vmem:[#allocation15 + $0x50] sm:$0xff]
    %v2575 = vld [vmem:[#allocation15 + $0x58] sm:$0xff]
    %v2576 = vld [vmem:[#allocation15 + $0x60] sm:$0xff]
    %v2577 = vld [vmem:[#allocation15 + $0x68] sm:$0xff]
    %v2578 = vld [vmem:[#allocation15 + $0x70] sm:$0xff]
    %v2579 = vld [vmem:[#allocation15 + $0x78] sm:$0xff]
    %v2580 = vld [vmem:[#allocation15 + $0x80] sm:$0xff]
    %v2581 = vld [vmem:[#allocation15 + $0x88] sm:$0xff]
    %v2582 = vld [vmem:[#allocation15 + $0x90] sm:$0xff]
    %v2583 = vld [vmem:[#allocation15 + $0x98] sm:$0xff]
    %v2584 = vld [vmem:[#allocation15 + $0xa0] sm:$0xff]
    %v2585 = vld [vmem:[#allocation15 + $0xa8] sm:$0xff]
    %v2586 = vld [vmem:[#allocation15 + $0xb0] sm:$0xff]
    %v2587 = vld [vmem:[#allocation15 + $0xb8] sm:$0xff]
    %v2588 = vld [vmem:[#allocation15 + $0xc0] sm:$0xff]
    %v2589 = vld [vmem:[#allocation15 + $0xc8] sm:$0xff]
    %v2590 = vld [vmem:[#allocation15 + $0xd0] sm:$0xff]
    %v2591 = vld [vmem:[#allocation15 + $0xd8] sm:$0xff]
    %v2592 = vld [vmem:[#allocation15 + $0xe0] sm:$0xff]
    %v2593 = vld [vmem:[#allocation15 + $0xe8] sm:$0xff]
    %v2594 = vld [vmem:[#allocation15 + $0xf0] sm:$0xff]
    %v2595 = vld [vmem:[#allocation15 + $0xf8] sm:$0xff]
    %v2596 = vld [vmem:[#allocation15 + $0x100] sm:$0xff]
    %v2597 = vld [vmem:[#allocation15 + $0x108] sm:$0xff]
    %v2598 = vld [vmem:[#allocation15 + $0x110] sm:$0xff]
    %v2599 = vld [vmem:[#allocation15 + $0x118] sm:$0xff]
    %v2600 = vld [vmem:[#allocation15 + $0x120] sm:$0xff]
    %v2601 = vld [vmem:[#allocation15 + $0x128] sm:$0xff]
    %v2602 = vld [vmem:[#allocation15 + $0x130] sm:$0xff]
    %v2603 = vld [vmem:[#allocation15 + $0x138] sm:$0xff]
    %v2604 = vld [vmem:[#allocation15 + $0x140] sm:$0xff]
    %v2605 = vld [vmem:[#allocation15 + $0x148] sm:$0xff]
    %v2606 = vld [vmem:[#allocation15 + $0x150] sm:$0xff]
    %v2607 = vld [vmem:[#allocation15 + $0x158] sm:$0xff]
    %v2608 = vld [vmem:[#allocation15 + $0x160] sm:$0xff]
    %v2609 = vld [vmem:[#allocation15 + $0x168] sm:$0xff]
    %v2610 = vld [vmem:[#allocation15 + $0x170] sm:$0xff]
    %v2611 = vld [vmem:[#allocation15 + $0x178] sm:$0xff]
    %v2612 = vld [vmem:[#allocation15 + $0x180] sm:$0xff]
    %v2613 = vld [vmem:[#allocation15 + $0x188] sm:$0xff]
    %v2614 = vld [vmem:[#allocation15 + $0x190] sm:$0xff]
    %v2615 = vld [vmem:[#allocation15 + $0x198] sm:$0xff]
    %v2616 = vld [vmem:[#allocation15 + $0x1a0] sm:$0xff]
    %v2617 = vld [vmem:[#allocation15 + $0x1a8] sm:$0xff]
    %v2618 = vld [vmem:[#allocation15 + $0x1b0] sm:$0xff]
    %v2619 = vld [vmem:[#allocation15 + $0x1b8] sm:$0xff]
    %v2620 = vld [vmem:[#allocation15 + $0x1c0] sm:$0xff]
    %v2621 = vld [vmem:[#allocation15 + $0x1c8] sm:$0xff]
    %v2622 = vld [vmem:[#allocation15 + $0x1d0] sm:$0xff]
    %v2623 = vld [vmem:[#allocation15 + $0x1d8] sm:$0xff]
    %v2624 = vld [vmem:[#allocation15 + $0x1e0] sm:$0xff]
    %v2625 = vld [vmem:[#allocation15 + $0x1e8] sm:$0xff]
    %v2626 = vld [vmem:[#allocation15 + $0x1f0] sm:$0xff]
    %v2627 = vld [vmem:[#allocation15 + $0x1f8] sm:$0xff]
    %v2628 = vld [vmem:[#allocation15 + $0x200] sm:$0xff]
    %v2629 = vld [vmem:[#allocation15 + $0x208] sm:$0xff]
    %v2630 = vld [vmem:[#allocation15 + $0x210] sm:$0xff]
    %v2631 = vld [vmem:[#allocation15 + $0x218] sm:$0xff]
    %v2632 = vld [vmem:[#allocation15 + $0x220] sm:$0xff]
    %v2633 = vld [vmem:[#allocation15 + $0x228] sm:$0xff]
    %v2634 = vld [vmem:[#allocation15 + $0x230] sm:$0xff]
    %v2635 = vld [vmem:[#allocation15 + $0x238] sm:$0xff]
    %v2636 = vld [vmem:[#allocation15 + $0x240] sm:$0xff]
    %v2637 = vld [vmem:[#allocation15 + $0x248] sm:$0xff]
    %v2638 = vld [vmem:[#allocation15 + $0x250] sm:$0xff]
    %v2639 = vld [vmem:[#allocation15 + $0x258] sm:$0xff]
    %v2640 = vld [vmem:[#allocation15 + $0x260] sm:$0xff]
    %v2641 = vld [vmem:[#allocation15 + $0x268] sm:$0xff]
    %v2642 = vld [vmem:[#allocation15 + $0x270] sm:$0xff]
    %v2643 = vld [vmem:[#allocation15 + $0x278] sm:$0xff]
    %v2644 = vld [vmem:[#allocation15 + $0x280] sm:$0xff]
    %v2645 = vld [vmem:[#allocation15 + $0x288] sm:$0xff]
    %v2646 = vld [vmem:[#allocation15 + $0x290] sm:$0xff]
    %v2647 = vld [vmem:[#allocation15 + $0x298] sm:$0xff]
    %v2648 = vld [vmem:[#allocation15 + $0x2a0] sm:$0xff]
    %v2649 = vld [vmem:[#allocation15 + $0x2a8] sm:$0xff]
    %v2650 = vld [vmem:[#allocation15 + $0x2b0] sm:$0xff]
    %v2651 = vld [vmem:[#allocation15 + $0x2b8] sm:$0xff]
    %v2652 = vld [vmem:[#allocation15 + $0x2c0] sm:$0xff]
    %v2653 = vld [vmem:[#allocation15 + $0x2c8] sm:$0xff]
    %v2654 = vld [vmem:[#allocation15 + $0x2d0] sm:$0xff]
    %v2655 = vld [vmem:[#allocation15 + $0x2d8] sm:$0xff]
    %v2656 = vld [vmem:[#allocation15 + $0x2e0] sm:$0xff]
    %v2657 = vld [vmem:[#allocation15 + $0x2e8] sm:$0xff]
    %v2658 = vld [vmem:[#allocation15 + $0x2f0] sm:$0xff]
    %v2659 = vld [vmem:[#allocation15 + $0x2f8] sm:$0xff]
    %v2660 = vld [vmem:[#allocation15 + $0x300] sm:$0xff]
    %v2661 = vld [vmem:[#allocation15 + $0x308] sm:$0xff]
    %v2662 = vld [vmem:[#allocation15 + $0x310] sm:$0xff]
    %v2663 = vld [vmem:[#allocation15 + $0x318] sm:$0xff]
    %v2664 = vld [vmem:[#allocation15 + $0x320] sm:$0xff]
    %v2665 = vld [vmem:[#allocation15 + $0x328] sm:$0xff]
    %v2666 = vld [vmem:[#allocation15 + $0x330] sm:$0xff]
    %v2667 = vld [vmem:[#allocation15 + $0x338] sm:$0xff]
    %v2668 = vld [vmem:[#allocation15 + $0x340] sm:$0xff]
    %v2669 = vld [vmem:[#allocation15 + $0x348] sm:$0xff]
    %v2670 = vld [vmem:[#allocation15 + $0x350] sm:$0xff]
    %v2671 = vld [vmem:[#allocation15 + $0x358] sm:$0xff]
    %v2672 = vld [vmem:[#allocation15 + $0x360] sm:$0xff]
    %v2673 = vld [vmem:[#allocation15 + $0x368] sm:$0xff]
    %v2674 = vld [vmem:[#allocation15 + $0x370] sm:$0xff]
    %v2675 = vld [vmem:[#allocation15 + $0x378] sm:$0xff]
    %v2676 = vld [vmem:[#allocation15 + $0x380] sm:$0xff]
    %v2677 = vld [vmem:[#allocation15 + $0x388] sm:$0xff]
    %v2678 = vld [vmem:[#allocation15 + $0x390] sm:$0xff]
    %v2679 = vld [vmem:[#allocation15 + $0x398] sm:$0xff]
    %v2680 = vld [vmem:[#allocation15 + $0x3a0] sm:$0xff]
    %v2681 = vld [vmem:[#allocation15 + $0x3a8] sm:$0xff]
    %v2682 = vld [vmem:[#allocation15 + $0x3b0] sm:$0xff]
    %v2683 = vld [vmem:[#allocation15 + $0x3b8] sm:$0xff]
    %v2684 = vld [vmem:[#allocation15 + $0x3c0] sm:$0xff]
    %v2685 = vld [vmem:[#allocation15 + $0x3c8] sm:$0xff]
    %v2686 = vld [vmem:[#allocation15 + $0x3d0] sm:$0xff]
    %v2687 = vld [vmem:[#allocation15 + $0x3d8] sm:$0xff]
    %v2688 = vld [vmem:[#allocation15 + $0x3e0] sm:$0xff]
    %v2689 = vld [vmem:[#allocation15 + $0x3e8] sm:$0xff]
    %v2690 = vld [vmem:[#allocation15 + $0x3f0] sm:$0xff]
    %v2691 = vld [vmem:[#allocation15 + $0x3f8] sm:$0xff]
    %v2692 = vld [vmem:[%s14] sm:$0x3]
    %v2694 = vlaneseq
    %v2695 = vshrl.u32 %v2694, 7
    %v2696 = vsub.s32 0, %v2695
    %v2697 = vrot.slane %v2692, %v2696
    %v2698 = vlaneseq
    %v2699 = vshrl.u32 %v2698, 7
    %v2700 = vsub.s32 1, %v2699
    %v2701 = vrot.slane %v2692, %v2700
    %2704 = vmatprep.subr.mxu0 %v2595
    %2705 = vmatpush1.msra.mxu0 %v2594
    %2706 = vmatprep.subr.mxu0 %v2593
    %2707 = vmatpush1.msra.mxu0 %v2592
    %2708 = vmatprep.subr.mxu0 %v2591
    %2709 = vmatpush1.msra.mxu0 %v2590
    %2710 = vmatprep.subr.mxu0 %v2589
    %2711 = vmatpush1.msra.mxu0 %v2588
    %2712 = vmatprep.subr.mxu0 %v2587
    %2713 = vmatpush1.msra.mxu0 %v2586
    %2714 = vmatprep.subr.mxu0 %v2585
    %2715 = vmatpush1.msra.mxu0 %v2584
    %2716 = vmatprep.subr.mxu0 %v2583
    %2717 = vmatpush1.msra.mxu0 %v2582
    %2718 = vmatprep.subr.mxu0 %v2581
    %2719 = vmatpush1.msra.mxu0 %v2580
    %2720 = vmatprep.subr.mxu0 %v2579
    %2721 = vmatpush1.msra.mxu0 %v2578
    %2722 = vmatprep.subr.mxu0 %v2577
    %2723 = vmatpush1.msra.mxu0 %v2576
    %2724 = vmatprep.subr.mxu0 %v2575
    %2725 = vmatpush1.msra.mxu0 %v2574
    %2726 = vmatprep.subr.mxu0 %v2573
    %2727 = vmatpush1.msra.mxu0 %v2572
    %2728 = vmatprep.subr.mxu0 %v2571
    %2729 = vmatpush1.msra.mxu0 %v2570
    %2730 = vmatprep.subr.mxu0 %v2569
    %2731 = vmatpush1.msra.mxu0 %v2568
    %2732 = vmatprep.subr.mxu0 %v2567
    %2733 = vmatpush1.msra.mxu0 %v2566
    %2734 = vmatprep.subr.mxu0 %v2565
    %2735 = vmatpush1.msra.mxu0 %v2564
    %2736 = vmatprep.subr.mxu0 %v2627
    %2737 = vmatpush2.msra.mxu0 %v2626
    %2738 = vmatprep.subr.mxu0 %v2625
    %2739 = vmatpush2.msra.mxu0 %v2624
    %2740 = vmatprep.subr.mxu0 %v2623
    %2741 = vmatpush2.msra.mxu0 %v2622
    %2742 = vmatprep.subr.mxu0 %v2621
    %2743 = vmatpush2.msra.mxu0 %v2620
    %2744 = vmatprep.subr.mxu0 %v2619
    %2745 = vmatpush2.msra.mxu0 %v2618
    %2746 = vmatprep.subr.mxu0 %v2617
    %2747 = vmatpush2.msra.mxu0 %v2616
    %2748 = vmatprep.subr.mxu0 %v2615
    %2749 = vmatpush2.msra.mxu0 %v2614
    %2750 = vmatprep.subr.mxu0 %v2613
    %2751 = vmatpush2.msra.mxu0 %v2612
    %2752 = vmatprep.subr.mxu0 %v2611
    %2753 = vmatpush2.msra.mxu0 %v2610
    %2754 = vmatprep.subr.mxu0 %v2609
    %2755 = vmatpush2.msra.mxu0 %v2608
    %2756 = vmatprep.subr.mxu0 %v2607
    %2757 = vmatpush2.msra.mxu0 %v2606
    %2758 = vmatprep.subr.mxu0 %v2605
    %2759 = vmatpush2.msra.mxu0 %v2604
    %2760 = vmatprep.subr.mxu0 %v2603
    %2761 = vmatpush2.msra.mxu0 %v2602
    %2762 = vmatprep.subr.mxu0 %v2601
    %2763 = vmatpush2.msra.mxu0 %v2600
    %2764 = vmatprep.subr.mxu0 %v2599
    %2765 = vmatpush2.msra.mxu0 %v2598
    %2766 = vmatprep.subr.mxu0 %v2597
    %2767 = vmatpush2.msra.mxu0 %v2596
    %2768 = vmatprep.mubr.f32.mxu0 %v2557
    %2769 = vmatmul.mubr.f32.gmra.mxu0 %v2556
    %v2770 = vpop.f32.mrf.mxu0
    %v2771 = vadd.f32 %v2697, %v2770
    %v2772 = vpop.f32.mrf.mxu0
    %v2773 = vadd.f32 %v2701, %v2772
    %2774 = vmatprep.mubr.f32.mxu0 %v2561
    %2775 = vmatmul.mubr.f32.gmra.mxu0 %v2560
    %v2776 = vpop.f32.mrf.mxu0
    %v2777 = vadd.f32 %v2697, %v2776
    %v2778 = vpop.f32.mrf.mxu0
    %v2779 = vadd.f32 %v2701, %v2778
    %2780 = vdwg.mxu0
    %2781 = vmatprep.subr.mxu0 %v2659
    %2782 = vmatpush1.msra.mxu0 %v2658
    %2783 = vmatprep.subr.mxu0 %v2657
    %2784 = vmatpush1.msra.mxu0 %v2656
    %2785 = vmatprep.subr.mxu0 %v2655
    %2786 = vmatpush1.msra.mxu0 %v2654
    %2787 = vmatprep.subr.mxu0 %v2653
    %2788 = vmatpush1.msra.mxu0 %v2652
    %2789 = vmatprep.subr.mxu0 %v2651
    %2790 = vmatpush1.msra.mxu0 %v2650
    %2791 = vmatprep.subr.mxu0 %v2649
    %2792 = vmatpush1.msra.mxu0 %v2648
    %2793 = vmatprep.subr.mxu0 %v2647
    %2794 = vmatpush1.msra.mxu0 %v2646
    %2795 = vmatprep.subr.mxu0 %v2645
    %2796 = vmatpush1.msra.mxu0 %v2644
    %2797 = vmatprep.subr.mxu0 %v2643
    %2798 = vmatpush1.msra.mxu0 %v2642
    %2799 = vmatprep.subr.mxu0 %v2641
    %2800 = vmatpush1.msra.mxu0 %v2640
    %2801 = vmatprep.subr.mxu0 %v2639
    %2802 = vmatpush1.msra.mxu0 %v2638
    %2803 = vmatprep.subr.mxu0 %v2637
    %2804 = vmatpush1.msra.mxu0 %v2636
    %2805 = vmatprep.subr.mxu0 %v2635
    %2806 = vmatpush1.msra.mxu0 %v2634
    %2807 = vmatprep.subr.mxu0 %v2633
    %2808 = vmatpush1.msra.mxu0 %v2632
    %2809 = vmatprep.subr.mxu0 %v2631
    %2810 = vmatpush1.msra.mxu0 %v2630
    %2811 = vmatprep.subr.mxu0 %v2629
    %2812 = vmatpush1.msra.mxu0 %v2628
    %2813 = vmatprep.subr.mxu0 %v2691
    %2814 = vmatpush2.msra.mxu0 %v2690
    %2815 = vmatprep.subr.mxu0 %v2689
    %2816 = vmatpush2.msra.mxu0 %v2688
    %2817 = vmatprep.subr.mxu0 %v2687
    %2818 = vmatpush2.msra.mxu0 %v2686
    %2819 = vmatprep.subr.mxu0 %v2685
    %2820 = vmatpush2.msra.mxu0 %v2684
    %2821 = vmatprep.subr.mxu0 %v2683
    %2822 = vmatpush2.msra.mxu0 %v2682
    %2823 = vmatprep.subr.mxu0 %v2681
    %2824 = vmatpush2.msra.mxu0 %v2680
    %2825 = vmatprep.subr.mxu0 %v2679
    %2826 = vmatpush2.msra.mxu0 %v2678
    %2827 = vmatprep.subr.mxu0 %v2677
    %2828 = vmatpush2.msra.mxu0 %v2676
    %2829 = vmatprep.subr.mxu0 %v2675
    %2830 = vmatpush2.msra.mxu0 %v2674
    %2831 = vmatprep.subr.mxu0 %v2673
    %2832 = vmatpush2.msra.mxu0 %v2672
    %2833 = vmatprep.subr.mxu0 %v2671
    %2834 = vmatpush2.msra.mxu0 %v2670
    %2835 = vmatprep.subr.mxu0 %v2669
    %2836 = vmatpush2.msra.mxu0 %v2668
    %2837 = vmatprep.subr.mxu0 %v2667
    %2838 = vmatpush2.msra.mxu0 %v2666
    %2839 = vmatprep.subr.mxu0 %v2665
    %2840 = vmatpush2.msra.mxu0 %v2664
    %2841 = vmatprep.subr.mxu0 %v2663
    %2842 = vmatpush2.msra.mxu0 %v2662
    %2843 = vmatprep.subr.mxu0 %v2661
    %2844 = vmatpush2.msra.mxu0 %v2660
    %2845 = vmatprep.mubr.f32.mxu0 %v2559
    %2846 = vmatmul.mubr.f32.gmra.mxu0 %v2558
    %v2847 = vpop.f32.mrf.mxu0
    %v2848 = vadd.f32 %v2771, %v2847
    %v2849 = vpop.f32.mrf.mxu0
    %v2850 = vadd.f32 %v2773, %v2849
    %2851 = vmatprep.mubr.f32.mxu0 %v2563
    %2852 = vmatmul.mubr.f32.gmra.mxu0 %v2562
    %v2853 = vpop.f32.mrf.mxu0
    %v2854 = vadd.f32 %v2777, %v2853
    %v2855 = vpop.f32.mrf.mxu0
    %v2856 = vadd.f32 %v2779, %v2855
    %2857 = vdwg.mxu0
    %v2858 = vmul.f32 %v2848, 0.5
    %v2859 = vmul.f32 %v2850, 0.5
    %v2860 = vmul.f32 %v2854, 0.5
    %v2861 = vmul.f32 %v2856, 0.5
    %v2862 = vmul.f32 %v2848, 0.70710677
    %v2863 = vmul.f32 %v2850, 0.70710677
    %v2864 = vmul.f32 %v2854, 0.70710677
    %v2865 = vmul.f32 %v2856, 0.70710677
    %vm2866 = vcmp.ge.f32.partialorder %v2862, 0.0
    %vm2867 = vcmp.ge.f32.partialorder %v2863, 0.0
    %vm2868 = vcmp.ge.f32.partialorder %v2864, 0.0
    %vm2869 = vcmp.ge.f32.partialorder %v2865, 0.0
    %v2870 = vsel %vm2866, 1.0, -1.0
    %v2871 = vsel %vm2867, 1.0, -1.0
    %v2872 = vsel %vm2868, 1.0, -1.0
    %v2873 = vsel %vm2869, 1.0, -1.0
    %v2874 = vand.u32 2147483647, %v2862
    %v2875 = vand.u32 2147483647, %v2863
    %v2876 = vand.u32 2147483647, %v2864
    %v2877 = vand.u32 2147483647, %v2865
    %v2878 = vmul.f32 %v2874, 0.3275911
    %v2879 = vmul.f32 %v2875, 0.3275911
    %v2880 = vmul.f32 %v2876, 0.3275911
    %v2881 = vmul.f32 %v2877, 0.3275911
    %v2882 = vadd.f32 %v2878, 1.0
    %v2883 = vadd.f32 %v2879, 1.0
    %v2884 = vadd.f32 %v2880, 1.0
    %v2885 = vadd.f32 %v2881, 1.0
    %v2886 = vrcp.pop %v2882
    %v2887 = vmul.f32 1.0, %v2886
    %v2888 = vrcp.pop %v2883
    %v2889 = vmul.f32 1.0, %v2888
    %v2890 = vrcp.pop %v2884
    %v2891 = vmul.f32 1.0, %v2890
    %v2892 = vrcp.pop %v2885
    %v2893 = vmul.f32 1.0, %v2892
    %v2894 = vmul.f32 %v2887, 1.0614054
    %v2895 = vmul.f32 %v2889, 1.0614054
    %v2896 = vmul.f32 %v2891, 1.0614054
    %v2897 = vmul.f32 %v2893, 1.0614054
    %v2898 = vadd.f32 %v2894, -1.4531521
    %v2899 = vadd.f32 %v2895, -1.4531521
    %v2900 = vadd.f32 %v2896, -1.4531521
    %v2901 = vadd.f32 %v2897, -1.4531521
    %v2902 = vmul.f32 %v2898, %v2887
    %v2903 = vmul.f32 %v2899, %v2889
    %v2904 = vmul.f32 %v2900, %v2891
    %v2905 = vmul.f32 %v2901, %v2893
    %v2906 = vadd.f32 %v2902, 1.4214138
    %v2907 = vadd.f32 %v2903, 1.4214138
    %v2908 = vadd.f32 %v2904, 1.4214138
    %v2909 = vadd.f32 %v2905, 1.4214138
    %v2910 = vmul.f32 %v2906, %v2887
    %v2911 = vmul.f32 %v2907, %v2889
    %v2912 = vmul.f32 %v2908, %v2891
    %v2913 = vmul.f32 %v2909, %v2893
    %v2914 = vadd.f32 %v2910, -0.28449672
    %v2915 = vadd.f32 %v2911, -0.28449672
    %v2916 = vadd.f32 %v2912, -0.28449672
    %v2917 = vadd.f32 %v2913, -0.28449672
    %v2918 = vmul.f32 %v2914, %v2887
    %v2919 = vmul.f32 %v2915, %v2889
    %v2920 = vmul.f32 %v2916, %v2891
    %v2921 = vmul.f32 %v2917, %v2893
    %v2922 = vadd.f32 %v2918, 0.2548296
    %v2923 = vadd.f32 %v2919, 0.2548296
    %v2924 = vadd.f32 %v2920, 0.2548296
    %v2925 = vadd.f32 %v2921, 0.2548296
    %v2926 = vmul.f32 %v2922, %v2887
    %v2927 = vmul.f32 %v2923, %v2889
    %v2928 = vmul.f32 %v2924, %v2891
    %v2929 = vmul.f32 %v2925, %v2893
    %v2930 = vsub.f32 0.0, %v2874
    %v2931 = vsub.f32 0.0, %v2875
    %v2932 = vsub.f32 0.0, %v2876
    %v2933 = vsub.f32 0.0, %v2877
    %v2934 = vmul.f32 %v2930, %v2874
    %v2935 = vmul.f32 %v2931, %v2875
    %v2936 = vmul.f32 %v2932, %v2876
    %v2937 = vmul.f32 %v2933, %v2877
    %v2938 = vmul.f32 %v2934, 1.442695
    %v2939 = vpow.pop %v2938
    %v2940 = vmul.f32 %v2935, 1.442695
    %v2941 = vpow.pop %v2940
    %v2942 = vmul.f32 %v2936, 1.442695
    %v2943 = vpow.pop %v2942
    %v2944 = vmul.f32 %v2937, 1.442695
    %v2945 = vpow.pop %v2944
    %v2946 = vmul.f32 %v2926, %v2939
    %v2947 = vmul.f32 %v2927, %v2941
    %v2948 = vmul.f32 %v2928, %v2943
    %v2949 = vmul.f32 %v2929, %v2945
    %v2950 = vsub.f32 1.0, %v2946
    %v2951 = vsub.f32 1.0, %v2947
    %v2952 = vsub.f32 1.0, %v2948
    %v2953 = vsub.f32 1.0, %v2949
    %v2954 = vmul.f32 %v2870, %v2950
    %v2955 = vmul.f32 %v2871, %v2951
    %v2956 = vmul.f32 %v2872, %v2952
    %v2957 = vmul.f32 %v2873, %v2953
    %v2958 = vadd.f32 %v2954, 1.0
    %v2959 = vadd.f32 %v2955, 1.0
    %v2960 = vadd.f32 %v2956, 1.0
    %v2961 = vadd.f32 %v2957, 1.0
    %v2962 = vmul.f32 %v2858, %v2958
    %v2963 = vmul.f32 %v2859, %v2959
    %v2964 = vmul.f32 %v2860, %v2960
    %v2965 = vmul.f32 %v2861, %v2961
    %v2966 = vld [vmem:[#allocation17] sm:$0xff]
    %v2967 = vld [vmem:[#allocation17 + $0x8] sm:$0xff]
    %v2968 = vld [vmem:[#allocation17 + $0x10] sm:$0xff]
    %v2969 = vld [vmem:[#allocation17 + $0x18] sm:$0xff]
    %v2970 = vld [vmem:[#allocation17 + $0x20] sm:$0xff]
    %v2971 = vld [vmem:[#allocation17 + $0x28] sm:$0xff]
    %v2972 = vld [vmem:[#allocation17 + $0x30] sm:$0xff]
    %v2973 = vld [vmem:[#allocation17 + $0x38] sm:$0xff]
    %v2974 = vld [vmem:[#allocation17 + $0x40] sm:$0xff]
    %v2975 = vld [vmem:[#allocation17 + $0x48] sm:$0xff]
    %v2976 = vld [vmem:[#allocation17 + $0x50] sm:$0xff]
    %v2977 = vld [vmem:[#allocation17 + $0x58] sm:$0xff]
    %v2978 = vld [vmem:[#allocation17 + $0x60] sm:$0xff]
    %v2979 = vld [vmem:[#allocation17 + $0x68] sm:$0xff]
    %v2980 = vld [vmem:[#allocation17 + $0x70] sm:$0xff]
    %v2981 = vld [vmem:[#allocation17 + $0x78] sm:$0xff]
    %v2982 = vld [vmem:[#allocation17 + $0x80] sm:$0xff]
    %v2983 = vld [vmem:[#allocation17 + $0x88] sm:$0xff]
    %v2984 = vld [vmem:[#allocation17 + $0x90] sm:$0xff]
    %v2985 = vld [vmem:[#allocation17 + $0x98] sm:$0xff]
    %v2986 = vld [vmem:[#allocation17 + $0xa0] sm:$0xff]
    %v2987 = vld [vmem:[#allocation17 + $0xa8] sm:$0xff]
    %v2988 = vld [vmem:[#allocation17 + $0xb0] sm:$0xff]
    %v2989 = vld [vmem:[#allocation17 + $0xb8] sm:$0xff]
    %v2990 = vld [vmem:[#allocation17 + $0xc0] sm:$0xff]
    %v2991 = vld [vmem:[#allocation17 + $0xc8] sm:$0xff]
    %v2992 = vld [vmem:[#allocation17 + $0xd0] sm:$0xff]
    %v2993 = vld [vmem:[#allocation17 + $0xd8] sm:$0xff]
    %v2994 = vld [vmem:[#allocation17 + $0xe0] sm:$0xff]
    %v2995 = vld [vmem:[#allocation17 + $0xe8] sm:$0xff]
    %v2996 = vld [vmem:[#allocation17 + $0xf0] sm:$0xff]
    %v2997 = vld [vmem:[#allocation17 + $0xf8] sm:$0xff]
    %v2998 = vld [vmem:[%s16] sm:$0x1]
    %v3000 = vlaneseq
    %v3001 = vshrl.u32 %v3000, 7
    %v3002 = vsub.s32 0, %v3001
    %v3003 = vrot.slane %v2998, %v3002
    %3005 = vmatprep.subr.mxu0 0.0
    %3006 = vmatpush1.msra.mxu0 %v2981
    %3007 = vmatprep.subr.mxu0 0.0
    %3008 = vmatpush1.msra.mxu0 %v2980
    %3009 = vmatprep.subr.mxu0 0.0
    %3010 = vmatpush1.msra.mxu0 %v2979
    %3011 = vmatprep.subr.mxu0 0.0
    %3012 = vmatpush1.msra.mxu0 %v2978
    %3013 = vmatprep.subr.mxu0 0.0
    %3014 = vmatpush1.msra.mxu0 %v2977
    %3015 = vmatprep.subr.mxu0 0.0
    %3016 = vmatpush1.msra.mxu0 %v2976
    %3017 = vmatprep.subr.mxu0 0.0
    %3018 = vmatpush1.msra.mxu0 %v2975
    %3019 = vmatprep.subr.mxu0 0.0
    %3020 = vmatpush1.msra.mxu0 %v2974
    %3021 = vmatprep.subr.mxu0 0.0
    %3022 = vmatpush1.msra.mxu0 %v2973
    %3023 = vmatprep.subr.mxu0 0.0
    %3024 = vmatpush1.msra.mxu0 %v2972
    %3025 = vmatprep.subr.mxu0 0.0
    %3026 = vmatpush1.msra.mxu0 %v2971
    %3027 = vmatprep.subr.mxu0 0.0
    %3028 = vmatpush1.msra.mxu0 %v2970
    %3029 = vmatprep.subr.mxu0 0.0
    %3030 = vmatpush1.msra.mxu0 %v2969
    %3031 = vmatprep.subr.mxu0 0.0
    %3032 = vmatpush1.msra.mxu0 %v2968
    %3033 = vmatprep.subr.mxu0 0.0
    %3034 = vmatpush1.msra.mxu0 %v2967
    %3035 = vmatprep.subr.mxu0 0.0
    %3036 = vmatpush1.msra.mxu0 %v2966
    %3037 = vmatprep.subr.mxu0 0.0
    %3038 = vmatpush2.msra.mxu0 %v2997
    %3039 = vmatprep.subr.mxu0 0.0
    %3040 = vmatpush2.msra.mxu0 %v2996
    %3041 = vmatprep.subr.mxu0 0.0
    %3042 = vmatpush2.msra.mxu0 %v2995
    %3043 = vmatprep.subr.mxu0 0.0
    %3044 = vmatpush2.msra.mxu0 %v2994
    %3045 = vmatprep.subr.mxu0 0.0
    %3046 = vmatpush2.msra.mxu0 %v2993
    %3047 = vmatprep.subr.mxu0 0.0
    %3048 = vmatpush2.msra.mxu0 %v2992
    %3049 = vmatprep.subr.mxu0 0.0
    %3050 = vmatpush2.msra.mxu0 %v2991
    %3051 = vmatprep.subr.mxu0 0.0
    %3052 = vmatpush2.msra.mxu0 %v2990
    %3053 = vmatprep.subr.mxu0 0.0
    %3054 = vmatpush2.msra.mxu0 %v2989
    %3055 = vmatprep.subr.mxu0 0.0
    %3056 = vmatpush2.msra.mxu0 %v2988
    %3057 = vmatprep.subr.mxu0 0.0
    %3058 = vmatpush2.msra.mxu0 %v2987
    %3059 = vmatprep.subr.mxu0 0.0
    %3060 = vmatpush2.msra.mxu0 %v2986
    %3061 = vmatprep.subr.mxu0 0.0
    %3062 = vmatpush2.msra.mxu0 %v2985
    %3063 = vmatprep.subr.mxu0 0.0
    %3064 = vmatpush2.msra.mxu0 %v2984
    %3065 = vmatprep.subr.mxu0 0.0
    %3066 = vmatpush2.msra.mxu0 %v2983
    %3067 = vmatprep.subr.mxu0 0.0
    %3068 = vmatpush2.msra.mxu0 %v2982
    %3069 = vmatprep.mubr.f32.mxu0 %v2963
    %3070 = vmatmul.mubr.f32.gmra.mxu0 %v2962
    %v3071 = vpop.f32.mrf.mxu0
    %v3072 = vadd.f32 %v3003, %v3071
    %v3073 = vpop.f32.mrf.mxu0
    %3074 = vmatprep.mubr.f32.mxu0 %v2965
    %3075 = vmatmul.mubr.f32.gmra.mxu0 %v2964
    %v3076 = vpop.f32.mrf.mxu0
    %v3077 = vadd.f32 %v3003, %v3076
    %v3078 = vpop.f32.mrf.mxu0
    %3079 = vdwg.mxu0
    %v3080 = vld [vmem:[#allocation18] sm:$0xff]
    %v3081 = vld [vmem:[#allocation18 + $0x8] sm:$0xff]
    %v3082 = vld [vmem:[#allocation18 + $0x10] sm:$0xff]
    %v3083 = vld [vmem:[#allocation18 + $0x18] sm:$0xff]
    %v3084 = vld [vmem:[#allocation18 + $0x20] sm:$0xff]
    %v3085 = vld [vmem:[#allocation18 + $0x28] sm:$0xff]
    %v3086 = vld [vmem:[#allocation18 + $0x30] sm:$0xff]
    %v3087 = vld [vmem:[#allocation18 + $0x38] sm:$0xff]
    %v3088 = vld [vmem:[#allocation18 + $0x40] sm:$0xff]
    %v3089 = vld [vmem:[#allocation18 + $0x48] sm:$0xff]
    %v3090 = vld [vmem:[#allocation18 + $0x50] sm:$0xff]
    %v3091 = vld [vmem:[#allocation18 + $0x58] sm:$0xff]
    %v3092 = vld [vmem:[#allocation18 + $0x60] sm:$0xff]
    %v3093 = vld [vmem:[#allocation18 + $0x68] sm:$0xff]
    %v3094 = vld [vmem:[#allocation18 + $0x70] sm:$0xff]
    %v3095 = vld [vmem:[#allocation18 + $0x78] sm:$0xff]
    %v3096 = vld [vmem:[%s18] sm:$0x1]
    %v3098 = vlaneseq
    %v3099 = vshrl.u32 %v3098, 7
    %v3100 = vsub.s32 0, %v3099
    %v3101 = vrot.slane %v3096, %v3100
    %3103 = vmatprep.subr.mxu0 0.0
    %3104 = vmatpush1.msra.mxu0 %v3095
    %3105 = vmatprep.subr.mxu0 0.0
    %3106 = vmatpush1.msra.mxu0 %v3094
    %3107 = vmatprep.subr.mxu0 0.0
    %3108 = vmatpush1.msra.mxu0 %v3093
    %3109 = vmatprep.subr.mxu0 0.0
    %3110 = vmatpush1.msra.mxu0 %v3092
    %3111 = vmatprep.subr.mxu0 0.0
    %3112 = vmatpush1.msra.mxu0 %v3091
    %3113 = vmatprep.subr.mxu0 0.0
    %3114 = vmatpush1.msra.mxu0 %v3090
    %3115 = vmatprep.subr.mxu0 0.0
    %3116 = vmatpush1.msra.mxu0 %v3089
    %3117 = vmatprep.subr.mxu0 0.0
    %3118 = vmatpush1.msra.mxu0 %v3088
    %3119 = vmatprep.subr.mxu0 0.0
    %3120 = vmatpush1.msra.mxu0 %v3087
    %3121 = vmatprep.subr.mxu0 0.0
    %3122 = vmatpush1.msra.mxu0 %v3086
    %3123 = vmatprep.subr.mxu0 0.0
    %3124 = vmatpush1.msra.mxu0 %v3085
    %3125 = vmatprep.subr.mxu0 0.0
    %3126 = vmatpush1.msra.mxu0 %v3084
    %3127 = vmatprep.subr.mxu0 0.0
    %3128 = vmatpush1.msra.mxu0 %v3083
    %3129 = vmatprep.subr.mxu0 0.0
    %3130 = vmatpush1.msra.mxu0 %v3082
    %3131 = vmatprep.subr.mxu0 0.0
    %3132 = vmatpush1.msra.mxu0 %v3081
    %3133 = vmatprep.subr.mxu0 0.0
    %3134 = vmatpush1.msra.mxu0 %v3080
    %3135 = vmatprep.subr.mxu0 0.0
    %3136 = vmatpush2.msra.mxu0 0.0
    %3137 = vmatprep.subr.mxu0 0.0
    %3138 = vmatpush2.msra.mxu0 0.0
    %3139 = vmatprep.subr.mxu0 0.0
    %3140 = vmatpush2.msra.mxu0 0.0
    %3141 = vmatprep.subr.mxu0 0.0
    %3142 = vmatpush2.msra.mxu0 0.0
    %3143 = vmatprep.subr.mxu0 0.0
    %3144 = vmatpush2.msra.mxu0 0.0
    %3145 = vmatprep.subr.mxu0 0.0
    %3146 = vmatpush2.msra.mxu0 0.0
    %3147 = vmatprep.subr.mxu0 0.0
    %3148 = vmatpush2.msra.mxu0 0.0
    %3149 = vmatprep.subr.mxu0 0.0
    %3150 = vmatpush2.msra.mxu0 0.0
    %3151 = vmatprep.subr.mxu0 0.0
    %3152 = vmatpush2.msra.mxu0 0.0
    %3153 = vmatprep.subr.mxu0 0.0
    %3154 = vmatpush2.msra.mxu0 0.0
    %3155 = vmatprep.subr.mxu0 0.0
    %3156 = vmatpush2.msra.mxu0 0.0
    %3157 = vmatprep.subr.mxu0 0.0
    %3158 = vmatpush2.msra.mxu0 0.0
    %3159 = vmatprep.subr.mxu0 0.0
    %3160 = vmatpush2.msra.mxu0 0.0
    %3161 = vmatprep.subr.mxu0 0.0
    %3162 = vmatpush2.msra.mxu0 0.0
    %3163 = vmatprep.subr.mxu0 0.0
    %3164 = vmatpush2.msra.mxu0 0.0
    %3165 = vmatprep.subr.mxu0 0.0
    %3166 = vmatpush2.msra.mxu0 0.0
    %3167 = vmatprep.mubr.f32.mxu0 0.0
    %3168 = vmatmul.mubr.f32.gmra.mxu0 %v3072
    %v3169 = vpop.f32.mrf.mxu0
    %v3170 = vadd.f32 %v3101, %v3169
    %v3171 = vpop.f32.mrf.mxu0
    %3172 = vmatprep.mubr.f32.mxu0 0.0
    %3173 = vmatmul.mubr.f32.gmra.mxu0 %v3077
    %v3174 = vpop.f32.mrf.mxu0
    %v3175 = vadd.f32 %v3101, %v3174
    %v3176 = vpop.f32.mrf.mxu0
    %3177 = vdwg.mxu0
    %v3178 = vxor.u32 %v3170, 2147483648
    %v3179 = vxor.u32 %v3175, 2147483648
    %v3180 = vmul.f32 %v3178, 1.442695
    %v3181 = vpow.pop %v3180
    %v3182 = vmul.f32 %v3179, 1.442695
    %v3183 = vpow.pop %v3182
    %v3184 = vadd.f32 %v3181, 1.0
    %v3185 = vadd.f32 %v3183, 1.0
    %v3186 = vrcp.pop %v3184
    %v3187 = vmul.f32 1.0, %v3186
    %v3188 = vrcp.pop %v3185
    %v3189 = vmul.f32 1.0, %v3188
    %v3190 = vmul.f32 %v3187, %v2066
    %v3191 = vmul.f32 %v3189, %v2067
    %v3192 = vadd.f32 %v3072, %v3190
    %v3193 = vadd.f32 %v3077, %v3191
    %3194 = vst [vmem:[#allocation20] sm:$0xff] %v3192
    %3195 = vst [vmem:[#allocation20 + $0x8] sm:$0xff] %v3193
    // Predicated region
    $region118: #{tpu_custom_call.1} parent=1 // pred_check
      _
    $region119: #{tpu_custom_call.1} parent=1 // pred_check_branch
      %3197 = sbr.rel (0) target = $region121
    $region120: #{tpu_custom_call.1} parent=1 // pred_region
      %s3199 = ssub.s32 256, 256
      %3200 = vsyncadd [#allocation5], %s3199
      %s3201 = sshll.u32 [#allocation20], 4
      %s3202 = int_to_ptr.vmem [resolvable:$true] %s3201
      %3207 = dma.vmem_to_hbm [thread:$0]  %s3202, 256, %s19, [#allocation5], 128, 128, 8
    $region121: #{tpu_custom_call.1} parent=1 // pred_fallthru
      _
    // Predicated region
    $region122: #{tpu_custom_call.1} parent=1 // pred_check
      _
    $region123: #{tpu_custom_call.1} parent=1 // pred_check_branch
      %3209 = sbr.rel (0) target = $region125
    $region124: #{tpu_custom_call.1} parent=1 // pred_region
      %s3211 = ssub.s32 1024, 1024
      %3212 = vsyncadd [#allocation22], %s3211
      %s3213 = sshll.u32 [#allocation21], 4
      %s3214 = int_to_ptr.vmem [resolvable:$true] %s3213
      %3219 = dma.vmem_to_hbm [thread:$0]  %s3214, 1024, %s20, [#allocation22], 128, 128, 8
    $region125: #{tpu_custom_call.1} parent=1 // pred_fallthru
      _
    // Predicated region
    $region126: #{tpu_custom_call.1} parent=1 // pred_check
      _
    $region127: #{tpu_custom_call.1} parent=1 // pred_check_branch
      %3221 = sbr.rel (0) target = $region129
    $region128: #{tpu_custom_call.1} parent=1 // pred_region
      %3222 = dma.done [#allocation5], 256
    $region129: #{tpu_custom_call.1} parent=1 // pred_fallthru
      _
    // Predicated region
    $region130: #{tpu_custom_call.1} parent=1 // pred_check
      _
    $region131: #{tpu_custom_call.1} parent=1 // pred_check_branch
      %3224 = sbr.rel (0) target = $region133
    $region132: #{tpu_custom_call.1} parent=1 // pred_region
      %3225 = dma.done [#allocation22], 1024
    $region133: #{tpu_custom_call.1} parent=1 // pred_fallthru
      _
    %3226 = vsyncpa [#allocation4], 1
    %3227 = vsyncpa [#allocation7], 1
    %3228 = vsyncpa [#allocation10], 1
    %3229 = vsyncpa [#allocation13], 1
    %3230 = vsyncpa [#allocation16], 1
    %3231 = vsyncpa [#allocation19], 1
    %3232 = vsyncpa [#allocation5], 1
    %3233 = vsyncpa [#allocation22], 1

</llo_original>
